<compile_context>
chip_gen: v7x
topology: tpu7x:2x2x1
jax: 0.10.0
libtpu: 0.0.40
codegen_flags: <defaults>
</compile_context>

<pallas_src>
import functools
import math

import numpy as np
import jax
import jax.numpy as jnp
from jax.experimental import pallas as pl
from jax.experimental.pallas import tpu as pltpu


def _round_up(x, m):
    return ((x + m - 1) // m) * m


# --------------------------------------------------------------------------
# Fused Pallas kernel: encoder deep-set + CNN + fused decoder heads, per batch
# --------------------------------------------------------------------------

def _convcnp_fused_kernel(cin_ref, grow_ref, gcol_ref, ctx_ref, tgt_ref,
                          inv2e_ref, ew_ref, eb_ref,
                          w1_ref, b1_ref, w2_ref, b2_ref,
                          inv2d_ref, dw_ref, db_ref,
                          o_ref, *, valid_g):
    """One batch element of the full ConvCNP forward.

    cin_ref:   (1, 1, N)       context x locations (row)
    grow_ref:  (1, Gp)         grid x locations (row, zero padded past valid_g)
    gcol_ref:  (Gp, 1)         grid x locations (column)
    ctx_ref:   (1, Cds, N)     [density=1 ; y channels], channels-first
    tgt_ref:   (1, Mp, 1)      target x locations (column, zero padded)
    inv2e_ref: (Cds, 1)        encoder 1/exp(sigma)^2 per channel
    ew_ref:    (Cconv, Cds)    encoder projection weight,  eb_ref: (Cconv, 1) bias
    w1_ref:    (K, H, Cconv)   conv1 weights (taps-first), b1_ref: (H, 1)
    w2_ref:    (K, Cr, H)      conv2 weights (taps-first), b2_ref: (Cr, 1)
    inv2d_ref: (2*Cr, 1)       [mean ; sigma] decoder 1/exp(sigma)^2 per channel
    dw_ref:    (2*Cout, 2*Cr)  block-diag [mean_w, 0; 0, sig_w]
    db_ref:    (2*Cout, 1)     [mean_b ; sig_b]
    o_ref:     (1, 2*Cout, Mp) channels-first [mean ; sigma] output
    """
    f32 = jnp.float32
    Gp = grow_ref.shape[1]
    K = w1_ref.shape[0]
    pad = (K - 1) // 2

    # Lane-validity mask for the (padded) grid columns.
    lane = jax.lax.broadcasted_iota(jnp.int32, (1, Gp), 1)
    gmask = (lane < valid_g).astype(f32)                              # (1, Gp)

    # ---------------- encoder ConvDeepSet (density + density-norm) + proj + sigmoid
    cin = cin_ref[0]                                                  # (1, N)
    gcol = gcol_ref[...]                                              # (Gp, 1)
    ctx = ctx_ref[0]                                                  # (Cds, N)
    inv2e = inv2e_ref[...]                                            # (Cds, 1)

    nh_e = -0.5 * (gcol - cin) ** 2                                   # (Gp, N)
    w_enc = jnp.exp(nh_e[None, :, :] * inv2e[:, :, None])             # (Cds, Gp, N)
    feats = jnp.sum(ctx[:, None, :] * w_enc, axis=2)                  # (Cds, Gp)

    density = feats[0:1, :]
    row = jax.lax.broadcasted_iota(jnp.int32, feats.shape, 0)
    feats = jnp.where(row == 0, feats, feats / (density + 1e-8))      # density norm

    z = jnp.dot(ew_ref[...], feats, preferred_element_type=f32) + eb_ref[...]
    rep = jax.nn.sigmoid(z) * gmask                                   # (Cconv, Gp)

    # ---------------- 2-layer Conv1d ('same' zero padding) via lane rotations
    def conv1d(x, w_ref, b_ref):
        acc = None
        for k in range(K):                                            # static K-tap loop
            s = (pad - k) % Gp
            xk = x if s == 0 else pltpu.roll(x, shift=s, axis=1)
            t = jnp.dot(w_ref[k], xk, preferred_element_type=f32)
            acc = t if acc is None else acc + t
        return acc + b_ref[...]

    h = jnp.maximum(conv1d(rep, w1_ref, b1_ref), 0.0) * gmask         # (H, Gp)
    rep2 = conv1d(h, w2_ref, b2_ref) * gmask                          # (Cr, Gp)

    # ---------------- decoder ConvDeepSets (mean & sigma heads fused) + projection
    tgt = tgt_ref[0]                                                  # (Mp, 1)
    grow = grow_ref[...]                                              # (1, Gp)
    inv2d = inv2d_ref[...]                                            # (2*Cr, 1)

    nh_d = -0.5 * (tgt - grow) ** 2                                   # (Mp, Gp)
    w_dec = jnp.exp(nh_d[None, :, :] * inv2d[:, :, None])             # (2Cr, Mp, Gp)
    rep_st = jnp.concatenate([rep2, rep2], axis=0)                    # (2Cr, Gp)
    feats_d = jnp.sum(rep_st[:, None, :] * w_dec, axis=2)             # (2Cr, Mp)

    o_ref[0] = (jnp.dot(dw_ref[...], feats_d, preferred_element_type=f32)
                + db_ref[...])                                        # (2Cout, Mp)


# --------------------------------------------------------------------------
# Wrapper: layout prep + single pallas_call
# --------------------------------------------------------------------------

def convcnp_forward(params, context_in, context_out, target_in, grid):
    """ConvCNP.forward. Inputs (B,N,1), (B,N,Cy), (B,M,1), grid (B,G,1) -> (B,M,2*Cout)."""
    B, N, _ = context_in.shape
    M = target_in.shape[1]
    G = grid.shape[1]
    K, H, Cconv = params["cnn_w1"].shape
    Cout, Cr = params["mean_w"].shape
    Cds = params["enc_w"].shape[1]
    pad = (K - 1) // 2

    # lane-dense padding: Gp leaves >= pad zero columns for the rolled conv taps
    Gp = _round_up(G + pad, 128)
    Mp = _round_up(M, 128)

    # ---- host-side layout prep (all tiny, once per forward) ----
    grid1 = grid[0, :, 0]                                             # grid shared across batch
    grow = jnp.pad(grid1[None, :], ((0, 0), (0, Gp - G)))             # (1, Gp)
    gcol = jnp.pad(grid1[:, None], ((0, Gp - G), (0, 0)))             # (Gp, 1)
    cin_t = jnp.transpose(context_in, (0, 2, 1))                      # (B, 1, N)
    tgt_c = jnp.pad(target_in, ((0, 0), (0, Mp - M), (0, 0)))         # (B, Mp, 1)
    dens = jnp.ones((B, N, 1), jnp.float32)
    ctx_t = jnp.transpose(jnp.concatenate([dens, context_out], -1), (0, 2, 1))  # (B, Cds, N)

    inv2_enc = (1.0 / jnp.exp(params["enc_sigma"]) ** 2)[:, None]     # (Cds, 1)
    inv2_dec = jnp.concatenate(
        [1.0 / jnp.exp(params["mean_sigma"]) ** 2,
         1.0 / jnp.exp(params["sig_sigma"]) ** 2])[:, None]           # (2*Cr, 1)
    dec_w = jnp.zeros((2 * Cout, 2 * Cr), jnp.float32)
    dec_w = dec_w.at[:Cout, :Cr].set(params["mean_w"]).at[Cout:, Cr:].set(params["sig_w"])
    dec_b = jnp.concatenate([params["mean_b"], params["sig_b"]], axis=0)  # (2*Cout, 1)

    kernel = functools.partial(_convcnp_fused_kernel, valid_g=G)
    out = pl.pallas_call(
        kernel,
        out_shape=jax.ShapeDtypeStruct((B, 2 * Cout, Mp), jnp.float32),
        grid=(B,),
        in_specs=[
            pl.BlockSpec((1, 1, N), lambda b: (b, 0, 0)),             # cin_t
            pl.BlockSpec((1, Gp), lambda b: (0, 0)),                  # grow
            pl.BlockSpec((Gp, 1), lambda b: (0, 0)),                  # gcol
            pl.BlockSpec((1, Cds, N), lambda b: (b, 0, 0)),           # ctx_t
            pl.BlockSpec((1, Mp, 1), lambda b: (b, 0, 0)),            # tgt_c
            pl.BlockSpec((Cds, 1), lambda b: (0, 0)),                 # inv2_enc
            pl.BlockSpec((Cconv, Cds), lambda b: (0, 0)),             # enc_w
            pl.BlockSpec((Cconv, 1), lambda b: (0, 0)),               # enc_b
            pl.BlockSpec((K, H, Cconv), lambda b: (0, 0, 0)),         # cnn_w1
            pl.BlockSpec((H, 1), lambda b: (0, 0)),                   # cnn_b1
            pl.BlockSpec((K, Cr, H), lambda b: (0, 0, 0)),            # cnn_w2
            pl.BlockSpec((Cr, 1), lambda b: (0, 0)),                  # cnn_b2
            pl.BlockSpec((2 * Cr, 1), lambda b: (0, 0)),              # inv2_dec
            pl.BlockSpec((2 * Cout, 2 * Cr), lambda b: (0, 0)),       # dec_w
            pl.BlockSpec((2 * Cout, 1), lambda b: (0, 0)),            # dec_b
        ],
        out_specs=pl.BlockSpec((1, 2 * Cout, Mp), lambda b: (b, 0, 0)),
        compiler_params=pltpu.CompilerParams(dimension_semantics=("parallel",)),
    )(cin_t, grow, gcol, ctx_t, tgt_c,
      inv2_enc, params["enc_w"], params["enc_b"],
      params["cnn_w1"], params["cnn_b1"], params["cnn_w2"], params["cnn_b2"],
      inv2_dec, dec_w, dec_b)

    # single layout op at the very end: (B, 2*Cout, Mp) -> (B, M, 2*Cout)
    return jnp.transpose(out[:, :, :M], (0, 2, 1))


# --------------------------------------------------------------------------
# Glue: grid construction, parameter init
# --------------------------------------------------------------------------

# TODO(synk): make_grid helper is not part of the provided module source; this follows
# the standard ConvCNP convention (pad the x-range, points_per_unit resolution, round
# the point count up to grid_divisible_by). Computed host-side so shapes stay static.
def make_grid(context_in, target_in, points_per_unit, range_padding, divisible_by):
    x_min = float(min(np.asarray(context_in).min(), np.asarray(target_in).min()))
    x_max = float(max(np.asarray(context_in).max(), np.asarray(target_in).max()))
    x_min -= range_padding
    x_max += range_padding
    num_points = int(math.ceil(points_per_unit * (x_max - x_min)))
    num_points = int(math.ceil(num_points / divisible_by) * divisible_by)
    grid = np.linspace(x_min, x_max, num_points, dtype=np.float32)
    B = context_in.shape[0]
    grid = np.broadcast_to(grid[None, :, None], (B, num_points, 1))
    return jnp.asarray(grid)


def _xavier_normal(key, shape, fan_in, fan_out):
    std = math.sqrt(2.0 / (fan_in + fan_out))
    return (std * jax.random.normal(key, shape)).astype(jnp.float32)


def init_params(key, y_channels, conv_in, hidden, conv_out, K, out_channels):
    ks = jax.random.split(key, 6)
    log_ls = float(np.log(0.1))
    p = {}
    # input interpolation: ConvDeepSet(in=y_channels, out=conv_in, use_density=True)
    cds_in = y_channels + 1
    p["enc_sigma"] = log_ls * jnp.ones((cds_in,), jnp.float32)
    p["enc_w"] = _xavier_normal(ks[0], (conv_in, cds_in), cds_in, conv_in)
    p["enc_b"] = jnp.zeros((conv_in, 1), jnp.float32)
    # CNN (custom_init: xavier_normal weights, bias = 0.001). Stored taps-first.
    w1 = _xavier_normal(ks[1], (hidden, conv_in, K), conv_in * K, hidden * K)
    w2 = _xavier_normal(ks[2], (conv_out, hidden, K), hidden * K, conv_out * K)
    p["cnn_w1"] = jnp.transpose(w1, (2, 0, 1))          # (K, H, Cin)
    p["cnn_b1"] = 0.001 * jnp.ones((hidden, 1), jnp.float32)
    p["cnn_w2"] = jnp.transpose(w2, (2, 0, 1))          # (K, Co, H)
    p["cnn_b2"] = 0.001 * jnp.ones((conv_out, 1), jnp.float32)
    # output interpolation mean / sigma: ConvDeepSet(in=conv_out, out=out_channels, no density)
    p["mean_sigma"] = log_ls * jnp.ones((conv_out,), jnp.float32)
    p["mean_w"] = _xavier_normal(ks[3], (out_channels, conv_out), conv_out, out_channels)
    p["mean_b"] = jnp.zeros((out_channels, 1), jnp.float32)
    p["sig_sigma"] = log_ls * jnp.ones((conv_out,), jnp.float32)
    p["sig_w"] = _xavier_normal(ks[4], (out_channels, conv_out), conv_out, out_channels)
    p["sig_b"] = jnp.zeros((out_channels, 1), jnp.float32)
    return p


# --------------------------------------------------------------------------
# Pure-JAX reference (mirrors the PyTorch math) for verification
# --------------------------------------------------------------------------

def _ref_deepset(cin, cout, tin, sigma, w, b, use_density, use_density_norm):
    scales = jnp.exp(sigma)
    dists = jnp.sum((cin[:, :, None, :] - tin[:, None, :, :]) ** 2, axis=-1)  # (B,N,M)
    weights = jnp.exp(-0.5 * dists[..., None] / scales ** 2)                  # (B,N,M,C)
    if use_density:
        ones = jnp.ones(cout.shape[:2] + (1,), cout.dtype)
        cout = jnp.concatenate([ones, cout], axis=-1)
    out = jnp.sum(cout[:, :, None, :] * weights, axis=1)                      # (B,M,C)
    if use_density and use_density_norm:
        d, c = out[..., :1], out[..., 1:]
        out = jnp.concatenate([d, c / (d + 1e-8)], axis=-1)
    return out @ w.T + b.reshape(1, 1, -1)


def _ref_conv_net(x, w1_koi, b1, w2_koi, b2, K):
    pad = (K - 1) // 2

    def conv(x, w_koi, b):
        w = jnp.transpose(w_koi, (1, 2, 0))  # (O, I, K)
        y = jax.lax.conv_general_dilated(
            x, w, window_strides=(1,), padding=[(pad, pad)],
            dimension_numbers=("NCH", "OIH", "NCH"))
        return y + b[None, :, :]

    h = jax.nn.relu(conv(x, w1_koi, b1))
    return conv(h, w2_koi, b2)


def _ref_forward(params, context_in, context_out, target_in, grid, K):
    rep = _ref_deepset(context_in, context_out, grid, params["enc_sigma"],
                       params["enc_w"], params["enc_b"], True, True)
    rep = jax.nn.sigmoid(rep)
    rep = jnp.transpose(rep, (0, 2, 1))
    rep = _ref_conv_net(rep, params["cnn_w1"], params["cnn_b1"],
                        params["cnn_w2"], params["cnn_b2"], K)
    rep = jnp.transpose(rep, (0, 2, 1))
    mean = _ref_deepset(grid, rep, target_in, params["mean_sigma"],
                        params["mean_w"], params["mean_b"], False, False)
    sigma = _ref_deepset(grid, rep, target_in, params["sig_sigma"],
                         params["sig_w"], params["sig_b"], False, False)
    return jnp.concatenate([mean, sigma], axis=-1)


# --------------------------------------------------------------------------
# Main
# --------------------------------------------------------------------------

if __name__ == "__main__":
    B, N, M = 2, 8, 10
    Cy = 1                      # out_channels of ConvCNP (y dimension)
    CONV_IN, HIDDEN, CONV_OUT, K = 8, 16, 8, 5
    POINTS_PER_UNIT, RANGE_PADDING, DIVISIBLE_BY = 16, 0.1, 16

    key = jax.random.PRNGKey(0)
    k_ci, k_co, k_ti, k_par = jax.random.split(key, 4)
    context_in = jax.random.uniform(k_ci, (B, N, 1), jnp.float32, -1.0, 1.0)
    context_out = jax.random.normal(k_co, (B, N, Cy), jnp.float32)
    target_in = jax.random.uniform(k_ti, (B, M, 1), jnp.float32, -1.0, 1.0)

    params = init_params(k_par, Cy, CONV_IN, HIDDEN, CONV_OUT, K, Cy)
    grid = make_grid(context_in, target_in, POINTS_PER_UNIT, RANGE_PADDING, DIVISIBLE_BY)

    out = convcnp_forward(params, context_in, context_out, target_in, grid)
    out = jax.block_until_ready(out)
    assert out.shape == (B, M, 2 * Cy), out.shape

    with jax.default_matmul_precision("highest"):
        ref = _ref_forward(params, context_in, context_out, target_in, grid, K)
    ref = jax.block_until_ready(ref)

    if not np.allclose(np.asarray(out), np.asarray(ref), atol=2e-3, rtol=2e-3):
        raise AssertionError(
            "Pallas ConvCNP output mismatch, max abs err = "
            f"{float(np.max(np.abs(np.asarray(out) - np.asarray(ref))))}")

    print("KERNEL_OK")
</pallas_src>

<mosaic_0001>
module attributes {stable_mosaic.version = 11 : i64} {
  func.func @_convcnp_fused_kernel(%arg0: i32, %arg1: memref<1x1x8xf32, #tpu.memory_space<vmem>>, %arg2: memref<1x128xf32, #tpu.memory_space<vmem>>, %arg3: memref<128x1xf32, #tpu.memory_space<vmem>>, %arg4: memref<1x2x8xf32, #tpu.memory_space<vmem>>, %arg5: memref<1x128x1xf32, #tpu.memory_space<vmem>>, %arg6: memref<2x1xf32, #tpu.memory_space<vmem>>, %arg7: memref<8x2xf32, #tpu.memory_space<vmem>>, %arg8: memref<8x1xf32, #tpu.memory_space<vmem>>, %arg9: memref<5x16x8xf32, #tpu.memory_space<vmem>>, %arg10: memref<16x1xf32, #tpu.memory_space<vmem>>, %arg11: memref<5x8x16xf32, #tpu.memory_space<vmem>>, %arg12: memref<8x1xf32, #tpu.memory_space<vmem>>, %arg13: memref<16x1xf32, #tpu.memory_space<vmem>>, %arg14: memref<2x16xf32, #tpu.memory_space<vmem>>, %arg15: memref<2x1xf32, #tpu.memory_space<vmem>>, %arg16: memref<1x2x128xf32, #tpu.memory_space<vmem>>) attributes {dimension_semantics = [#tpu.dimension_semantics<parallel>], iteration_bounds = array<i64: 2>, scalar_prefetch = 0 : i64, scratch_operands = 0 : i64, tpu.core_type = #tpu.core_type<tc>, window_params = [{transform_indices = @transform_0, window_bounds = array<i64: 1, 1, 8>}, {pipeline_mode = #tpu.pipeline_mode<synchronous>, transform_indices = @transform_1, window_bounds = array<i64: 1, 128>}, {pipeline_mode = #tpu.pipeline_mode<synchronous>, transform_indices = @transform_2, window_bounds = array<i64: 128, 1>}, {transform_indices = @transform_3, window_bounds = array<i64: 1, 2, 8>}, {transform_indices = @transform_4, window_bounds = array<i64: 1, 128, 1>}, {pipeline_mode = #tpu.pipeline_mode<synchronous>, transform_indices = @transform_5, window_bounds = array<i64: 2, 1>}, {pipeline_mode = #tpu.pipeline_mode<synchronous>, transform_indices = @transform_6, window_bounds = array<i64: 8, 2>}, {pipeline_mode = #tpu.pipeline_mode<synchronous>, transform_indices = @transform_7, window_bounds = array<i64: 8, 1>}, {pipeline_mode = #tpu.pipeline_mode<synchronous>, transform_indices = @transform_8, window_bounds = array<i64: 5, 16, 8>}, {pipeline_mode = #tpu.pipeline_mode<synchronous>, transform_indices = @transform_9, window_bounds = array<i64: 16, 1>}, {pipeline_mode = #tpu.pipeline_mode<synchronous>, transform_indices = @transform_10, window_bounds = array<i64: 5, 8, 16>}, {pipeline_mode = #tpu.pipeline_mode<synchronous>, transform_indices = @transform_11, window_bounds = array<i64: 8, 1>}, {pipeline_mode = #tpu.pipeline_mode<synchronous>, transform_indices = @transform_12, window_bounds = array<i64: 16, 1>}, {pipeline_mode = #tpu.pipeline_mode<synchronous>, transform_indices = @transform_13, window_bounds = array<i64: 2, 16>}, {pipeline_mode = #tpu.pipeline_mode<synchronous>, transform_indices = @transform_14, window_bounds = array<i64: 2, 1>}, {transform_indices = @transform_15, window_bounds = array<i64: 1, 2, 128>}]} {
    %0 = tpu.iota {dimensions = array<i32: 1>} : vector<1x128xi32>
    %c48_i32 = arith.constant 48 : i32
    %1 = vector.broadcast %c48_i32 : i32 to vector<1x128xi32>
    %2 = arith.cmpi slt, %0, %1 : vector<1x128xi32>
    %3 = arith.extui %2 : vector<1x128xi1> to vector<1x128xi32>
    %4 = arith.sitofp %3 : vector<1x128xi32> to vector<1x128xf32>
    %c0 = arith.constant 0 : index
    %c0_0 = arith.constant 0 : index
    %c0_1 = arith.constant 0 : index
    %5 = vector.load %arg1[%c0, %c0_0, %c0_1] : memref<1x1x8xf32, #tpu.memory_space<vmem>>, vector<1x1x8xf32>
    %6 = vector.shape_cast %5 : vector<1x1x8xf32> to vector<1x8xf32>
    %c0_2 = arith.constant 0 : index
    %c0_3 = arith.constant 0 : index
    %7 = vector.load %arg3[%c0_2, %c0_3] : memref<128x1xf32, #tpu.memory_space<vmem>>, vector<128x1xf32>
    %c0_4 = arith.constant 0 : index
    %c0_5 = arith.constant 0 : index
    %c0_6 = arith.constant 0 : index
    %8 = vector.load %arg4[%c0_4, %c0_5, %c0_6] : memref<1x2x8xf32, #tpu.memory_space<vmem>>, vector<1x2x8xf32>
    %9 = vector.shape_cast %8 : vector<1x2x8xf32> to vector<2x8xf32>
    %c0_7 = arith.constant 0 : index
    %c0_8 = arith.constant 0 : index
    %10 = vector.load %arg6[%c0_7, %c0_8] : memref<2x1xf32, #tpu.memory_space<vmem>>, vector<2x1xf32>
    %11 = vector.broadcast %7 : vector<128x1xf32> to vector<128x8xf32>
    %12 = vector.broadcast %6 : vector<1x8xf32> to vector<128x8xf32>
    %13 = arith.subf %11, %12 : vector<128x8xf32>
    %14 = arith.mulf %13, %13 : vector<128x8xf32>
    %cst = arith.constant -5.000000e-01 : f32
    %15 = vector.broadcast %cst : f32 to vector<128x8xf32>
    %16 = arith.mulf %15, %14 : vector<128x8xf32>
    %17 = vector.shape_cast %16 : vector<128x8xf32> to vector<1x128x8xf32>
    %18 = vector.shape_cast %10 : vector<2x1xf32> to vector<2x1x1xf32>
    %19 = vector.broadcast %17 : vector<1x128x8xf32> to vector<2x128x8xf32>
    %20 = vector.broadcast %18 : vector<2x1x1xf32> to vector<2x128x8xf32>
    %21 = arith.mulf %19, %20 : vector<2x128x8xf32>
    %22 = math.exp %21 : vector<2x128x8xf32>
    %23 = vector.shape_cast %9 : vector<2x8xf32> to vector<2x1x8xf32>
    %24 = vector.broadcast %23 : vector<2x1x8xf32> to vector<2x128x8xf32>
    %25 = arith.mulf %24, %22 : vector<2x128x8xf32>
    %cst_9 = arith.constant dense<0.000000e+00> : vector<2x128xf32>
    %26 = vector.multi_reduction <add>, %25, %cst_9 [2] : vector<2x128x8xf32> to vector<2x128xf32>
    %27 = vector.extract_strided_slice %26 {offsets = [0, 0], sizes = [1, 128], strides = [1, 1]} : vector<2x128xf32> to vector<1x128xf32>
    %28 = tpu.iota {dimensions = array<i32: 0>} : vector<2x128xi32>
    %c0_i32 = arith.constant 0 : i32
    %29 = vector.broadcast %c0_i32 : i32 to vector<2x128xi32>
    %30 = arith.cmpi eq, %28, %29 : vector<2x128xi32>
    %cst_10 = arith.constant 9.99999993E-9 : f32
    %31 = vector.broadcast %cst_10 : f32 to vector<1x128xf32>
    %32 = arith.addf %27, %31 : vector<1x128xf32>
    %33 = vector.broadcast %32 : vector<1x128xf32> to vector<2x128xf32>
    %34 = arith.divf %26, %33 : vector<2x128xf32>
    %35 = arith.select %30, %26, %34 : vector<2x128xi1>, vector<2x128xf32>
    %c0_11 = arith.constant 0 : index
    %c0_12 = arith.constant 0 : index
    %36 = vector.load %arg7[%c0_11, %c0_12] : memref<8x2xf32, #tpu.memory_space<vmem>>, vector<8x2xf32>
    %cst_13 = arith.constant dense<0.000000e+00> : vector<8x128xf32>
    %37 = tpu.matmul %36, %35, %cst_13 {dimension_numbers = #tpu.dot_dimension_numbers<[1], [0], [0], [1], [0, 0, 1, 1], [], []>} : vector<8x2xf32>, vector<2x128xf32>, vector<8x128xf32> -> vector<8x128xf32>
    %c0_14 = arith.constant 0 : index
    %c0_15 = arith.constant 0 : index
    %38 = vector.load %arg8[%c0_14, %c0_15] : memref<8x1xf32, #tpu.memory_space<vmem>>, vector<8x1xf32>
    %39 = vector.broadcast %38 : vector<8x1xf32> to vector<8x128xf32>
    %40 = arith.addf %37, %39 : vector<8x128xf32>
    %41 = arith.negf %40 : vector<8x128xf32>
    %42 = math.exp %41 : vector<8x128xf32>
    %cst_16 = arith.constant 1.000000e+00 : f32
    %43 = vector.broadcast %cst_16 : f32 to vector<8x128xf32>
    %44 = arith.addf %43, %42 : vector<8x128xf32>
    %45 = arith.divf %43, %44 : vector<8x128xf32>
    %46 = vector.broadcast %4 : vector<1x128xf32> to vector<8x128xf32>
    %47 = arith.mulf %45, %46 : vector<8x128xf32>
    %c2_i32 = arith.constant 2 : i32
    %48 = tpu.dynamic_rotate %47 by %c2_i32 dim 1 : vector<8x128xf32>, i32 -> vector<8x128xf32>
    %c0_17 = arith.constant 0 : index
    %c0_18 = arith.constant 0 : index
    %c0_19 = arith.constant 0 : index
    %49 = vector.load %arg9[%c0_17, %c0_18, %c0_19] : memref<5x16x8xf32, #tpu.memory_space<vmem>>, vector<1x16x8xf32>
    %50 = vector.shape_cast %49 : vector<1x16x8xf32> to vector<16x8xf32>
    %cst_20 = arith.constant dense<0.000000e+00> : vector<16x128xf32>
    %51 = tpu.matmul %50, %48, %cst_20 {dimension_numbers = #tpu.dot_dimension_numbers<[1], [0], [0], [1], [0, 0, 1, 1], [], []>} : vector<16x8xf32>, vector<8x128xf32>, vector<16x128xf32> -> vector<16x128xf32>
    %c1_i32 = arith.constant 1 : i32
    %52 = tpu.dynamic_rotate %47 by %c1_i32 dim 1 : vector<8x128xf32>, i32 -> vector<8x128xf32>
    %c1 = arith.constant 1 : index
    %c0_21 = arith.constant 0 : index
    %c0_22 = arith.constant 0 : index
    %53 = vector.load %arg9[%c1, %c0_21, %c0_22] : memref<5x16x8xf32, #tpu.memory_space<vmem>>, vector<1x16x8xf32>
    %54 = vector.shape_cast %53 : vector<1x16x8xf32> to vector<16x8xf32>
    %cst_23 = arith.constant dense<0.000000e+00> : vector<16x128xf32>
    %55 = tpu.matmul %54, %52, %cst_23 {dimension_numbers = #tpu.dot_dimension_numbers<[1], [0], [0], [1], [0, 0, 1, 1], [], []>} : vector<16x8xf32>, vector<8x128xf32>, vector<16x128xf32> -> vector<16x128xf32>
    %56 = arith.addf %51, %55 : vector<16x128xf32>
    %c2 = arith.constant 2 : index
    %c0_24 = arith.constant 0 : index
    %c0_25 = arith.constant 0 : index
    %57 = vector.load %arg9[%c2, %c0_24, %c0_25] : memref<5x16x8xf32, #tpu.memory_space<vmem>>, vector<1x16x8xf32>
    %58 = vector.shape_cast %57 : vector<1x16x8xf32> to vector<16x8xf32>
    %cst_26 = arith.constant dense<0.000000e+00> : vector<16x128xf32>
    %59 = tpu.matmul %58, %47, %cst_26 {dimension_numbers = #tpu.dot_dimension_numbers<[1], [0], [0], [1], [0, 0, 1, 1], [], []>} : vector<16x8xf32>, vector<8x128xf32>, vector<16x128xf32> -> vector<16x128xf32>
    %60 = arith.addf %56, %59 : vector<16x128xf32>
    %c127_i32 = arith.constant 127 : i32
    %61 = tpu.dynamic_rotate %47 by %c127_i32 dim 1 : vector<8x128xf32>, i32 -> vector<8x128xf32>
    %c3 = arith.constant 3 : index
    %c0_27 = arith.constant 0 : index
    %c0_28 = arith.constant 0 : index
    %62 = vector.load %arg9[%c3, %c0_27, %c0_28] : memref<5x16x8xf32, #tpu.memory_space<vmem>>, vector<1x16x8xf32>
    %63 = vector.shape_cast %62 : vector<1x16x8xf32> to vector<16x8xf32>
    %cst_29 = arith.constant dense<0.000000e+00> : vector<16x128xf32>
    %64 = tpu.matmul %63, %61, %cst_29 {dimension_numbers = #tpu.dot_dimension_numbers<[1], [0], [0], [1], [0, 0, 1, 1], [], []>} : vector<16x8xf32>, vector<8x128xf32>, vector<16x128xf32> -> vector<16x128xf32>
    %65 = arith.addf %60, %64 : vector<16x128xf32>
    %c126_i32 = arith.constant 126 : i32
    %66 = tpu.dynamic_rotate %47 by %c126_i32 dim 1 : vector<8x128xf32>, i32 -> vector<8x128xf32>
    %c4 = arith.constant 4 : index
    %c0_30 = arith.constant 0 : index
    %c0_31 = arith.constant 0 : index
    %67 = vector.load %arg9[%c4, %c0_30, %c0_31] : memref<5x16x8xf32, #tpu.memory_space<vmem>>, vector<1x16x8xf32>
    %68 = vector.shape_cast %67 : vector<1x16x8xf32> to vector<16x8xf32>
    %cst_32 = arith.constant dense<0.000000e+00> : vector<16x128xf32>
    %69 = tpu.matmul %68, %66, %cst_32 {dimension_numbers = #tpu.dot_dimension_numbers<[1], [0], [0], [1], [0, 0, 1, 1], [], []>} : vector<16x8xf32>, vector<8x128xf32>, vector<16x128xf32> -> vector<16x128xf32>
    %70 = arith.addf %65, %69 : vector<16x128xf32>
    %c0_33 = arith.constant 0 : index
    %c0_34 = arith.constant 0 : index
    %71 = vector.load %arg10[%c0_33, %c0_34] : memref<16x1xf32, #tpu.memory_space<vmem>>, vector<16x1xf32>
    %72 = vector.broadcast %71 : vector<16x1xf32> to vector<16x128xf32>
    %73 = arith.addf %70, %72 : vector<16x128xf32>
    %cst_35 = arith.constant 0.000000e+00 : f32
    %74 = vector.broadcast %cst_35 : f32 to vector<16x128xf32>
    %75 = arith.maximumf %73, %74 : vector<16x128xf32>
    %76 = vector.broadcast %4 : vector<1x128xf32> to vector<16x128xf32>
    %77 = arith.mulf %75, %76 : vector<16x128xf32>
    %c2_i32_36 = arith.constant 2 : i32
    %78 = tpu.dynamic_rotate %77 by %c2_i32_36 dim 1 : vector<16x128xf32>, i32 -> vector<16x128xf32>
    %c0_37 = arith.constant 0 : index
    %c0_38 = arith.constant 0 : index
    %c0_39 = arith.constant 0 : index
    %79 = vector.load %arg11[%c0_37, %c0_38, %c0_39] : memref<5x8x16xf32, #tpu.memory_space<vmem>>, vector<1x8x16xf32>
    %80 = vector.shape_cast %79 : vector<1x8x16xf32> to vector<8x16xf32>
    %cst_40 = arith.constant dense<0.000000e+00> : vector<8x128xf32>
    %81 = tpu.matmul %80, %78, %cst_40 {dimension_numbers = #tpu.dot_dimension_numbers<[1], [0], [0], [1], [0, 0, 1, 1], [], []>} : vector<8x16xf32>, vector<16x128xf32>, vector<8x128xf32> -> vector<8x128xf32>
    %c1_i32_41 = arith.constant 1 : i32
    %82 = tpu.dynamic_rotate %77 by %c1_i32_41 dim 1 : vector<16x128xf32>, i32 -> vector<16x128xf32>
    %c1_42 = arith.constant 1 : index
    %c0_43 = arith.constant 0 : index
    %c0_44 = arith.constant 0 : index
    %83 = vector.load %arg11[%c1_42, %c0_43, %c0_44] : memref<5x8x16xf32, #tpu.memory_space<vmem>>, vector<1x8x16xf32>
    %84 = vector.shape_cast %83 : vector<1x8x16xf32> to vector<8x16xf32>
    %cst_45 = arith.constant dense<0.000000e+00> : vector<8x128xf32>
    %85 = tpu.matmul %84, %82, %cst_45 {dimension_numbers = #tpu.dot_dimension_numbers<[1], [0], [0], [1], [0, 0, 1, 1], [], []>} : vector<8x16xf32>, vector<16x128xf32>, vector<8x128xf32> -> vector<8x128xf32>
    %86 = arith.addf %81, %85 : vector<8x128xf32>
    %c2_46 = arith.constant 2 : index
    %c0_47 = arith.constant 0 : index
    %c0_48 = arith.constant 0 : index
    %87 = vector.load %arg11[%c2_46, %c0_47, %c0_48] : memref<5x8x16xf32, #tpu.memory_space<vmem>>, vector<1x8x16xf32>
    %88 = vector.shape_cast %87 : vector<1x8x16xf32> to vector<8x16xf32>
    %cst_49 = arith.constant dense<0.000000e+00> : vector<8x128xf32>
    %89 = tpu.matmul %88, %77, %cst_49 {dimension_numbers = #tpu.dot_dimension_numbers<[1], [0], [0], [1], [0, 0, 1, 1], [], []>} : vector<8x16xf32>, vector<16x128xf32>, vector<8x128xf32> -> vector<8x128xf32>
    %90 = arith.addf %86, %89 : vector<8x128xf32>
    %c127_i32_50 = arith.constant 127 : i32
    %91 = tpu.dynamic_rotate %77 by %c127_i32_50 dim 1 : vector<16x128xf32>, i32 -> vector<16x128xf32>
    %c3_51 = arith.constant 3 : index
    %c0_52 = arith.constant 0 : index
    %c0_53 = arith.constant 0 : index
    %92 = vector.load %arg11[%c3_51, %c0_52, %c0_53] : memref<5x8x16xf32, #tpu.memory_space<vmem>>, vector<1x8x16xf32>
    %93 = vector.shape_cast %92 : vector<1x8x16xf32> to vector<8x16xf32>
    %cst_54 = arith.constant dense<0.000000e+00> : vector<8x128xf32>
    %94 = tpu.matmul %93, %91, %cst_54 {dimension_numbers = #tpu.dot_dimension_numbers<[1], [0], [0], [1], [0, 0, 1, 1], [], []>} : vector<8x16xf32>, vector<16x128xf32>, vector<8x128xf32> -> vector<8x128xf32>
    %95 = arith.addf %90, %94 : vector<8x128xf32>
    %c126_i32_55 = arith.constant 126 : i32
    %96 = tpu.dynamic_rotate %77 by %c126_i32_55 dim 1 : vector<16x128xf32>, i32 -> vector<16x128xf32>
    %c4_56 = arith.constant 4 : index
    %c0_57 = arith.constant 0 : index
    %c0_58 = arith.constant 0 : index
    %97 = vector.load %arg11[%c4_56, %c0_57, %c0_58] : memref<5x8x16xf32, #tpu.memory_space<vmem>>, vector<1x8x16xf32>
    %98 = vector.shape_cast %97 : vector<1x8x16xf32> to vector<8x16xf32>
    %cst_59 = arith.constant dense<0.000000e+00> : vector<8x128xf32>
    %99 = tpu.matmul %98, %96, %cst_59 {dimension_numbers = #tpu.dot_dimension_numbers<[1], [0], [0], [1], [0, 0, 1, 1], [], []>} : vector<8x16xf32>, vector<16x128xf32>, vector<8x128xf32> -> vector<8x128xf32>
    %100 = arith.addf %95, %99 : vector<8x128xf32>
    %c0_60 = arith.constant 0 : index
    %c0_61 = arith.constant 0 : index
    %101 = vector.load %arg12[%c0_60, %c0_61] : memref<8x1xf32, #tpu.memory_space<vmem>>, vector<8x1xf32>
    %102 = vector.broadcast %101 : vector<8x1xf32> to vector<8x128xf32>
    %103 = arith.addf %100, %102 : vector<8x128xf32>
    %104 = vector.broadcast %4 : vector<1x128xf32> to vector<8x128xf32>
    %105 = arith.mulf %103, %104 : vector<8x128xf32>
    %c0_62 = arith.constant 0 : index
    %c0_63 = arith.constant 0 : index
    %c0_64 = arith.constant 0 : index
    %106 = vector.load %arg5[%c0_62, %c0_63, %c0_64] : memref<1x128x1xf32, #tpu.memory_space<vmem>>, vector<1x128x1xf32>
    %107 = vector.shape_cast %106 : vector<1x128x1xf32> to vector<128x1xf32>
    %c0_65 = arith.constant 0 : index
    %c0_66 = arith.constant 0 : index
    %108 = vector.load %arg2[%c0_65, %c0_66] : memref<1x128xf32, #tpu.memory_space<vmem>>, vector<1x128xf32>
    %c0_67 = arith.constant 0 : index
    %c0_68 = arith.constant 0 : index
    %109 = vector.load %arg13[%c0_67, %c0_68] : memref<16x1xf32, #tpu.memory_space<vmem>>, vector<16x1xf32>
    %110 = vector.broadcast %107 : vector<128x1xf32> to vector<128x128xf32>
    %111 = vector.broadcast %108 : vector<1x128xf32> to vector<128x128xf32>
    %112 = arith.subf %110, %111 : vector<128x128xf32>
    %113 = arith.mulf %112, %112 : vector<128x128xf32>
    %cst_69 = arith.constant -5.000000e-01 : f32
    %114 = vector.broadcast %cst_69 : f32 to vector<128x128xf32>
    %115 = arith.mulf %114, %113 : vector<128x128xf32>
    %116 = vector.shape_cast %115 : vector<128x128xf32> to vector<1x128x128xf32>
    %117 = vector.shape_cast %109 : vector<16x1xf32> to vector<16x1x1xf32>
    %118 = vector.broadcast %116 : vector<1x128x128xf32> to vector<16x128x128xf32>
    %119 = vector.broadcast %117 : vector<16x1x1xf32> to vector<16x128x128xf32>
    %120 = arith.mulf %118, %119 : vector<16x128x128xf32>
    %121 = math.exp %120 : vector<16x128x128xf32>
    %122 = tpu.concatenate %105, %105 in 0 : vector<8x128xf32>, vector<8x128xf32> -> vector<16x128xf32>
    %123 = vector.shape_cast %122 : vector<16x128xf32> to vector<16x1x128xf32>
    %124 = vector.broadcast %123 : vector<16x1x128xf32> to vector<16x128x128xf32>
    %125 = arith.mulf %124, %121 : vector<16x128x128xf32>
    %cst_70 = arith.constant dense<0.000000e+00> : vector<16x128xf32>
    %126 = vector.multi_reduction <add>, %125, %cst_70 [2] : vector<16x128x128xf32> to vector<16x128xf32>
    %c0_71 = arith.constant 0 : index
    %c0_72 = arith.constant 0 : index
    %127 = vector.load %arg14[%c0_71, %c0_72] : memref<2x16xf32, #tpu.memory_space<vmem>>, vector<2x16xf32>
    %cst_73 = arith.constant dense<0.000000e+00> : vector<2x128xf32>
    %128 = tpu.matmul %127, %126, %cst_73 {dimension_numbers = #tpu.dot_dimension_numbers<[1], [0], [0], [1], [0, 0, 1, 1], [], []>} : vector<2x16xf32>, vector<16x128xf32>, vector<2x128xf32> -> vector<2x128xf32>
    %c0_74 = arith.constant 0 : index
    %c0_75 = arith.constant 0 : index
    %129 = vector.load %arg15[%c0_74, %c0_75] : memref<2x1xf32, #tpu.memory_space<vmem>>, vector<2x1xf32>
    %130 = vector.broadcast %129 : vector<2x1xf32> to vector<2x128xf32>
    %131 = arith.addf %128, %130 : vector<2x128xf32>
    %c0_76 = arith.constant 0 : index
    %c0_77 = arith.constant 0 : index
    %c0_78 = arith.constant 0 : index
    %132 = vector.load %arg16[%c0_76, %c0_77, %c0_78] : memref<1x2x128xf32, #tpu.memory_space<vmem>>, vector<1x2x128xf32>
    %133 = vector.shape_cast %132 : vector<1x2x128xf32> to vector<2x128xf32>
    %134 = vector.shape_cast %131 : vector<2x128xf32> to vector<1x2x128xf32>
    tpu.vector_store %arg16[%c0_76, %c0_77, %c0_78], %134 {strides = array<i32>} : memref<1x2x128xf32, #tpu.memory_space<vmem>>, vector<1x2x128xf32>,
    return
  }
  func.func @transform_0(%arg0: i32) -> (i32, i32, i32) {
    %c0_i32 = arith.constant 0 : i32
    %c0_i32_0 = arith.constant 0 : i32
    %c0_i32_1 = arith.constant 0 : i32
    return %arg0, %c0_i32, %c0_i32_0 : i32, i32, i32
  }
  func.func @transform_1(%arg0: i32) -> (i32, i32) {
    %c0_i32 = arith.constant 0 : i32
    %c0_i32_0 = arith.constant 0 : i32
    %c0_i32_1 = arith.constant 0 : i32
    return %c0_i32, %c0_i32_0 : i32, i32
  }
  func.func @transform_2(%arg0: i32) -> (i32, i32) {
    %c0_i32 = arith.constant 0 : i32
    %c0_i32_0 = arith.constant 0 : i32
    %c0_i32_1 = arith.constant 0 : i32
    return %c0_i32, %c0_i32_0 : i32, i32
  }
  func.func @transform_3(%arg0: i32) -> (i32, i32, i32) {
    %c0_i32 = arith.constant 0 : i32
    %c0_i32_0 = arith.constant 0 : i32
    %c0_i32_1 = arith.constant 0 : i32
    return %arg0, %c0_i32, %c0_i32_0 : i32, i32, i32
  }
  func.func @transform_4(%arg0: i32) -> (i32, i32, i32) {
    %c0_i32 = arith.constant 0 : i32
    %c0_i32_0 = arith.constant 0 : i32
    %c0_i32_1 = arith.constant 0 : i32
    return %arg0, %c0_i32, %c0_i32_0 : i32, i32, i32
  }
  func.func @transform_5(%arg0: i32) -> (i32, i32) {
    %c0_i32 = arith.constant 0 : i32
    %c0_i32_0 = arith.constant 0 : i32
    %c0_i32_1 = arith.constant 0 : i32
    return %c0_i32, %c0_i32_0 : i32, i32
  }
  func.func @transform_6(%arg0: i32) -> (i32, i32) {
    %c0_i32 = arith.constant 0 : i32
    %c0_i32_0 = arith.constant 0 : i32
    %c0_i32_1 = arith.constant 0 : i32
    return %c0_i32, %c0_i32_0 : i32, i32
  }
  func.func @transform_7(%arg0: i32) -> (i32, i32) {
    %c0_i32 = arith.constant 0 : i32
    %c0_i32_0 = arith.constant 0 : i32
    %c0_i32_1 = arith.constant 0 : i32
    return %c0_i32, %c0_i32_0 : i32, i32
  }
  func.func @transform_8(%arg0: i32) -> (i32, i32, i32) {
    %c0_i32 = arith.constant 0 : i32
    %c0_i32_0 = arith.constant 0 : i32
    %c0_i32_1 = arith.constant 0 : i32
    %c0_i32_2 = arith.constant 0 : i32
    return %c0_i32, %c0_i32_0, %c0_i32_1 : i32, i32, i32
  }
  func.func @transform_9(%arg0: i32) -> (i32, i32) {
    %c0_i32 = arith.constant 0 : i32
    %c0_i32_0 = arith.constant 0 : i32
    %c0_i32_1 = arith.constant 0 : i32
    return %c0_i32, %c0_i32_0 : i32, i32
  }
  func.func @transform_10(%arg0: i32) -> (i32, i32, i32) {
    %c0_i32 = arith.constant 0 : i32
    %c0_i32_0 = arith.constant 0 : i32
    %c0_i32_1 = arith.constant 0 : i32
    %c0_i32_2 = arith.constant 0 : i32
    return %c0_i32, %c0_i32_0, %c0_i32_1 : i32, i32, i32
  }
  func.func @transform_11(%arg0: i32) -> (i32, i32) {
    %c0_i32 = arith.constant 0 : i32
    %c0_i32_0 = arith.constant 0 : i32
    %c0_i32_1 = arith.constant 0 : i32
    return %c0_i32, %c0_i32_0 : i32, i32
  }
  func.func @transform_12(%arg0: i32) -> (i32, i32) {
    %c0_i32 = arith.constant 0 : i32
    %c0_i32_0 = arith.constant 0 : i32
    %c0_i32_1 = arith.constant 0 : i32
    return %c0_i32, %c0_i32_0 : i32, i32
  }
  func.func @transform_13(%arg0: i32) -> (i32, i32) {
    %c0_i32 = arith.constant 0 : i32
    %c0_i32_0 = arith.constant 0 : i32
    %c0_i32_1 = arith.constant 0 : i32
    return %c0_i32, %c0_i32_0 : i32, i32
  }
  func.func @transform_14(%arg0: i32) -> (i32, i32) {
    %c0_i32 = arith.constant 0 : i32
    %c0_i32_0 = arith.constant 0 : i32
    %c0_i32_1 = arith.constant 0 : i32
    return %c0_i32, %c0_i32_0 : i32, i32
  }
  func.func @transform_15(%arg0: i32) -> (i32, i32, i32) {
    %c0_i32 = arith.constant 0 : i32
    %c0_i32_0 = arith.constant 0 : i32
    %c0_i32_1 = arith.constant 0 : i32
    return %arg0, %c0_i32, %c0_i32_0 : i32, i32, i32
  }
}

</mosaic_0001>

<llo_original>
// kernel: tpu_custom_call.1
$region0: #{tpu_custom_call.1}
  #allocation0 [shape = 'u32[]', space=smem, size = 0x4, offset = 0x4, fixed_abs, tag = 'smem constant byte address 0x4 - core index']
  #allocation1 [shape = 'u32[144,128]{1,0:T(1,128)}', space=vmem, size = 0x12000, scoped, tag = 'internal scratch']
  %s0 = inlined_call_operand.vmem [shape: f32[2,1,8], index: 0, kind: input, shape index: {}]
  %s1 = inlined_call_operand.vmem [shape: f32[1,128], index: 1, kind: input, shape index: {}]
  %s2 = inlined_call_operand.vmem [shape: f32[128,1], index: 2, kind: input, shape index: {}]
  %s3 = inlined_call_operand.vmem [shape: f32[2,2,8], index: 3, kind: input, shape index: {}]
  %s4 = inlined_call_operand.vmem [shape: f32[2,128,1], index: 4, kind: input, shape index: {}]
  %s5 = inlined_call_operand.vmem [shape: f32[2,1], index: 5, kind: input, shape index: {}]
  %s6 = inlined_call_operand.vmem [shape: f32[8,2], index: 6, kind: input, shape index: {}]
  %s7 = inlined_call_operand.vmem [shape: f32[8,1], index: 7, kind: input, shape index: {}]
  %s8 = inlined_call_operand.vmem [shape: f32[5,16,8], index: 8, kind: input, shape index: {}]
  %s9 = inlined_call_operand.vmem [shape: f32[16,1], index: 9, kind: input, shape index: {}]
  %s10 = inlined_call_operand.vmem [shape: f32[5,8,16], index: 10, kind: input, shape index: {}]
  %s11 = inlined_call_operand.vmem [shape: f32[8,1], index: 11, kind: input, shape index: {}]
  %s12 = inlined_call_operand.vmem [shape: f32[16,1], index: 12, kind: input, shape index: {}]
  %s13 = inlined_call_operand.vmem [shape: f32[2,16], index: 13, kind: input, shape index: {}]
  %s14 = inlined_call_operand.vmem [shape: f32[2,1], index: 14, kind: input, shape index: {}]
  %s15 = inlined_call_operand.hbm [shape: f32[2,2,128], index: 15, kind: output, shape index: {}]
  %s16 = sld [smem:[#allocation0]]
  $region93: #{tpu_custom_call.1} parent=0
    _
  %s18 = ssub.s32 1, %s16
  %s19 = scalar_select 0, %s18, %s16
  $region1: #{tpu_custom_call.1} parent=0
    #allocation2 [shape = 'u8[2048]{0}', space=vmem, size = 0x800, scoped, tag = 'output window, operand 0']
    #allocation3 [shape = 's32[2]{0}', space=sflag, size = 0x8, scoped, tag = 'scoped memory for tpu_custom_call.1']
    %20 = vsyncpa [#allocation3], 0
    %s21 = scalar_lea.sflag [#allocation3], 1
    %22 = vsyncpa %s21, 0
    loop: start=0, step=1, limit=4
    $region2: #{tpu_custom_call.1} parent=1 // loop_pre_header
      _
    $region3: #{tpu_custom_call.1} parent=1 // loop_header
      %s24 = sphi 0, %s28
      %p25 = scmp.ge.s32.totalorder %s24, 4
      %s34 = sphi 0, %s36
      %s37 = sphi 0, %s34
      %s38 = sphi 0, %s37
      %s54 = sphi 0, %s38
      %s58 = sphi 0, %s58
      %s60 = sphi 0, %s58
      %s61 = sphi 0, %s60
      %s75 = sphi 0, %s61
      %s79 = sphi 0, %s79
      %s81 = sphi 0, %s79
      %s82 = sphi 0, %s81
      %s96 = sphi 0, %s82
      %s102 = sphi 0, %s104
      %s105 = sphi 0, %s102
      %s106 = sphi 0, %s105
      %s122 = sphi 0, %s106
      %s128 = sphi 0, %s130
      %s131 = sphi 0, %s128
      %s132 = sphi 0, %s131
      %s148 = sphi 0, %s132
      %s152 = sphi 0, %s152
      %s154 = sphi 0, %s152
      %s155 = sphi 0, %s154
      %s169 = sphi 0, %s155
      %s173 = sphi 0, %s173
      %s175 = sphi 0, %s173
      %s176 = sphi 0, %s175
      %s190 = sphi 0, %s176
      %s194 = sphi 0, %s194
      %s196 = sphi 0, %s194
      %s197 = sphi 0, %s196
      %s211 = sphi 0, %s197
      %s215 = sphi 0, %s215
      %s217 = sphi 0, %s215
      %s218 = sphi 0, %s217
      %s232 = sphi 0, %s218
      %s236 = sphi 0, %s236
      %s238 = sphi 0, %s236
      %s239 = sphi 0, %s238
      %s253 = sphi 0, %s239
      %s257 = sphi 0, %s257
      %s259 = sphi 0, %s257
      %s260 = sphi 0, %s259
      %s274 = sphi 0, %s260
      %s278 = sphi 0, %s278
      %s280 = sphi 0, %s278
      %s281 = sphi 0, %s280
      %s295 = sphi 0, %s281
      %s299 = sphi 0, %s299
      %s301 = sphi 0, %s299
      %s302 = sphi 0, %s301
      %s316 = sphi 0, %s302
      %s320 = sphi 0, %s320
      %s322 = sphi 0, %s320
      %s323 = sphi 0, %s322
      %s337 = sphi 0, %s323
      %s341 = sphi 0, %s341
      %s343 = sphi 0, %s341
      %s344 = sphi 0, %s343
      %s358 = sphi 0, %s344
      %s364 = sphi 0, %s366
      %s367 = sphi 0, %s364
      %s368 = sphi 0, %s367
      %s384 = sphi 0, %s368
    $region4: #{tpu_custom_call.1} parent=1 // loop_header_branch
      %27 = sbr.rel (%p25) target = $region8
    $region5: #{tpu_custom_call.1} parent=1 // loop_body
      %s29 = ssub.s32 %s24, 1
      %s30 = ssub.s32 %s24, 2
      %s31 = sadd.s32 %s24, 1
      %s32 = ssub.s32 %s24, %s31
      %p33 = scmp.eq.s32.totalorder %s32, 0
      %s35 = sadd.s32 %s34, 1
      %s36 = scalar_select %p33, %s34, %s35
      %p39 = pneg %p33
      %p40 = scmp.eq.s32.totalorder %s24, 1
      %p41 = por %p39, %p40
      %p42 = scmp.ne.s32.totalorder %s34, %s37
      %p43 = scmp.eq.s32.totalorder %s24, 0
      %p44 = por %p42, %p43
      %p45 = scmp.ne.s32.totalorder %s34, %s37
      %p46 = scmp.eq.s32.totalorder %s29, 1
      %p47 = por %p45, %p46
      %p48 = scmp.ne.s32.totalorder %s37, %s38
      %p49 = scmp.eq.s32.totalorder %s29, 0
      %p50 = por %p48, %p49
      %p51 = scmp.ne.s32.totalorder %s37, %s38
      %p52 = scmp.eq.s32.totalorder %s30, 1
      %p53 = por %p51, %p52
      %p55 = scmp.ne.s32.totalorder %s38, %s54
      %p56 = scmp.eq.s32.totalorder %s30, 0
      %p57 = por %p55, %p56
      %s59 = sadd.s32 %s58, 1
      %p62 = scmp.eq.s32.totalorder %s24, 1
      %p63 = scmp.ne.s32.totalorder %s58, %s60
      %p64 = scmp.eq.s32.totalorder %s24, 0
      %p65 = por %p63, %p64
      %p66 = scmp.ne.s32.totalorder %s58, %s60
      %p67 = scmp.eq.s32.totalorder %s29, 1
      %p68 = por %p66, %p67
      %p69 = scmp.ne.s32.totalorder %s60, %s61
      %p70 = scmp.eq.s32.totalorder %s29, 0
      %p71 = por %p69, %p70
      %p72 = scmp.ne.s32.totalorder %s60, %s61
      %p73 = scmp.eq.s32.totalorder %s30, 1
      %p74 = por %p72, %p73
      %p76 = scmp.ne.s32.totalorder %s61, %s75
      %p77 = scmp.eq.s32.totalorder %s30, 0
      %p78 = por %p76, %p77
      %s80 = sadd.s32 %s79, 1
      %p83 = scmp.eq.s32.totalorder %s24, 1
      %p84 = scmp.ne.s32.totalorder %s79, %s81
      %p85 = scmp.eq.s32.totalorder %s24, 0
      %p86 = por %p84, %p85
      %p87 = scmp.ne.s32.totalorder %s79, %s81
      %p88 = scmp.eq.s32.totalorder %s29, 1
      %p89 = por %p87, %p88
      %p90 = scmp.ne.s32.totalorder %s81, %s82
      %p91 = scmp.eq.s32.totalorder %s29, 0
      %p92 = por %p90, %p91
      %p93 = scmp.ne.s32.totalorder %s81, %s82
      %p94 = scmp.eq.s32.totalorder %s30, 1
      %p95 = por %p93, %p94
      %p97 = scmp.ne.s32.totalorder %s82, %s96
      %p98 = scmp.eq.s32.totalorder %s30, 0
      %p99 = por %p97, %p98
      %s100 = ssub.s32 %s24, %s31
      %p101 = scmp.eq.s32.totalorder %s100, 0
      %s103 = sadd.s32 %s102, 1
      %s104 = scalar_select %p101, %s102, %s103
      %p107 = pneg %p101
      %p108 = scmp.eq.s32.totalorder %s24, 1
      %p109 = por %p107, %p108
      %p110 = scmp.ne.s32.totalorder %s102, %s105
      %p111 = scmp.eq.s32.totalorder %s24, 0
      %p112 = por %p110, %p111
      %p113 = scmp.ne.s32.totalorder %s102, %s105
      %p114 = scmp.eq.s32.totalorder %s29, 1
      %p115 = por %p113, %p114
      %p116 = scmp.ne.s32.totalorder %s105, %s106
      %p117 = scmp.eq.s32.totalorder %s29, 0
      %p118 = por %p116, %p117
      %p119 = scmp.ne.s32.totalorder %s105, %s106
      %p120 = scmp.eq.s32.totalorder %s30, 1
      %p121 = por %p119, %p120
      %p123 = scmp.ne.s32.totalorder %s106, %s122
      %p124 = scmp.eq.s32.totalorder %s30, 0
      %p125 = por %p123, %p124
      %s126 = ssub.s32 %s24, %s31
      %p127 = scmp.eq.s32.totalorder %s126, 0
      %s129 = sadd.s32 %s128, 1
      %s130 = scalar_select %p127, %s128, %s129
      %p133 = pneg %p127
      %p134 = scmp.eq.s32.totalorder %s24, 1
      %p135 = por %p133, %p134
      %p136 = scmp.ne.s32.totalorder %s128, %s131
      %p137 = scmp.eq.s32.totalorder %s24, 0
      %p138 = por %p136, %p137
      %p139 = scmp.ne.s32.totalorder %s128, %s131
      %p140 = scmp.eq.s32.totalorder %s29, 1
      %p141 = por %p139, %p140
      %p142 = scmp.ne.s32.totalorder %s131, %s132
      %p143 = scmp.eq.s32.totalorder %s29, 0
      %p144 = por %p142, %p143
      %p145 = scmp.ne.s32.totalorder %s131, %s132
      %p146 = scmp.eq.s32.totalorder %s30, 1
      %p147 = por %p145, %p146
      %p149 = scmp.ne.s32.totalorder %s132, %s148
      %p150 = scmp.eq.s32.totalorder %s30, 0
      %p151 = por %p149, %p150
      %s153 = sadd.s32 %s152, 1
      %p156 = scmp.eq.s32.totalorder %s24, 1
      %p157 = scmp.ne.s32.totalorder %s152, %s154
      %p158 = scmp.eq.s32.totalorder %s24, 0
      %p159 = por %p157, %p158
      %p160 = scmp.ne.s32.totalorder %s152, %s154
      %p161 = scmp.eq.s32.totalorder %s29, 1
      %p162 = por %p160, %p161
      %p163 = scmp.ne.s32.totalorder %s154, %s155
      %p164 = scmp.eq.s32.totalorder %s29, 0
      %p165 = por %p163, %p164
      %p166 = scmp.ne.s32.totalorder %s154, %s155
      %p167 = scmp.eq.s32.totalorder %s30, 1
      %p168 = por %p166, %p167
      %p170 = scmp.ne.s32.totalorder %s155, %s169
      %p171 = scmp.eq.s32.totalorder %s30, 0
      %p172 = por %p170, %p171
      %s174 = sadd.s32 %s173, 1
      %p177 = scmp.eq.s32.totalorder %s24, 1
      %p178 = scmp.ne.s32.totalorder %s173, %s175
      %p179 = scmp.eq.s32.totalorder %s24, 0
      %p180 = por %p178, %p179
      %p181 = scmp.ne.s32.totalorder %s173, %s175
      %p182 = scmp.eq.s32.totalorder %s29, 1
      %p183 = por %p181, %p182
      %p184 = scmp.ne.s32.totalorder %s175, %s176
      %p185 = scmp.eq.s32.totalorder %s29, 0
      %p186 = por %p184, %p185
      %p187 = scmp.ne.s32.totalorder %s175, %s176
      %p188 = scmp.eq.s32.totalorder %s30, 1
      %p189 = por %p187, %p188
      %p191 = scmp.ne.s32.totalorder %s176, %s190
      %p192 = scmp.eq.s32.totalorder %s30, 0
      %p193 = por %p191, %p192
      %s195 = sadd.s32 %s194, 1
      %p198 = scmp.eq.s32.totalorder %s24, 1
      %p199 = scmp.ne.s32.totalorder %s194, %s196
      %p200 = scmp.eq.s32.totalorder %s24, 0
      %p201 = por %p199, %p200
      %p202 = scmp.ne.s32.totalorder %s194, %s196
      %p203 = scmp.eq.s32.totalorder %s29, 1
      %p204 = por %p202, %p203
      %p205 = scmp.ne.s32.totalorder %s196, %s197
      %p206 = scmp.eq.s32.totalorder %s29, 0
      %p207 = por %p205, %p206
      %p208 = scmp.ne.s32.totalorder %s196, %s197
      %p209 = scmp.eq.s32.totalorder %s30, 1
      %p210 = por %p208, %p209
      %p212 = scmp.ne.s32.totalorder %s197, %s211
      %p213 = scmp.eq.s32.totalorder %s30, 0
      %p214 = por %p212, %p213
      %s216 = sadd.s32 %s215, 1
      %p219 = scmp.eq.s32.totalorder %s24, 1
      %p220 = scmp.ne.s32.totalorder %s215, %s217
      %p221 = scmp.eq.s32.totalorder %s24, 0
      %p222 = por %p220, %p221
      %p223 = scmp.ne.s32.totalorder %s215, %s217
      %p224 = scmp.eq.s32.totalorder %s29, 1
      %p225 = por %p223, %p224
      %p226 = scmp.ne.s32.totalorder %s217, %s218
      %p227 = scmp.eq.s32.totalorder %s29, 0
      %p228 = por %p226, %p227
      %p229 = scmp.ne.s32.totalorder %s217, %s218
      %p230 = scmp.eq.s32.totalorder %s30, 1
      %p231 = por %p229, %p230
      %p233 = scmp.ne.s32.totalorder %s218, %s232
      %p234 = scmp.eq.s32.totalorder %s30, 0
      %p235 = por %p233, %p234
      %s237 = sadd.s32 %s236, 1
      %p240 = scmp.eq.s32.totalorder %s24, 1
      %p241 = scmp.ne.s32.totalorder %s236, %s238
      %p242 = scmp.eq.s32.totalorder %s24, 0
      %p243 = por %p241, %p242
      %p244 = scmp.ne.s32.totalorder %s236, %s238
      %p245 = scmp.eq.s32.totalorder %s29, 1
      %p246 = por %p244, %p245
      %p247 = scmp.ne.s32.totalorder %s238, %s239
      %p248 = scmp.eq.s32.totalorder %s29, 0
      %p249 = por %p247, %p248
      %p250 = scmp.ne.s32.totalorder %s238, %s239
      %p251 = scmp.eq.s32.totalorder %s30, 1
      %p252 = por %p250, %p251
      %p254 = scmp.ne.s32.totalorder %s239, %s253
      %p255 = scmp.eq.s32.totalorder %s30, 0
      %p256 = por %p254, %p255
      %s258 = sadd.s32 %s257, 1
      %p261 = scmp.eq.s32.totalorder %s24, 1
      %p262 = scmp.ne.s32.totalorder %s257, %s259
      %p263 = scmp.eq.s32.totalorder %s24, 0
      %p264 = por %p262, %p263
      %p265 = scmp.ne.s32.totalorder %s257, %s259
      %p266 = scmp.eq.s32.totalorder %s29, 1
      %p267 = por %p265, %p266
      %p268 = scmp.ne.s32.totalorder %s259, %s260
      %p269 = scmp.eq.s32.totalorder %s29, 0
      %p270 = por %p268, %p269
      %p271 = scmp.ne.s32.totalorder %s259, %s260
      %p272 = scmp.eq.s32.totalorder %s30, 1
      %p273 = por %p271, %p272
      %p275 = scmp.ne.s32.totalorder %s260, %s274
      %p276 = scmp.eq.s32.totalorder %s30, 0
      %p277 = por %p275, %p276
      %s279 = sadd.s32 %s278, 1
      %p282 = scmp.eq.s32.totalorder %s24, 1
      %p283 = scmp.ne.s32.totalorder %s278, %s280
      %p284 = scmp.eq.s32.totalorder %s24, 0
      %p285 = por %p283, %p284
      %p286 = scmp.ne.s32.totalorder %s278, %s280
      %p287 = scmp.eq.s32.totalorder %s29, 1
      %p288 = por %p286, %p287
      %p289 = scmp.ne.s32.totalorder %s280, %s281
      %p290 = scmp.eq.s32.totalorder %s29, 0
      %p291 = por %p289, %p290
      %p292 = scmp.ne.s32.totalorder %s280, %s281
      %p293 = scmp.eq.s32.totalorder %s30, 1
      %p294 = por %p292, %p293
      %p296 = scmp.ne.s32.totalorder %s281, %s295
      %p297 = scmp.eq.s32.totalorder %s30, 0
      %p298 = por %p296, %p297
      %s300 = sadd.s32 %s299, 1
      %p303 = scmp.eq.s32.totalorder %s24, 1
      %p304 = scmp.ne.s32.totalorder %s299, %s301
      %p305 = scmp.eq.s32.totalorder %s24, 0
      %p306 = por %p304, %p305
      %p307 = scmp.ne.s32.totalorder %s299, %s301
      %p308 = scmp.eq.s32.totalorder %s29, 1
      %p309 = por %p307, %p308
      %p310 = scmp.ne.s32.totalorder %s301, %s302
      %p311 = scmp.eq.s32.totalorder %s29, 0
      %p312 = por %p310, %p311
      %p313 = scmp.ne.s32.totalorder %s301, %s302
      %p314 = scmp.eq.s32.totalorder %s30, 1
      %p315 = por %p313, %p314
      %p317 = scmp.ne.s32.totalorder %s302, %s316
      %p318 = scmp.eq.s32.totalorder %s30, 0
      %p319 = por %p317, %p318
      %s321 = sadd.s32 %s320, 1
      %p324 = scmp.eq.s32.totalorder %s24, 1
      %p325 = scmp.ne.s32.totalorder %s320, %s322
      %p326 = scmp.eq.s32.totalorder %s24, 0
      %p327 = por %p325, %p326
      %p328 = scmp.ne.s32.totalorder %s320, %s322
      %p329 = scmp.eq.s32.totalorder %s29, 1
      %p330 = por %p328, %p329
      %p331 = scmp.ne.s32.totalorder %s322, %s323
      %p332 = scmp.eq.s32.totalorder %s29, 0
      %p333 = por %p331, %p332
      %p334 = scmp.ne.s32.totalorder %s322, %s323
      %p335 = scmp.eq.s32.totalorder %s30, 1
      %p336 = por %p334, %p335
      %p338 = scmp.ne.s32.totalorder %s323, %s337
      %p339 = scmp.eq.s32.totalorder %s30, 0
      %p340 = por %p338, %p339
      %s342 = sadd.s32 %s341, 1
      %p345 = scmp.eq.s32.totalorder %s24, 1
      %p346 = scmp.ne.s32.totalorder %s341, %s343
      %p347 = scmp.eq.s32.totalorder %s24, 0
      %p348 = por %p346, %p347
      %p349 = scmp.ne.s32.totalorder %s341, %s343
      %p350 = scmp.eq.s32.totalorder %s29, 1
      %p351 = por %p349, %p350
      %p352 = scmp.ne.s32.totalorder %s343, %s344
      %p353 = scmp.eq.s32.totalorder %s29, 0
      %p354 = por %p352, %p353
      %p355 = scmp.ne.s32.totalorder %s343, %s344
      %p356 = scmp.eq.s32.totalorder %s30, 1
      %p357 = por %p355, %p356
      %p359 = scmp.ne.s32.totalorder %s344, %s358
      %p360 = scmp.eq.s32.totalorder %s30, 0
      %p361 = por %p359, %p360
      %s362 = ssub.s32 %s24, %s31
      %p363 = scmp.eq.s32.totalorder %s362, 0
      %s365 = sadd.s32 %s364, 1
      %s366 = scalar_select %p363, %s364, %s365
      %p369 = pneg %p363
      %p370 = scmp.eq.s32.totalorder %s24, 1
      %p371 = por %p369, %p370
      %p372 = scmp.ne.s32.totalorder %s364, %s367
      %p373 = scmp.eq.s32.totalorder %s24, 0
      %p374 = por %p372, %p373
      %p375 = scmp.ne.s32.totalorder %s364, %s367
      %p376 = scmp.eq.s32.totalorder %s29, 1
      %p377 = por %p375, %p376
      %p378 = scmp.ne.s32.totalorder %s367, %s368
      %p379 = scmp.eq.s32.totalorder %s29, 0
      %p380 = por %p378, %p379
      %p381 = scmp.ne.s32.totalorder %s367, %s368
      %p382 = scmp.eq.s32.totalorder %s30, 1
      %p383 = por %p381, %p382
      %p385 = scmp.ne.s32.totalorder %s368, %s384
      %p386 = scmp.eq.s32.totalorder %s30, 0
      %p387 = por %p385, %p386
      %p388 = scmp.le.s32.totalorder 1, %s24
      %p389 = scmp.lt.s32.totalorder %s24, 3
      %p390 = pnand %p388, %p389
      %p391 = pneg %p390
      // Predicated region
      $region9: #{tpu_custom_call.1} parent=5 // pred_check
        _
      $region10: #{tpu_custom_call.1} parent=5 // pred_check_branch
        %393 = sbr.rel (%p390) target = $region12
      $region11: #{tpu_custom_call.1} parent=5 // pred_region
        %s394 = ssub.s32 %s24, 1
        // Predicated region
        $region13: #{tpu_custom_call.1} parent=11 // pred_check
          %p395 = pneg %p71
        $region14: #{tpu_custom_call.1} parent=11 // pred_check_branch
          %397 = sbr.rel (%p395) target = $region16
        $region15: #{tpu_custom_call.1} parent=11 // pred_region
          _
        $region16: #{tpu_custom_call.1} parent=11 // pred_fallthru
          _
        // Predicated region
        $region17: #{tpu_custom_call.1} parent=11 // pred_check
          %p398 = pneg %p92
        $region18: #{tpu_custom_call.1} parent=11 // pred_check_branch
          %400 = sbr.rel (%p398) target = $region20
        $region19: #{tpu_custom_call.1} parent=11 // pred_region
          _
        $region20: #{tpu_custom_call.1} parent=11 // pred_fallthru
          _
        // Predicated region
        $region21: #{tpu_custom_call.1} parent=11 // pred_check
          %p401 = pneg %p165
        $region22: #{tpu_custom_call.1} parent=11 // pred_check_branch
          %403 = sbr.rel (%p401) target = $region24
        $region23: #{tpu_custom_call.1} parent=11 // pred_region
          _
        $region24: #{tpu_custom_call.1} parent=11 // pred_fallthru
          _
        // Predicated region
        $region25: #{tpu_custom_call.1} parent=11 // pred_check
          %p404 = pneg %p186
        $region26: #{tpu_custom_call.1} parent=11 // pred_check_branch
          %406 = sbr.rel (%p404) target = $region28
        $region27: #{tpu_custom_call.1} parent=11 // pred_region
          _
        $region28: #{tpu_custom_call.1} parent=11 // pred_fallthru
          _
        // Predicated region
        $region29: #{tpu_custom_call.1} parent=11 // pred_check
          %p407 = pneg %p207
        $region30: #{tpu_custom_call.1} parent=11 // pred_check_branch
          %409 = sbr.rel (%p407) target = $region32
        $region31: #{tpu_custom_call.1} parent=11 // pred_region
          _
        $region32: #{tpu_custom_call.1} parent=11 // pred_fallthru
          _
        // Predicated region
        $region33: #{tpu_custom_call.1} parent=11 // pred_check
          %p410 = pneg %p228
        $region34: #{tpu_custom_call.1} parent=11 // pred_check_branch
          %412 = sbr.rel (%p410) target = $region36
        $region35: #{tpu_custom_call.1} parent=11 // pred_region
          _
        $region36: #{tpu_custom_call.1} parent=11 // pred_fallthru
          _
        // Predicated region
        $region37: #{tpu_custom_call.1} parent=11 // pred_check
          %p413 = pneg %p249
        $region38: #{tpu_custom_call.1} parent=11 // pred_check_branch
          %415 = sbr.rel (%p413) target = $region40
        $region39: #{tpu_custom_call.1} parent=11 // pred_region
          _
        $region40: #{tpu_custom_call.1} parent=11 // pred_fallthru
          _
        // Predicated region
        $region41: #{tpu_custom_call.1} parent=11 // pred_check
          %p416 = pneg %p270
        $region42: #{tpu_custom_call.1} parent=11 // pred_check_branch
          %418 = sbr.rel (%p416) target = $region44
        $region43: #{tpu_custom_call.1} parent=11 // pred_region
          _
        $region44: #{tpu_custom_call.1} parent=11 // pred_fallthru
          _
        // Predicated region
        $region45: #{tpu_custom_call.1} parent=11 // pred_check
          %p419 = pneg %p291
        $region46: #{tpu_custom_call.1} parent=11 // pred_check_branch
          %421 = sbr.rel (%p419) target = $region48
        $region47: #{tpu_custom_call.1} parent=11 // pred_region
          _
        $region48: #{tpu_custom_call.1} parent=11 // pred_fallthru
          _
        // Predicated region
        $region49: #{tpu_custom_call.1} parent=11 // pred_check
          %p422 = pneg %p312
        $region50: #{tpu_custom_call.1} parent=11 // pred_check_branch
          %424 = sbr.rel (%p422) target = $region52
        $region51: #{tpu_custom_call.1} parent=11 // pred_region
          _
        $region52: #{tpu_custom_call.1} parent=11 // pred_fallthru
          _
        // Predicated region
        $region53: #{tpu_custom_call.1} parent=11 // pred_check
          %p425 = pneg %p333
        $region54: #{tpu_custom_call.1} parent=11 // pred_check_branch
          %427 = sbr.rel (%p425) target = $region56
        $region55: #{tpu_custom_call.1} parent=11 // pred_region
          _
        $region56: #{tpu_custom_call.1} parent=11 // pred_fallthru
          _
        // Predicated region
        $region57: #{tpu_custom_call.1} parent=11 // pred_check
          %p428 = pneg %p354
        $region58: #{tpu_custom_call.1} parent=11 // pred_check_branch
          %430 = sbr.rel (%p428) target = $region60
        $region59: #{tpu_custom_call.1} parent=11 // pred_region
          _
        $region60: #{tpu_custom_call.1} parent=11 // pred_fallthru
          _
      $region12: #{tpu_custom_call.1} parent=5 // pred_fallthru
        _
      %p431 = scmp.lt.s32.totalorder %s24, 2
      // Predicated region
      $region61: #{tpu_custom_call.1} parent=5 // pred_check
        %p432 = pneg %p431
      $region62: #{tpu_custom_call.1} parent=5 // pred_check_branch
        %434 = sbr.rel (%p432) target = $region64
      $region63: #{tpu_custom_call.1} parent=5 // pred_region
        // Predicated region
        $region65: #{tpu_custom_call.1} parent=63 // pred_check
          %p435 = pneg %p44
        $region66: #{tpu_custom_call.1} parent=63 // pred_check_branch
          %437 = sbr.rel (%p435) target = $region68
        $region67: #{tpu_custom_call.1} parent=63 // pred_region
          %p438 = scmp.lt.s32.totalorder %s24, 1
          %s439 = scalar_select %p438, %s24, 1
          %s440 = scalar_lea.vmem %s0, %s439
        $region68: #{tpu_custom_call.1} parent=63 // pred_fallthru
          _
        // Predicated region
        $region69: #{tpu_custom_call.1} parent=63 // pred_check
          %p441 = pneg %p112
        $region70: #{tpu_custom_call.1} parent=63 // pred_check_branch
          %443 = sbr.rel (%p441) target = $region72
        $region71: #{tpu_custom_call.1} parent=63 // pred_region
          %p444 = scmp.lt.s32.totalorder %s24, 1
          %s445 = scalar_select %p444, %s24, 1
          %s446 = smul.addr %s445, 2
          %s447 = scalar_lea.vmem %s3, %s446
        $region72: #{tpu_custom_call.1} parent=63 // pred_fallthru
          _
        // Predicated region
        $region73: #{tpu_custom_call.1} parent=63 // pred_check
          %p448 = pneg %p138
        $region74: #{tpu_custom_call.1} parent=63 // pred_check_branch
          %450 = sbr.rel (%p448) target = $region76
        $region75: #{tpu_custom_call.1} parent=63 // pred_region
          %p451 = scmp.lt.s32.totalorder %s24, 1
          %s452 = scalar_select %p451, %s24, 1
          %s453 = smul.addr %s452, 16
          %s454 = smul.addr %s453, 8
          %s455 = scalar_lea.vmem %s4, %s454
        $region76: #{tpu_custom_call.1} parent=63 // pred_fallthru
          _
      $region64: #{tpu_custom_call.1} parent=5 // pred_fallthru
        _
      %p456 = scmp.le.s32.totalorder 1, %s24
      %p457 = scmp.lt.s32.totalorder %s24, 3
      %p458 = pnand %p456, %p457
      %p459 = pneg %p458
      // Predicated region
      $region77: #{tpu_custom_call.1} parent=5 // pred_check
        _
      $region78: #{tpu_custom_call.1} parent=5 // pred_check_branch
        %461 = sbr.rel (%p458) target = $region80
      $region79: #{tpu_custom_call.1} parent=5 // pred_region
        %s462 = ssub.s32 %s24, 1
        %p463 = scmp.lt.s32.totalorder %s29, 1
        %s464 = scalar_select %p463, %s29, 1
        %s465 = scalar_lea.vmem %s0, %s464
        %p466 = pneg %p50
        %p467 = pneg %p47
        %p468 = pneg %p71
        %p469 = pneg %p68
        %p470 = pneg %p92
        %p471 = pneg %p89
        %p472 = scmp.lt.s32.totalorder %s29, 1
        %s473 = scalar_select %p472, %s29, 1
        %s474 = smul.addr %s473, 2
        %s475 = scalar_lea.vmem %s3, %s474
        %p476 = pneg %p118
        %p477 = pneg %p115
        %p478 = scmp.lt.s32.totalorder %s29, 1
        %s479 = scalar_select %p478, %s29, 1
        %s480 = smul.addr %s479, 16
        %s481 = smul.addr %s480, 8
        %s482 = scalar_lea.vmem %s4, %s481
        %p483 = pneg %p144
        %p484 = pneg %p141
        %p485 = pneg %p165
        %p486 = pneg %p162
        %p487 = pneg %p186
        %p488 = pneg %p183
        %p489 = pneg %p207
        %p490 = pneg %p204
        %p491 = pneg %p228
        %p492 = pneg %p225
        %p493 = pneg %p249
        %p494 = pneg %p246
        %p495 = pneg %p270
        %p496 = pneg %p267
        %p497 = pneg %p291
        %p498 = pneg %p288
        %p499 = pneg %p312
        %p500 = pneg %p309
        %p501 = pneg %p333
        %p502 = pneg %p330
        %p503 = pneg %p354
        %p504 = pneg %p351
        %p505 = pneg %p380
        %p506 = pneg %p377
        %s507 = sand.u32 %s367, 1
        %s508 = scalar_lea.sflag [#allocation3], %s507
        %s509 = sand.u32 %s367, 1
        %s510 = smul.addr %s509, 2
        %s511 = scalar_lea.vmem [#allocation2], %s510
        %p512 = scmp.lt.s32.totalorder %s29, 1
        %s513 = scalar_select %p512, %s29, 1
        %s514 = scalar_lea.vmem %s0, %s513
        %p515 = scmp.lt.s32.totalorder %s29, 1
        %s516 = scalar_select %p515, %s29, 1
        %s517 = smul.addr %s516, 2
        %s518 = scalar_lea.vmem %s3, %s517
        %p519 = scmp.lt.s32.totalorder %s29, 1
        %s520 = scalar_select %p519, %s29, 1
        %s521 = smul.addr %s520, 16
        %s522 = smul.addr %s521, 8
        %s523 = scalar_lea.vmem %s4, %s522
        %v524 = vlaneseq
        %v525 = vand.u32 %v524, 127
        %vm526 = vcmp.lt.s32.totalorder %v525, 48
        %v527 = vsel %vm526, 1, 0
        %v528 = vcvt.s32.f32 %v527
        %v529 = vld [vmem:[%s514] sm:$0x1]
        %v530 = vld [vmem:[%s2] sm:$0xff]
        %v531 = vld [vmem:[%s2 + $0x8] sm:$0xff]
        %v532 = vld [vmem:[%s2 + $0x10] sm:$0xff]
        %v533 = vld [vmem:[%s2 + $0x18] sm:$0xff]
        %v534 = vld [vmem:[%s2 + $0x20] sm:$0xff]
        %v535 = vld [vmem:[%s2 + $0x28] sm:$0xff]
        %v536 = vld [vmem:[%s2 + $0x30] sm:$0xff]
        %v537 = vld [vmem:[%s2 + $0x38] sm:$0xff]
        %v538 = vld [vmem:[%s2 + $0x40] sm:$0xff]
        %v539 = vld [vmem:[%s2 + $0x48] sm:$0xff]
        %v540 = vld [vmem:[%s2 + $0x50] sm:$0xff]
        %v541 = vld [vmem:[%s2 + $0x58] sm:$0xff]
        %v542 = vld [vmem:[%s2 + $0x60] sm:$0xff]
        %v543 = vld [vmem:[%s2 + $0x68] sm:$0xff]
        %v544 = vld [vmem:[%s2 + $0x70] sm:$0xff]
        %v545 = vld [vmem:[%s2 + $0x78] sm:$0xff]
        %v546 = vld [vmem:[%s518] sm:$0x3]
        %v547 = vld [vmem:[%s5] sm:$0x3]
        %549 = vset.pattern.permute.xlu0 0
        %550 = vperm.xlu0 %549, %v530
        %v551 = vpop.permute.xlu0 %550
        %554 = vset.pattern.permute.xlu0 0
        %555 = vperm.xlu0 %554, %v531
        %v556 = vpop.permute.xlu0 %555
        %559 = vset.pattern.permute.xlu0 0
        %560 = vperm.xlu0 %559, %v532
        %v561 = vpop.permute.xlu0 %560
        %564 = vset.pattern.permute.xlu0 0
        %565 = vperm.xlu0 %564, %v533
        %v566 = vpop.permute.xlu0 %565
        %569 = vset.pattern.permute.xlu0 0
        %570 = vperm.xlu0 %569, %v534
        %v571 = vpop.permute.xlu0 %570
        %574 = vset.pattern.permute.xlu0 0
        %575 = vperm.xlu0 %574, %v535
        %v576 = vpop.permute.xlu0 %575
        %579 = vset.pattern.permute.xlu0 0
        %580 = vperm.xlu0 %579, %v536
        %v581 = vpop.permute.xlu0 %580
        %584 = vset.pattern.permute.xlu0 0
        %585 = vperm.xlu0 %584, %v537
        %v586 = vpop.permute.xlu0 %585
        %589 = vset.pattern.permute.xlu0 0
        %590 = vperm.xlu0 %589, %v538
        %v591 = vpop.permute.xlu0 %590
        %594 = vset.pattern.permute.xlu0 0
        %595 = vperm.xlu0 %594, %v539
        %v596 = vpop.permute.xlu0 %595
        %599 = vset.pattern.permute.xlu0 0
        %600 = vperm.xlu0 %599, %v540
        %v601 = vpop.permute.xlu0 %600
        %604 = vset.pattern.permute.xlu0 0
        %605 = vperm.xlu0 %604, %v541
        %v606 = vpop.permute.xlu0 %605
        %609 = vset.pattern.permute.xlu0 0
        %610 = vperm.xlu0 %609, %v542
        %v611 = vpop.permute.xlu0 %610
        %614 = vset.pattern.permute.xlu0 0
        %615 = vperm.xlu0 %614, %v543
        %v616 = vpop.permute.xlu0 %615
        %619 = vset.pattern.permute.xlu0 0
        %620 = vperm.xlu0 %619, %v544
        %v621 = vpop.permute.xlu0 %620
        %624 = vset.pattern.permute.xlu0 0
        %625 = vperm.xlu0 %624, %v545
        %v626 = vpop.permute.xlu0 %625
        %v629 = vlaneseq
        %v630 = vshrl.u32 %v629, 7
        %v631 = vsub.s32 0, %v630
        %v632 = vrot.slane %v529, %v631
        %v634 = vsub.f32 %v551, %v632
        %v635 = vsub.f32 %v556, %v632
        %v636 = vsub.f32 %v561, %v632
        %v637 = vsub.f32 %v566, %v632
        %v638 = vsub.f32 %v571, %v632
        %v639 = vsub.f32 %v576, %v632
        %v640 = vsub.f32 %v581, %v632
        %v641 = vsub.f32 %v586, %v632
        %v642 = vsub.f32 %v591, %v632
        %v643 = vsub.f32 %v596, %v632
        %v644 = vsub.f32 %v601, %v632
        %v645 = vsub.f32 %v606, %v632
        %v646 = vsub.f32 %v611, %v632
        %v647 = vsub.f32 %v616, %v632
        %v648 = vsub.f32 %v621, %v632
        %v649 = vsub.f32 %v626, %v632
        %v650 = vmul.f32 %v634, %v634
        %v651 = vmul.f32 %v635, %v635
        %v652 = vmul.f32 %v636, %v636
        %v653 = vmul.f32 %v637, %v637
        %v654 = vmul.f32 %v638, %v638
        %v655 = vmul.f32 %v639, %v639
        %v656 = vmul.f32 %v640, %v640
        %v657 = vmul.f32 %v641, %v641
        %v658 = vmul.f32 %v642, %v642
        %v659 = vmul.f32 %v643, %v643
        %v660 = vmul.f32 %v644, %v644
        %v661 = vmul.f32 %v645, %v645
        %v662 = vmul.f32 %v646, %v646
        %v663 = vmul.f32 %v647, %v647
        %v664 = vmul.f32 %v648, %v648
        %v665 = vmul.f32 %v649, %v649
        %v666 = vmul.f32 %v650, -0.5
        %v667 = vmul.f32 %v651, -0.5
        %v668 = vmul.f32 %v652, -0.5
        %v669 = vmul.f32 %v653, -0.5
        %v670 = vmul.f32 %v654, -0.5
        %v671 = vmul.f32 %v655, -0.5
        %v672 = vmul.f32 %v656, -0.5
        %v673 = vmul.f32 %v657, -0.5
        %v674 = vmul.f32 %v658, -0.5
        %v675 = vmul.f32 %v659, -0.5
        %v676 = vmul.f32 %v660, -0.5
        %v677 = vmul.f32 %v661, -0.5
        %v678 = vmul.f32 %v662, -0.5
        %v679 = vmul.f32 %v663, -0.5
        %v680 = vmul.f32 %v664, -0.5
        %v681 = vmul.f32 %v665, -0.5
        %v684 = vunpack.c.l.s4 1966171168
        %v685 = vunpack.c.0.s8 %v684
        %v686 = vlaneseq
        %v687 = vshrl.u32 %v686, 7
        %v688 = vsub.s32 %v685, %v687
        %v689 = vrot.slane %v547, %v688
        %v690 = vcombine.high %v689, %v689
        %v692 = vunpack.c.l.s4 1966171168
        %v693 = vunpack.c.0.s8 %v692
        %v694 = vlaneseq
        %v695 = vshrl.u32 %v694, 7
        %v696 = vsub.s32 %v693, %v695
        %v697 = vrot.slane %v689, %v696
        %v699 = vunpack.c.l.s4 1966171168
        %v700 = vunpack.c.0.s8 %v699
        %v701 = vlaneseq
        %v702 = vshrl.u32 %v701, 7
        %v703 = vsub.s32 %v700, %v702
        %v704 = vrot.slane %v690, %v703
        %v705 = vlaneseq
        %v706 = vshrl.u32 %v705, 7
        %v707 = vsub.s32 0, %v706
        %v708 = vrot.slane %v697, %v707
        %v709 = vlaneseq
        %v710 = vshrl.u32 %v709, 7
        %v711 = vsub.s32 0, %v710
        %v712 = vrot.slane %v704, %v711
        %713 = vset.pattern.permute.xlu0 0
        %714 = vperm.xlu0 %713, %v708
        %v715 = vpop.permute.xlu0 %714
        %717 = vset.pattern.permute.xlu0 0
        %718 = vperm.xlu0 %717, %v712
        %v719 = vpop.permute.xlu0 %718
        %v721 = vmul.f32 %v666, %v715
        %v722 = vmul.f32 %v667, %v715
        %v723 = vmul.f32 %v668, %v715
        %v724 = vmul.f32 %v669, %v715
        %v725 = vmul.f32 %v670, %v715
        %v726 = vmul.f32 %v671, %v715
        %v727 = vmul.f32 %v672, %v715
        %v728 = vmul.f32 %v673, %v715
        %v729 = vmul.f32 %v674, %v715
        %v730 = vmul.f32 %v675, %v715
        %v731 = vmul.f32 %v676, %v715
        %v732 = vmul.f32 %v677, %v715
        %v733 = vmul.f32 %v678, %v715
        %v734 = vmul.f32 %v679, %v715
        %v735 = vmul.f32 %v680, %v715
        %v736 = vmul.f32 %v681, %v715
        %v737 = vmul.f32 %v666, %v719
        %v738 = vmul.f32 %v667, %v719
        %v739 = vmul.f32 %v668, %v719
        %v740 = vmul.f32 %v669, %v719
        %v741 = vmul.f32 %v670, %v719
        %v742 = vmul.f32 %v671, %v719
        %v743 = vmul.f32 %v672, %v719
        %v744 = vmul.f32 %v673, %v719
        %v745 = vmul.f32 %v674, %v719
        %v746 = vmul.f32 %v675, %v719
        %v747 = vmul.f32 %v676, %v719
        %v748 = vmul.f32 %v677, %v719
        %v749 = vmul.f32 %v678, %v719
        %v750 = vmul.f32 %v679, %v719
        %v751 = vmul.f32 %v680, %v719
        %v752 = vmul.f32 %v681, %v719
        %v753 = vmul.f32 %v721, 1.442695
        %v754 = vpow.pop %v753
        %v755 = vmul.f32 %v722, 1.442695
        %v756 = vpow.pop %v755
        %v757 = vmul.f32 %v723, 1.442695
        %v758 = vpow.pop %v757
        %v759 = vmul.f32 %v724, 1.442695
        %v760 = vpow.pop %v759
        %v761 = vmul.f32 %v725, 1.442695
        %v762 = vpow.pop %v761
        %v763 = vmul.f32 %v726, 1.442695
        %v764 = vpow.pop %v763
        %v765 = vmul.f32 %v727, 1.442695
        %v766 = vpow.pop %v765
        %v767 = vmul.f32 %v728, 1.442695
        %v768 = vpow.pop %v767
        %v769 = vmul.f32 %v729, 1.442695
        %v770 = vpow.pop %v769
        %v771 = vmul.f32 %v730, 1.442695
        %v772 = vpow.pop %v771
        %v773 = vmul.f32 %v731, 1.442695
        %v774 = vpow.pop %v773
        %v775 = vmul.f32 %v732, 1.442695
        %v776 = vpow.pop %v775
        %v777 = vmul.f32 %v733, 1.442695
        %v778 = vpow.pop %v777
        %v779 = vmul.f32 %v734, 1.442695
        %v780 = vpow.pop %v779
        %v781 = vmul.f32 %v735, 1.442695
        %v782 = vpow.pop %v781
        %v783 = vmul.f32 %v736, 1.442695
        %v784 = vpow.pop %v783
        %v785 = vmul.f32 %v737, 1.442695
        %v786 = vpow.pop %v785
        %v787 = vmul.f32 %v738, 1.442695
        %v788 = vpow.pop %v787
        %v789 = vmul.f32 %v739, 1.442695
        %v790 = vpow.pop %v789
        %v791 = vmul.f32 %v740, 1.442695
        %v792 = vpow.pop %v791
        %v793 = vmul.f32 %v741, 1.442695
        %v794 = vpow.pop %v793
        %v795 = vmul.f32 %v742, 1.442695
        %v796 = vpow.pop %v795
        %v797 = vmul.f32 %v743, 1.442695
        %v798 = vpow.pop %v797
        %v799 = vmul.f32 %v744, 1.442695
        %v800 = vpow.pop %v799
        %v801 = vmul.f32 %v745, 1.442695
        %v802 = vpow.pop %v801
        %v803 = vmul.f32 %v746, 1.442695
        %v804 = vpow.pop %v803
        %v805 = vmul.f32 %v747, 1.442695
        %v806 = vpow.pop %v805
        %v807 = vmul.f32 %v748, 1.442695
        %v808 = vpow.pop %v807
        %v809 = vmul.f32 %v749, 1.442695
        %v810 = vpow.pop %v809
        %v811 = vmul.f32 %v750, 1.442695
        %v812 = vpow.pop %v811
        %v813 = vmul.f32 %v751, 1.442695
        %v814 = vpow.pop %v813
        %v815 = vmul.f32 %v752, 1.442695
        %v816 = vpow.pop %v815
        %v819 = vunpack.c.l.s4 1966171168
        %v820 = vunpack.c.0.s8 %v819
        %v821 = vlaneseq
        %v822 = vshrl.u32 %v821, 7
        %v823 = vsub.s32 %v820, %v822
        %v824 = vrot.slane %v546, %v823
        %v825 = vcombine.high %v824, %v824
        %v827 = vunpack.c.l.s4 1966171168
        %v828 = vunpack.c.0.s8 %v827
        %v829 = vlaneseq
        %v830 = vshrl.u32 %v829, 7
        %v831 = vsub.s32 %v828, %v830
        %v832 = vrot.slane %v824, %v831
        %v834 = vunpack.c.l.s4 1966171168
        %v835 = vunpack.c.0.s8 %v834
        %v836 = vlaneseq
        %v837 = vshrl.u32 %v836, 7
        %v838 = vsub.s32 %v835, %v837
        %v839 = vrot.slane %v825, %v838
        %v840 = vlaneseq
        %v841 = vshrl.u32 %v840, 7
        %v842 = vsub.s32 0, %v841
        %v843 = vrot.slane %v832, %v842
        %v844 = vlaneseq
        %v845 = vshrl.u32 %v844, 7
        %v846 = vsub.s32 0, %v845
        %v847 = vrot.slane %v839, %v846
        %v850 = vmul.f32 %v843, %v754
        %v851 = vmul.f32 %v843, %v756
        %v852 = vmul.f32 %v843, %v758
        %v853 = vmul.f32 %v843, %v760
        %v854 = vmul.f32 %v843, %v762
        %v855 = vmul.f32 %v843, %v764
        %v856 = vmul.f32 %v843, %v766
        %v857 = vmul.f32 %v843, %v768
        %v858 = vmul.f32 %v843, %v770
        %v859 = vmul.f32 %v843, %v772
        %v860 = vmul.f32 %v843, %v774
        %v861 = vmul.f32 %v843, %v776
        %v862 = vmul.f32 %v843, %v778
        %v863 = vmul.f32 %v843, %v780
        %v864 = vmul.f32 %v843, %v782
        %v865 = vmul.f32 %v843, %v784
        %v866 = vmul.f32 %v847, %v786
        %v867 = vmul.f32 %v847, %v788
        %v868 = vmul.f32 %v847, %v790
        %v869 = vmul.f32 %v847, %v792
        %v870 = vmul.f32 %v847, %v794
        %v871 = vmul.f32 %v847, %v796
        %v872 = vmul.f32 %v847, %v798
        %v873 = vmul.f32 %v847, %v800
        %v874 = vmul.f32 %v847, %v802
        %v875 = vmul.f32 %v847, %v804
        %v876 = vmul.f32 %v847, %v806
        %v877 = vmul.f32 %v847, %v808
        %v878 = vmul.f32 %v847, %v810
        %v879 = vmul.f32 %v847, %v812
        %v880 = vmul.f32 %v847, %v814
        %v881 = vmul.f32 %v847, %v816
        %vm882 = vcmask 64512
        %v883 = vsel %vm882, %v850, 0.0
        %884 = vadd.xlane.f32.xlu0 %v883
        %v885 = vpop.xlane.xlu0 %884
        %v886 = vsel %vm882, %v851, 0.0
        %887 = vadd.xlane.f32.xlu0 %v886
        %v888 = vpop.xlane.xlu0 %887
        %v889 = vsel %vm882, %v852, 0.0
        %890 = vadd.xlane.f32.xlu0 %v889
        %v891 = vpop.xlane.xlu0 %890
        %v892 = vsel %vm882, %v853, 0.0
        %893 = vadd.xlane.f32.xlu0 %v892
        %v894 = vpop.xlane.xlu0 %893
        %v895 = vsel %vm882, %v854, 0.0
        %896 = vadd.xlane.f32.xlu0 %v895
        %v897 = vpop.xlane.xlu0 %896
        %v898 = vsel %vm882, %v855, 0.0
        %899 = vadd.xlane.f32.xlu0 %v898
        %v900 = vpop.xlane.xlu0 %899
        %v901 = vsel %vm882, %v856, 0.0
        %902 = vadd.xlane.f32.xlu0 %v901
        %v903 = vpop.xlane.xlu0 %902
        %v904 = vsel %vm882, %v857, 0.0
        %905 = vadd.xlane.f32.xlu0 %v904
        %v906 = vpop.xlane.xlu0 %905
        %v907 = vsel %vm882, %v858, 0.0
        %908 = vadd.xlane.f32.xlu0 %v907
        %v909 = vpop.xlane.xlu0 %908
        %v910 = vsel %vm882, %v859, 0.0
        %911 = vadd.xlane.f32.xlu0 %v910
        %v912 = vpop.xlane.xlu0 %911
        %v913 = vsel %vm882, %v860, 0.0
        %914 = vadd.xlane.f32.xlu0 %v913
        %v915 = vpop.xlane.xlu0 %914
        %v916 = vsel %vm882, %v861, 0.0
        %917 = vadd.xlane.f32.xlu0 %v916
        %v918 = vpop.xlane.xlu0 %917
        %v919 = vsel %vm882, %v862, 0.0
        %920 = vadd.xlane.f32.xlu0 %v919
        %v921 = vpop.xlane.xlu0 %920
        %v922 = vsel %vm882, %v863, 0.0
        %923 = vadd.xlane.f32.xlu0 %v922
        %v924 = vpop.xlane.xlu0 %923
        %v925 = vsel %vm882, %v864, 0.0
        %926 = vadd.xlane.f32.xlu0 %v925
        %v927 = vpop.xlane.xlu0 %926
        %v928 = vsel %vm882, %v865, 0.0
        %929 = vadd.xlane.f32.xlu0 %v928
        %v930 = vpop.xlane.xlu0 %929
        %v931 = vsel %vm882, %v866, 0.0
        %932 = vadd.xlane.f32.xlu0 %v931
        %v933 = vpop.xlane.xlu0 %932
        %v934 = vsel %vm882, %v867, 0.0
        %935 = vadd.xlane.f32.xlu0 %v934
        %v936 = vpop.xlane.xlu0 %935
        %v937 = vsel %vm882, %v868, 0.0
        %938 = vadd.xlane.f32.xlu0 %v937
        %v939 = vpop.xlane.xlu0 %938
        %v940 = vsel %vm882, %v869, 0.0
        %941 = vadd.xlane.f32.xlu0 %v940
        %v942 = vpop.xlane.xlu0 %941
        %v943 = vsel %vm882, %v870, 0.0
        %944 = vadd.xlane.f32.xlu0 %v943
        %v945 = vpop.xlane.xlu0 %944
        %v946 = vsel %vm882, %v871, 0.0
        %947 = vadd.xlane.f32.xlu0 %v946
        %v948 = vpop.xlane.xlu0 %947
        %v949 = vsel %vm882, %v872, 0.0
        %950 = vadd.xlane.f32.xlu0 %v949
        %v951 = vpop.xlane.xlu0 %950
        %v952 = vsel %vm882, %v873, 0.0
        %953 = vadd.xlane.f32.xlu0 %v952
        %v954 = vpop.xlane.xlu0 %953
        %v955 = vsel %vm882, %v874, 0.0
        %956 = vadd.xlane.f32.xlu0 %v955
        %v957 = vpop.xlane.xlu0 %956
        %v958 = vsel %vm882, %v875, 0.0
        %959 = vadd.xlane.f32.xlu0 %v958
        %v960 = vpop.xlane.xlu0 %959
        %v961 = vsel %vm882, %v876, 0.0
        %962 = vadd.xlane.f32.xlu0 %v961
        %v963 = vpop.xlane.xlu0 %962
        %v964 = vsel %vm882, %v877, 0.0
        %965 = vadd.xlane.f32.xlu0 %v964
        %v966 = vpop.xlane.xlu0 %965
        %v967 = vsel %vm882, %v878, 0.0
        %968 = vadd.xlane.f32.xlu0 %v967
        %v969 = vpop.xlane.xlu0 %968
        %v970 = vsel %vm882, %v879, 0.0
        %971 = vadd.xlane.f32.xlu0 %v970
        %v972 = vpop.xlane.xlu0 %971
        %v973 = vsel %vm882, %v880, 0.0
        %974 = vadd.xlane.f32.xlu0 %v973
        %v975 = vpop.xlane.xlu0 %974
        %v976 = vsel %vm882, %v881, 0.0
        %977 = vadd.xlane.f32.xlu0 %v976
        %v978 = vpop.xlane.xlu0 %977
        %v979 = vlaneseq
        %v980 = vshrl.u32 %v979, 7
        %vm981 = vcmp.eq.s32.totalorder %v980, 0
        %v982 = vadd.f32 %v885, 1e-08
        %v983 = vadd.f32 %v888, 1e-08
        %v984 = vadd.f32 %v891, 1e-08
        %v985 = vadd.f32 %v894, 1e-08
        %v986 = vadd.f32 %v897, 1e-08
        %v987 = vadd.f32 %v900, 1e-08
        %v988 = vadd.f32 %v903, 1e-08
        %v989 = vadd.f32 %v906, 1e-08
        %v990 = vadd.f32 %v909, 1e-08
        %v991 = vadd.f32 %v912, 1e-08
        %v992 = vadd.f32 %v915, 1e-08
        %v993 = vadd.f32 %v918, 1e-08
        %v994 = vadd.f32 %v921, 1e-08
        %v995 = vadd.f32 %v924, 1e-08
        %v996 = vadd.f32 %v927, 1e-08
        %v997 = vadd.f32 %v930, 1e-08
        %v998 = vrcp.pop %v982
        %v999 = vmul.f32 %v885, %v998
        %v1000 = vrcp.pop %v983
        %v1001 = vmul.f32 %v888, %v1000
        %v1002 = vrcp.pop %v984
        %v1003 = vmul.f32 %v891, %v1002
        %v1004 = vrcp.pop %v985
        %v1005 = vmul.f32 %v894, %v1004
        %v1006 = vrcp.pop %v986
        %v1007 = vmul.f32 %v897, %v1006
        %v1008 = vrcp.pop %v987
        %v1009 = vmul.f32 %v900, %v1008
        %v1010 = vrcp.pop %v988
        %v1011 = vmul.f32 %v903, %v1010
        %v1012 = vrcp.pop %v989
        %v1013 = vmul.f32 %v906, %v1012
        %v1014 = vrcp.pop %v990
        %v1015 = vmul.f32 %v909, %v1014
        %v1016 = vrcp.pop %v991
        %v1017 = vmul.f32 %v912, %v1016
        %v1018 = vrcp.pop %v992
        %v1019 = vmul.f32 %v915, %v1018
        %v1020 = vrcp.pop %v993
        %v1021 = vmul.f32 %v918, %v1020
        %v1022 = vrcp.pop %v994
        %v1023 = vmul.f32 %v921, %v1022
        %v1024 = vrcp.pop %v995
        %v1025 = vmul.f32 %v924, %v1024
        %v1026 = vrcp.pop %v996
        %v1027 = vmul.f32 %v927, %v1026
        %v1028 = vrcp.pop %v997
        %v1029 = vmul.f32 %v930, %v1028
        %v1030 = vmul.f32 %v933, %v998
        %v1031 = vmul.f32 %v936, %v1000
        %v1032 = vmul.f32 %v939, %v1002
        %v1033 = vmul.f32 %v942, %v1004
        %v1034 = vmul.f32 %v945, %v1006
        %v1035 = vmul.f32 %v948, %v1008
        %v1036 = vmul.f32 %v951, %v1010
        %v1037 = vmul.f32 %v954, %v1012
        %v1038 = vmul.f32 %v957, %v1014
        %v1039 = vmul.f32 %v960, %v1016
        %v1040 = vmul.f32 %v963, %v1018
        %v1041 = vmul.f32 %v966, %v1020
        %v1042 = vmul.f32 %v969, %v1022
        %v1043 = vmul.f32 %v972, %v1024
        %v1044 = vmul.f32 %v975, %v1026
        %v1045 = vmul.f32 %v978, %v1028
        %v1078 = vlaneseq
        %v1079 = vshrl.u32 %v1078, 7
        %v1080 = vsub.s32 %v525, %v1079
        %v1081 = vrot.slane %v885, %v1080
        %v1082 = vadd.s32 %v525, 4294967288
        %v1083 = vlaneseq
        %v1084 = vshrl.u32 %v1083, 7
        %v1085 = vsub.s32 %v1082, %v1084
        %v1086 = vrot.slane %v888, %v1085
        %vm1087 = vcmask 130112
        %v1088 = vsel %vm1087, %v1086, %v1081
        %v1089 = vadd.s32 %v525, 4294967280
        %v1090 = vlaneseq
        %v1091 = vshrl.u32 %v1090, 7
        %v1092 = vsub.s32 %v1089, %v1091
        %v1093 = vrot.slane %v891, %v1092
        %vm1094 = vcmask 195712
        %v1095 = vsel %vm1094, %v1093, %v1088
        %v1096 = vadd.s32 %v525, 4294967272
        %v1097 = vlaneseq
        %v1098 = vshrl.u32 %v1097, 7
        %v1099 = vsub.s32 %v1096, %v1098
        %v1100 = vrot.slane %v894, %v1099
        %vm1101 = vcmask 261312
        %v1102 = vsel %vm1101, %v1100, %v1095
        %v1103 = vadd.s32 %v525, 4294967264
        %v1104 = vlaneseq
        %v1105 = vshrl.u32 %v1104, 7
        %v1106 = vsub.s32 %v1103, %v1105
        %v1107 = vrot.slane %v897, %v1106
        %vm1108 = vcmask 326912
        %v1109 = vsel %vm1108, %v1107, %v1102
        %v1110 = vadd.s32 %v525, 4294967256
        %v1111 = vlaneseq
        %v1112 = vshrl.u32 %v1111, 7
        %v1113 = vsub.s32 %v1110, %v1112
        %v1114 = vrot.slane %v900, %v1113
        %vm1115 = vcmask 392512
        %v1116 = vsel %vm1115, %v1114, %v1109
        %v1117 = vadd.s32 %v525, 4294967248
        %v1118 = vlaneseq
        %v1119 = vshrl.u32 %v1118, 7
        %v1120 = vsub.s32 %v1117, %v1119
        %v1121 = vrot.slane %v903, %v1120
        %vm1122 = vcmask 458112
        %v1123 = vsel %vm1122, %v1121, %v1116
        %v1124 = vadd.s32 %v525, 4294967240
        %v1125 = vlaneseq
        %v1126 = vshrl.u32 %v1125, 7
        %v1127 = vsub.s32 %v1124, %v1126
        %v1128 = vrot.slane %v906, %v1127
        %vm1129 = vcmask 523712
        %v1130 = vsel %vm1129, %v1128, %v1123
        %v1131 = vadd.s32 %v525, 4294967232
        %v1132 = vlaneseq
        %v1133 = vshrl.u32 %v1132, 7
        %v1134 = vsub.s32 %v1131, %v1133
        %v1135 = vrot.slane %v909, %v1134
        %vm1136 = vcmask 589312
        %v1137 = vsel %vm1136, %v1135, %v1130
        %v1138 = vadd.s32 %v525, 4294967224
        %v1139 = vlaneseq
        %v1140 = vshrl.u32 %v1139, 7
        %v1141 = vsub.s32 %v1138, %v1140
        %v1142 = vrot.slane %v912, %v1141
        %vm1143 = vcmask 654912
        %v1144 = vsel %vm1143, %v1142, %v1137
        %v1145 = vadd.s32 %v525, 4294967216
        %v1146 = vlaneseq
        %v1147 = vshrl.u32 %v1146, 7
        %v1148 = vsub.s32 %v1145, %v1147
        %v1149 = vrot.slane %v915, %v1148
        %vm1150 = vcmask 720512
        %v1151 = vsel %vm1150, %v1149, %v1144
        %v1152 = vadd.s32 %v525, 4294967208
        %v1153 = vlaneseq
        %v1154 = vshrl.u32 %v1153, 7
        %v1155 = vsub.s32 %v1152, %v1154
        %v1156 = vrot.slane %v918, %v1155
        %vm1157 = vcmask 786112
        %v1158 = vsel %vm1157, %v1156, %v1151
        %v1159 = vadd.s32 %v525, 4294967200
        %v1160 = vlaneseq
        %v1161 = vshrl.u32 %v1160, 7
        %v1162 = vsub.s32 %v1159, %v1161
        %v1163 = vrot.slane %v921, %v1162
        %vm1164 = vcmask 851712
        %v1165 = vsel %vm1164, %v1163, %v1158
        %v1166 = vadd.s32 %v525, 4294967192
        %v1167 = vlaneseq
        %v1168 = vshrl.u32 %v1167, 7
        %v1169 = vsub.s32 %v1166, %v1168
        %v1170 = vrot.slane %v924, %v1169
        %vm1171 = vcmask 917312
        %v1172 = vsel %vm1171, %v1170, %v1165
        %v1173 = vadd.s32 %v525, 4294967184
        %v1174 = vlaneseq
        %v1175 = vshrl.u32 %v1174, 7
        %v1176 = vsub.s32 %v1173, %v1175
        %v1177 = vrot.slane %v927, %v1176
        %vm1178 = vcmask 982912
        %v1179 = vsel %vm1178, %v1177, %v1172
        %v1180 = vadd.s32 %v525, 4294967176
        %v1181 = vlaneseq
        %v1182 = vshrl.u32 %v1181, 7
        %v1183 = vsub.s32 %v1180, %v1182
        %v1184 = vrot.slane %v930, %v1183
        %vm1185 = vcmask 1048512
        %v1186 = vsel %vm1185, %v1184, %v1179
        %v1187 = vlaneseq
        %v1188 = vshrl.u32 %v1187, 7
        %v1189 = vsub.s32 %v525, %v1188
        %v1190 = vrot.slane %v933, %v1189
        %v1191 = vlaneseq
        %v1192 = vshrl.u32 %v1191, 7
        %v1193 = vsub.s32 %v1082, %v1192
        %v1194 = vrot.slane %v936, %v1193
        %v1195 = vsel %vm1087, %v1194, %v1190
        %v1196 = vlaneseq
        %v1197 = vshrl.u32 %v1196, 7
        %v1198 = vsub.s32 %v1089, %v1197
        %v1199 = vrot.slane %v939, %v1198
        %v1200 = vsel %vm1094, %v1199, %v1195
        %v1201 = vlaneseq
        %v1202 = vshrl.u32 %v1201, 7
        %v1203 = vsub.s32 %v1096, %v1202
        %v1204 = vrot.slane %v942, %v1203
        %v1205 = vsel %vm1101, %v1204, %v1200
        %v1206 = vlaneseq
        %v1207 = vshrl.u32 %v1206, 7
        %v1208 = vsub.s32 %v1103, %v1207
        %v1209 = vrot.slane %v945, %v1208
        %v1210 = vsel %vm1108, %v1209, %v1205
        %v1211 = vlaneseq
        %v1212 = vshrl.u32 %v1211, 7
        %v1213 = vsub.s32 %v1110, %v1212
        %v1214 = vrot.slane %v948, %v1213
        %v1215 = vsel %vm1115, %v1214, %v1210
        %v1216 = vlaneseq
        %v1217 = vshrl.u32 %v1216, 7
        %v1218 = vsub.s32 %v1117, %v1217
        %v1219 = vrot.slane %v951, %v1218
        %v1220 = vsel %vm1122, %v1219, %v1215
        %v1221 = vlaneseq
        %v1222 = vshrl.u32 %v1221, 7
        %v1223 = vsub.s32 %v1124, %v1222
        %v1224 = vrot.slane %v954, %v1223
        %v1225 = vsel %vm1129, %v1224, %v1220
        %v1226 = vlaneseq
        %v1227 = vshrl.u32 %v1226, 7
        %v1228 = vsub.s32 %v1131, %v1227
        %v1229 = vrot.slane %v957, %v1228
        %v1230 = vsel %vm1136, %v1229, %v1225
        %v1231 = vlaneseq
        %v1232 = vshrl.u32 %v1231, 7
        %v1233 = vsub.s32 %v1138, %v1232
        %v1234 = vrot.slane %v960, %v1233
        %v1235 = vsel %vm1143, %v1234, %v1230
        %v1236 = vlaneseq
        %v1237 = vshrl.u32 %v1236, 7
        %v1238 = vsub.s32 %v1145, %v1237
        %v1239 = vrot.slane %v963, %v1238
        %v1240 = vsel %vm1150, %v1239, %v1235
        %v1241 = vlaneseq
        %v1242 = vshrl.u32 %v1241, 7
        %v1243 = vsub.s32 %v1152, %v1242
        %v1244 = vrot.slane %v966, %v1243
        %v1245 = vsel %vm1157, %v1244, %v1240
        %v1246 = vlaneseq
        %v1247 = vshrl.u32 %v1246, 7
        %v1248 = vsub.s32 %v1159, %v1247
        %v1249 = vrot.slane %v969, %v1248
        %v1250 = vsel %vm1164, %v1249, %v1245
        %v1251 = vlaneseq
        %v1252 = vshrl.u32 %v1251, 7
        %v1253 = vsub.s32 %v1166, %v1252
        %v1254 = vrot.slane %v972, %v1253
        %v1255 = vsel %vm1171, %v1254, %v1250
        %v1256 = vlaneseq
        %v1257 = vshrl.u32 %v1256, 7
        %v1258 = vsub.s32 %v1173, %v1257
        %v1259 = vrot.slane %v975, %v1258
        %v1260 = vsel %vm1178, %v1259, %v1255
        %v1261 = vlaneseq
        %v1262 = vshrl.u32 %v1261, 7
        %v1263 = vsub.s32 %v1180, %v1262
        %v1264 = vrot.slane %v978, %v1263
        %v1265 = vsel %vm1185, %v1264, %v1260
        %vm1266 = vcmask 1041409
        %v1267 = vsel %vm1266, %v1265, %v1186
        %v1301 = vlaneseq
        %v1302 = vshrl.u32 %v1301, 7
        %v1303 = vsub.s32 %v525, %v1302
        %v1304 = vrot.slane %v999, %v1303
        %v1305 = vlaneseq
        %v1306 = vshrl.u32 %v1305, 7
        %v1307 = vsub.s32 %v1082, %v1306
        %v1308 = vrot.slane %v1001, %v1307
        %v1309 = vsel %vm1087, %v1308, %v1304
        %v1310 = vlaneseq
        %v1311 = vshrl.u32 %v1310, 7
        %v1312 = vsub.s32 %v1089, %v1311
        %v1313 = vrot.slane %v1003, %v1312
        %v1314 = vsel %vm1094, %v1313, %v1309
        %v1315 = vlaneseq
        %v1316 = vshrl.u32 %v1315, 7
        %v1317 = vsub.s32 %v1096, %v1316
        %v1318 = vrot.slane %v1005, %v1317
        %v1319 = vsel %vm1101, %v1318, %v1314
        %v1320 = vlaneseq
        %v1321 = vshrl.u32 %v1320, 7
        %v1322 = vsub.s32 %v1103, %v1321
        %v1323 = vrot.slane %v1007, %v1322
        %v1324 = vsel %vm1108, %v1323, %v1319
        %v1325 = vlaneseq
        %v1326 = vshrl.u32 %v1325, 7
        %v1327 = vsub.s32 %v1110, %v1326
        %v1328 = vrot.slane %v1009, %v1327
        %v1329 = vsel %vm1115, %v1328, %v1324
        %v1330 = vlaneseq
        %v1331 = vshrl.u32 %v1330, 7
        %v1332 = vsub.s32 %v1117, %v1331
        %v1333 = vrot.slane %v1011, %v1332
        %v1334 = vsel %vm1122, %v1333, %v1329
        %v1335 = vlaneseq
        %v1336 = vshrl.u32 %v1335, 7
        %v1337 = vsub.s32 %v1124, %v1336
        %v1338 = vrot.slane %v1013, %v1337
        %v1339 = vsel %vm1129, %v1338, %v1334
        %v1340 = vlaneseq
        %v1341 = vshrl.u32 %v1340, 7
        %v1342 = vsub.s32 %v1131, %v1341
        %v1343 = vrot.slane %v1015, %v1342
        %v1344 = vsel %vm1136, %v1343, %v1339
        %v1345 = vlaneseq
        %v1346 = vshrl.u32 %v1345, 7
        %v1347 = vsub.s32 %v1138, %v1346
        %v1348 = vrot.slane %v1017, %v1347
        %v1349 = vsel %vm1143, %v1348, %v1344
        %v1350 = vlaneseq
        %v1351 = vshrl.u32 %v1350, 7
        %v1352 = vsub.s32 %v1145, %v1351
        %v1353 = vrot.slane %v1019, %v1352
        %v1354 = vsel %vm1150, %v1353, %v1349
        %v1355 = vlaneseq
        %v1356 = vshrl.u32 %v1355, 7
        %v1357 = vsub.s32 %v1152, %v1356
        %v1358 = vrot.slane %v1021, %v1357
        %v1359 = vsel %vm1157, %v1358, %v1354
        %v1360 = vlaneseq
        %v1361 = vshrl.u32 %v1360, 7
        %v1362 = vsub.s32 %v1159, %v1361
        %v1363 = vrot.slane %v1023, %v1362
        %v1364 = vsel %vm1164, %v1363, %v1359
        %v1365 = vlaneseq
        %v1366 = vshrl.u32 %v1365, 7
        %v1367 = vsub.s32 %v1166, %v1366
        %v1368 = vrot.slane %v1025, %v1367
        %v1369 = vsel %vm1171, %v1368, %v1364
        %v1370 = vlaneseq
        %v1371 = vshrl.u32 %v1370, 7
        %v1372 = vsub.s32 %v1173, %v1371
        %v1373 = vrot.slane %v1027, %v1372
        %v1374 = vsel %vm1178, %v1373, %v1369
        %v1375 = vlaneseq
        %v1376 = vshrl.u32 %v1375, 7
        %v1377 = vsub.s32 %v1180, %v1376
        %v1378 = vrot.slane %v1029, %v1377
        %v1379 = vsel %vm1185, %v1378, %v1374
        %v1380 = vlaneseq
        %v1381 = vshrl.u32 %v1380, 7
        %v1382 = vsub.s32 %v525, %v1381
        %v1383 = vrot.slane %v1030, %v1382
        %v1384 = vlaneseq
        %v1385 = vshrl.u32 %v1384, 7
        %v1386 = vsub.s32 %v1082, %v1385
        %v1387 = vrot.slane %v1031, %v1386
        %v1388 = vsel %vm1087, %v1387, %v1383
        %v1389 = vlaneseq
        %v1390 = vshrl.u32 %v1389, 7
        %v1391 = vsub.s32 %v1089, %v1390
        %v1392 = vrot.slane %v1032, %v1391
        %v1393 = vsel %vm1094, %v1392, %v1388
        %v1394 = vlaneseq
        %v1395 = vshrl.u32 %v1394, 7
        %v1396 = vsub.s32 %v1096, %v1395
        %v1397 = vrot.slane %v1033, %v1396
        %v1398 = vsel %vm1101, %v1397, %v1393
        %v1399 = vlaneseq
        %v1400 = vshrl.u32 %v1399, 7
        %v1401 = vsub.s32 %v1103, %v1400
        %v1402 = vrot.slane %v1034, %v1401
        %v1403 = vsel %vm1108, %v1402, %v1398
        %v1404 = vlaneseq
        %v1405 = vshrl.u32 %v1404, 7
        %v1406 = vsub.s32 %v1110, %v1405
        %v1407 = vrot.slane %v1035, %v1406
        %v1408 = vsel %vm1115, %v1407, %v1403
        %v1409 = vlaneseq
        %v1410 = vshrl.u32 %v1409, 7
        %v1411 = vsub.s32 %v1117, %v1410
        %v1412 = vrot.slane %v1036, %v1411
        %v1413 = vsel %vm1122, %v1412, %v1408
        %v1414 = vlaneseq
        %v1415 = vshrl.u32 %v1414, 7
        %v1416 = vsub.s32 %v1124, %v1415
        %v1417 = vrot.slane %v1037, %v1416
        %v1418 = vsel %vm1129, %v1417, %v1413
        %v1419 = vlaneseq
        %v1420 = vshrl.u32 %v1419, 7
        %v1421 = vsub.s32 %v1131, %v1420
        %v1422 = vrot.slane %v1038, %v1421
        %v1423 = vsel %vm1136, %v1422, %v1418
        %v1424 = vlaneseq
        %v1425 = vshrl.u32 %v1424, 7
        %v1426 = vsub.s32 %v1138, %v1425
        %v1427 = vrot.slane %v1039, %v1426
        %v1428 = vsel %vm1143, %v1427, %v1423
        %v1429 = vlaneseq
        %v1430 = vshrl.u32 %v1429, 7
        %v1431 = vsub.s32 %v1145, %v1430
        %v1432 = vrot.slane %v1040, %v1431
        %v1433 = vsel %vm1150, %v1432, %v1428
        %v1434 = vlaneseq
        %v1435 = vshrl.u32 %v1434, 7
        %v1436 = vsub.s32 %v1152, %v1435
        %v1437 = vrot.slane %v1041, %v1436
        %v1438 = vsel %vm1157, %v1437, %v1433
        %v1439 = vlaneseq
        %v1440 = vshrl.u32 %v1439, 7
        %v1441 = vsub.s32 %v1159, %v1440
        %v1442 = vrot.slane %v1042, %v1441
        %v1443 = vsel %vm1164, %v1442, %v1438
        %v1444 = vlaneseq
        %v1445 = vshrl.u32 %v1444, 7
        %v1446 = vsub.s32 %v1166, %v1445
        %v1447 = vrot.slane %v1043, %v1446
        %v1448 = vsel %vm1171, %v1447, %v1443
        %v1449 = vlaneseq
        %v1450 = vshrl.u32 %v1449, 7
        %v1451 = vsub.s32 %v1173, %v1450
        %v1452 = vrot.slane %v1044, %v1451
        %v1453 = vsel %vm1178, %v1452, %v1448
        %v1454 = vlaneseq
        %v1455 = vshrl.u32 %v1454, 7
        %v1456 = vsub.s32 %v1180, %v1455
        %v1457 = vrot.slane %v1045, %v1456
        %v1458 = vsel %vm1185, %v1457, %v1453
        %v1459 = vsel %vm1266, %v1458, %v1379
        %v1461 = vsel %vm981, %v1267, %v1459
        %v1462 = vld [vmem:[%s6] sm:$0xff]
        %v1463 = vld [vmem:[%s7] sm:$0xff]
        %1465 = vset.pattern.permute.xlu0 0
        %1466 = vperm.xlu0 %1465, %v1463
        %v1467 = vpop.permute.xlu0 %1466
        %vm1469 = vcmask 15360
        %v1471 = vsel %vm1469, %v1462, 0
        %vm1473 = vcmask 1041408
        %v1475 = vsel %vm1473, %v1461, 0
        %1477 = vmatprep.subr.mxu0 0.0
        %1478 = vmatpush1.msra.mxu0 %v1475
        %1479 = vmatprep.subr.mxu0 0.0
        %1480 = vmatpush1.msra.mxu0 0.0
        %1481 = vmatprep.subr.mxu0 0.0
        %1482 = vmatpush1.msra.mxu0 0.0
        %1483 = vmatprep.subr.mxu0 0.0
        %1484 = vmatpush1.msra.mxu0 0.0
        %1485 = vmatprep.subr.mxu0 0.0
        %1486 = vmatpush1.msra.mxu0 0.0
        %1487 = vmatprep.subr.mxu0 0.0
        %1488 = vmatpush1.msra.mxu0 0.0
        %1489 = vmatprep.subr.mxu0 0.0
        %1490 = vmatpush1.msra.mxu0 0.0
        %1491 = vmatprep.subr.mxu0 0.0
        %1492 = vmatpush1.msra.mxu0 0.0
        %1493 = vmatprep.subr.mxu0 0.0
        %1494 = vmatpush1.msra.mxu0 0.0
        %1495 = vmatprep.subr.mxu0 0.0
        %1496 = vmatpush1.msra.mxu0 0.0
        %1497 = vmatprep.subr.mxu0 0.0
        %1498 = vmatpush1.msra.mxu0 0.0
        %1499 = vmatprep.subr.mxu0 0.0
        %1500 = vmatpush1.msra.mxu0 0.0
        %1501 = vmatprep.subr.mxu0 0.0
        %1502 = vmatpush1.msra.mxu0 0.0
        %1503 = vmatprep.subr.mxu0 0.0
        %1504 = vmatpush1.msra.mxu0 0.0
        %1505 = vmatprep.subr.mxu0 0.0
        %1506 = vmatpush1.msra.mxu0 0.0
        %1507 = vmatprep.subr.mxu0 0.0
        %1508 = vmatpush1.msra.mxu0 0.0
        %1509 = vmatprep.subr.mxu0 0.0
        %1510 = vmatpush1.msra.mxu0 0.0
        %1511 = vmatprep.subr.mxu0 0.0
        %1512 = vmatpush1.msra.mxu0 0.0
        %1513 = vmatprep.subr.mxu0 0.0
        %1514 = vmatpush1.msra.mxu0 0.0
        %1515 = vmatprep.subr.mxu0 0.0
        %1516 = vmatpush1.msra.mxu0 0.0
        %1517 = vmatprep.subr.mxu0 0.0
        %1518 = vmatpush1.msra.mxu0 0.0
        %1519 = vmatprep.subr.mxu0 0.0
        %1520 = vmatpush1.msra.mxu0 0.0
        %1521 = vmatprep.subr.mxu0 0.0
        %1522 = vmatpush1.msra.mxu0 0.0
        %1523 = vmatprep.subr.mxu0 0.0
        %1524 = vmatpush1.msra.mxu0 0.0
        %1525 = vmatprep.subr.mxu0 0.0
        %1526 = vmatpush1.msra.mxu0 0.0
        %1527 = vmatprep.subr.mxu0 0.0
        %1528 = vmatpush1.msra.mxu0 0.0
        %1529 = vmatprep.subr.mxu0 0.0
        %1530 = vmatpush1.msra.mxu0 0.0
        %1531 = vmatprep.subr.mxu0 0.0
        %1532 = vmatpush1.msra.mxu0 0.0
        %1533 = vmatprep.subr.mxu0 0.0
        %1534 = vmatpush1.msra.mxu0 0.0
        %1535 = vmatprep.subr.mxu0 0.0
        %1536 = vmatpush1.msra.mxu0 0.0
        %1537 = vmatprep.subr.mxu0 0.0
        %1538 = vmatpush1.msra.mxu0 0.0
        %1539 = vmatprep.subr.mxu0 0.0
        %1540 = vmatpush1.msra.mxu0 0.0
        %1541 = vmatprep.mubr.f32.mxu0 0.0
        %1542 = vmatmul.mubr.f32.gmra.mrb[0].mxu0 %v1471
        %v1543 = vpop.f32.mrb[0].mxu0
        %v1544 = vadd.f32 %v1467, %v1543
        %v1545 = vpop.f32.mrb[0].mxu0
        %1546 = vdwg.mxu0
        %v1547 = vxor.u32 %v1544, 2147483648
        %v1548 = vmul.f32 %v1547, 1.442695
        %v1549 = vpow.pop %v1548
        %v1550 = vadd.f32 %v1549, 1.0
        %v1551 = vrcp.pop %v1550
        %v1552 = vmul.f32 1.0, %v1551
        %v1553 = vmul.f32 %v1552, %v528
        %1554 = vrot.lane.b32.xlu0 %v1553, 2
        %v1555 = vpop.permute.xlu0 %1554
        %v1556 = vld [vmem:[%s8] sm:$0xff]
        %v1557 = vld [vmem:[%s8 + $0x8] sm:$0xff]
        %1558 = vrot.lane.b32.xlu0 %v1553, 1
        %v1559 = vpop.permute.xlu0 %1558
        %s1560 = scalar_lea.vmem %s8, 16
        %v1561 = vld [vmem:[%s1560] sm:$0xff]
        %v1562 = vld [vmem:[%s1560 + $0x8] sm:$0xff]
        %v1564 = vsel %vm882, %v1561, 0
        %v1567 = vsel %vm882, %v1562, 0
        %1569 = vmatprep.subr.mxu0 0.0
        %1570 = vmatpush1.msra.mxu0 %v1559
        %1571 = vmatprep.subr.mxu0 0.0
        %1572 = vmatpush1.msra.mxu0 0.0
        %1573 = vmatprep.subr.mxu0 0.0
        %1574 = vmatpush1.msra.mxu0 0.0
        %1575 = vmatprep.subr.mxu0 0.0
        %1576 = vmatpush1.msra.mxu0 0.0
        %1577 = vmatprep.subr.mxu0 0.0
        %1578 = vmatpush1.msra.mxu0 0.0
        %1579 = vmatprep.subr.mxu0 0.0
        %1580 = vmatpush1.msra.mxu0 0.0
        %1581 = vmatprep.subr.mxu0 0.0
        %1582 = vmatpush1.msra.mxu0 0.0
        %1583 = vmatprep.subr.mxu0 0.0
        %1584 = vmatpush1.msra.mxu0 0.0
        %1585 = vmatprep.subr.mxu0 0.0
        %1586 = vmatpush1.msra.mxu0 0.0
        %1587 = vmatprep.subr.mxu0 0.0
        %1588 = vmatpush1.msra.mxu0 0.0
        %1589 = vmatprep.subr.mxu0 0.0
        %1590 = vmatpush1.msra.mxu0 0.0
        %1591 = vmatprep.subr.mxu0 0.0
        %1592 = vmatpush1.msra.mxu0 0.0
        %1593 = vmatprep.subr.mxu0 0.0
        %1594 = vmatpush1.msra.mxu0 0.0
        %1595 = vmatprep.subr.mxu0 0.0
        %1596 = vmatpush1.msra.mxu0 0.0
        %1597 = vmatprep.subr.mxu0 0.0
        %1598 = vmatpush1.msra.mxu0 0.0
        %1599 = vmatprep.subr.mxu0 0.0
        %1600 = vmatpush1.msra.mxu0 0.0
        %1601 = vmatprep.subr.mxu0 0.0
        %1602 = vmatpush1.msra.mxu0 0.0
        %1603 = vmatprep.subr.mxu0 0.0
        %1604 = vmatpush1.msra.mxu0 0.0
        %1605 = vmatprep.subr.mxu0 0.0
        %1606 = vmatpush1.msra.mxu0 0.0
        %1607 = vmatprep.subr.mxu0 0.0
        %1608 = vmatpush1.msra.mxu0 0.0
        %1609 = vmatprep.subr.mxu0 0.0
        %1610 = vmatpush1.msra.mxu0 0.0
        %1611 = vmatprep.subr.mxu0 0.0
        %1612 = vmatpush1.msra.mxu0 0.0
        %1613 = vmatprep.subr.mxu0 0.0
        %1614 = vmatpush1.msra.mxu0 0.0
        %1615 = vmatprep.subr.mxu0 0.0
        %1616 = vmatpush1.msra.mxu0 0.0
        %1617 = vmatprep.subr.mxu0 0.0
        %1618 = vmatpush1.msra.mxu0 0.0
        %1619 = vmatprep.subr.mxu0 0.0
        %1620 = vmatpush1.msra.mxu0 0.0
        %1621 = vmatprep.subr.mxu0 0.0
        %1622 = vmatpush1.msra.mxu0 0.0
        %1623 = vmatprep.subr.mxu0 0.0
        %1624 = vmatpush1.msra.mxu0 0.0
        %1625 = vmatprep.subr.mxu0 0.0
        %1626 = vmatpush1.msra.mxu0 0.0
        %1627 = vmatprep.subr.mxu0 0.0
        %1628 = vmatpush1.msra.mxu0 0.0
        %1629 = vmatprep.subr.mxu0 0.0
        %1630 = vmatpush1.msra.mxu0 0.0
        %1631 = vmatprep.subr.mxu0 0.0
        %1632 = vmatpush1.msra.mxu0 0.0
        %1633 = vmatprep.mubr.f32.mxu0 0.0
        %1634 = vmatmul.mubr.f32.gmra.mrb[0].mxu0 %v1564
        %v1635 = vpop.f32.mrb[0].mxu0
        %v1636 = vadd.f32 0.0, %v1635
        %v1637 = vpop.f32.mrb[0].mxu0
        %1638 = vmatprep.mubr.f32.mxu0 0.0
        %1639 = vmatmul.mubr.f32.gmra.mrb[0].mxu0 %v1567
        %v1640 = vpop.f32.mrb[0].mxu0
        %v1641 = vadd.f32 0.0, %v1640
        %v1642 = vpop.f32.mrb[0].mxu0
        %1643 = vdwg.mxu0
        %v1645 = vsel %vm882, %v1556, 0
        %v1648 = vsel %vm882, %v1557, 0
        %1650 = vmatprep.subr.mxu0 0.0
        %1651 = vmatpush1.msra.mxu0 %v1555
        %1652 = vmatprep.subr.mxu0 0.0
        %1653 = vmatpush1.msra.mxu0 0.0
        %1654 = vmatprep.subr.mxu0 0.0
        %1655 = vmatpush1.msra.mxu0 0.0
        %1656 = vmatprep.subr.mxu0 0.0
        %1657 = vmatpush1.msra.mxu0 0.0
        %1658 = vmatprep.subr.mxu0 0.0
        %1659 = vmatpush1.msra.mxu0 0.0
        %1660 = vmatprep.subr.mxu0 0.0
        %1661 = vmatpush1.msra.mxu0 0.0
        %1662 = vmatprep.subr.mxu0 0.0
        %1663 = vmatpush1.msra.mxu0 0.0
        %1664 = vmatprep.subr.mxu0 0.0
        %1665 = vmatpush1.msra.mxu0 0.0
        %1666 = vmatprep.subr.mxu0 0.0
        %1667 = vmatpush1.msra.mxu0 0.0
        %1668 = vmatprep.subr.mxu0 0.0
        %1669 = vmatpush1.msra.mxu0 0.0
        %1670 = vmatprep.subr.mxu0 0.0
        %1671 = vmatpush1.msra.mxu0 0.0
        %1672 = vmatprep.subr.mxu0 0.0
        %1673 = vmatpush1.msra.mxu0 0.0
        %1674 = vmatprep.subr.mxu0 0.0
        %1675 = vmatpush1.msra.mxu0 0.0
        %1676 = vmatprep.subr.mxu0 0.0
        %1677 = vmatpush1.msra.mxu0 0.0
        %1678 = vmatprep.subr.mxu0 0.0
        %1679 = vmatpush1.msra.mxu0 0.0
        %1680 = vmatprep.subr.mxu0 0.0
        %1681 = vmatpush1.msra.mxu0 0.0
        %1682 = vmatprep.subr.mxu0 0.0
        %1683 = vmatpush1.msra.mxu0 0.0
        %1684 = vmatprep.subr.mxu0 0.0
        %1685 = vmatpush1.msra.mxu0 0.0
        %1686 = vmatprep.subr.mxu0 0.0
        %1687 = vmatpush1.msra.mxu0 0.0
        %1688 = vmatprep.subr.mxu0 0.0
        %1689 = vmatpush1.msra.mxu0 0.0
        %1690 = vmatprep.subr.mxu0 0.0
        %1691 = vmatpush1.msra.mxu0 0.0
        %1692 = vmatprep.subr.mxu0 0.0
        %1693 = vmatpush1.msra.mxu0 0.0
        %1694 = vmatprep.subr.mxu0 0.0
        %1695 = vmatpush1.msra.mxu0 0.0
        %1696 = vmatprep.subr.mxu0 0.0
        %1697 = vmatpush1.msra.mxu0 0.0
        %1698 = vmatprep.subr.mxu0 0.0
        %1699 = vmatpush1.msra.mxu0 0.0
        %1700 = vmatprep.subr.mxu0 0.0
        %1701 = vmatpush1.msra.mxu0 0.0
        %1702 = vmatprep.subr.mxu0 0.0
        %1703 = vmatpush1.msra.mxu0 0.0
        %1704 = vmatprep.subr.mxu0 0.0
        %1705 = vmatpush1.msra.mxu0 0.0
        %1706 = vmatprep.subr.mxu0 0.0
        %1707 = vmatpush1.msra.mxu0 0.0
        %1708 = vmatprep.subr.mxu0 0.0
        %1709 = vmatpush1.msra.mxu0 0.0
        %1710 = vmatprep.subr.mxu0 0.0
        %1711 = vmatpush1.msra.mxu0 0.0
        %1712 = vmatprep.subr.mxu0 0.0
        %1713 = vmatpush1.msra.mxu0 0.0
        %1714 = vmatprep.mubr.f32.mxu0 0.0
        %1715 = vmatmul.mubr.f32.gmra.mrb[0].mxu0 %v1645
        %v1716 = vpop.f32.mrb[0].mxu0
        %v1717 = vadd.f32 %v1636, %v1716
        %v1718 = vpop.f32.mrb[0].mxu0
        %1719 = vmatprep.mubr.f32.mxu0 0.0
        %1720 = vmatmul.mubr.f32.gmra.mrb[0].mxu0 %v1648
        %v1721 = vpop.f32.mrb[0].mxu0
        %v1722 = vadd.f32 %v1641, %v1721
        %v1723 = vpop.f32.mrb[0].mxu0
        %1724 = vdwg.mxu0
        %s1725 = scalar_lea.vmem %s8, 32
        %v1726 = vld [vmem:[%s1725] sm:$0xff]
        %v1727 = vld [vmem:[%s1725 + $0x8] sm:$0xff]
        %v1729 = vsel %vm882, %v1726, 0
        %v1732 = vsel %vm882, %v1727, 0
        %1734 = vmatprep.subr.mxu0 0.0
        %1735 = vmatpush1.msra.mxu0 %v1553
        %1736 = vmatprep.subr.mxu0 0.0
        %1737 = vmatpush1.msra.mxu0 0.0
        %1738 = vmatprep.subr.mxu0 0.0
        %1739 = vmatpush1.msra.mxu0 0.0
        %1740 = vmatprep.subr.mxu0 0.0
        %1741 = vmatpush1.msra.mxu0 0.0
        %1742 = vmatprep.subr.mxu0 0.0
        %1743 = vmatpush1.msra.mxu0 0.0
        %1744 = vmatprep.subr.mxu0 0.0
        %1745 = vmatpush1.msra.mxu0 0.0
        %1746 = vmatprep.subr.mxu0 0.0
        %1747 = vmatpush1.msra.mxu0 0.0
        %1748 = vmatprep.subr.mxu0 0.0
        %1749 = vmatpush1.msra.mxu0 0.0
        %1750 = vmatprep.subr.mxu0 0.0
        %1751 = vmatpush1.msra.mxu0 0.0
        %1752 = vmatprep.subr.mxu0 0.0
        %1753 = vmatpush1.msra.mxu0 0.0
        %1754 = vmatprep.subr.mxu0 0.0
        %1755 = vmatpush1.msra.mxu0 0.0
        %1756 = vmatprep.subr.mxu0 0.0
        %1757 = vmatpush1.msra.mxu0 0.0
        %1758 = vmatprep.subr.mxu0 0.0
        %1759 = vmatpush1.msra.mxu0 0.0
        %1760 = vmatprep.subr.mxu0 0.0
        %1761 = vmatpush1.msra.mxu0 0.0
        %1762 = vmatprep.subr.mxu0 0.0
        %1763 = vmatpush1.msra.mxu0 0.0
        %1764 = vmatprep.subr.mxu0 0.0
        %1765 = vmatpush1.msra.mxu0 0.0
        %1766 = vmatprep.subr.mxu0 0.0
        %1767 = vmatpush1.msra.mxu0 0.0
        %1768 = vmatprep.subr.mxu0 0.0
        %1769 = vmatpush1.msra.mxu0 0.0
        %1770 = vmatprep.subr.mxu0 0.0
        %1771 = vmatpush1.msra.mxu0 0.0
        %1772 = vmatprep.subr.mxu0 0.0
        %1773 = vmatpush1.msra.mxu0 0.0
        %1774 = vmatprep.subr.mxu0 0.0
        %1775 = vmatpush1.msra.mxu0 0.0
        %1776 = vmatprep.subr.mxu0 0.0
        %1777 = vmatpush1.msra.mxu0 0.0
        %1778 = vmatprep.subr.mxu0 0.0
        %1779 = vmatpush1.msra.mxu0 0.0
        %1780 = vmatprep.subr.mxu0 0.0
        %1781 = vmatpush1.msra.mxu0 0.0
        %1782 = vmatprep.subr.mxu0 0.0
        %1783 = vmatpush1.msra.mxu0 0.0
        %1784 = vmatprep.subr.mxu0 0.0
        %1785 = vmatpush1.msra.mxu0 0.0
        %1786 = vmatprep.subr.mxu0 0.0
        %1787 = vmatpush1.msra.mxu0 0.0
        %1788 = vmatprep.subr.mxu0 0.0
        %1789 = vmatpush1.msra.mxu0 0.0
        %1790 = vmatprep.subr.mxu0 0.0
        %1791 = vmatpush1.msra.mxu0 0.0
        %1792 = vmatprep.subr.mxu0 0.0
        %1793 = vmatpush1.msra.mxu0 0.0
        %1794 = vmatprep.subr.mxu0 0.0
        %1795 = vmatpush1.msra.mxu0 0.0
        %1796 = vmatprep.subr.mxu0 0.0
        %1797 = vmatpush1.msra.mxu0 0.0
        %1798 = vmatprep.mubr.f32.mxu0 0.0
        %1799 = vmatmul.mubr.f32.gmra.mrb[0].mxu0 %v1729
        %v1800 = vpop.f32.mrb[0].mxu0
        %v1801 = vadd.f32 0.0, %v1800
        %v1802 = vpop.f32.mrb[0].mxu0
        %1803 = vmatprep.mubr.f32.mxu0 0.0
        %1804 = vmatmul.mubr.f32.gmra.mrb[0].mxu0 %v1732
        %v1805 = vpop.f32.mrb[0].mxu0
        %v1806 = vadd.f32 0.0, %v1805
        %v1807 = vpop.f32.mrb[0].mxu0
        %1808 = vdwg.mxu0
        %v1809 = vadd.f32 %v1717, %v1801
        %v1810 = vadd.f32 %v1722, %v1806
        %1811 = vrot.lane.b32.xlu0 %v1553, 127
        %v1812 = vpop.permute.xlu0 %1811
        %s1813 = scalar_lea.vmem %s8, 48
        %v1814 = vld [vmem:[%s1813] sm:$0xff]
        %v1815 = vld [vmem:[%s1813 + $0x8] sm:$0xff]
        %v1817 = vsel %vm882, %v1814, 0
        %v1820 = vsel %vm882, %v1815, 0
        %1822 = vmatprep.subr.mxu0 0.0
        %1823 = vmatpush1.msra.mxu0 %v1812
        %1824 = vmatprep.subr.mxu0 0.0
        %1825 = vmatpush1.msra.mxu0 0.0
        %1826 = vmatprep.subr.mxu0 0.0
        %1827 = vmatpush1.msra.mxu0 0.0
        %1828 = vmatprep.subr.mxu0 0.0
        %1829 = vmatpush1.msra.mxu0 0.0
        %1830 = vmatprep.subr.mxu0 0.0
        %1831 = vmatpush1.msra.mxu0 0.0
        %1832 = vmatprep.subr.mxu0 0.0
        %1833 = vmatpush1.msra.mxu0 0.0
        %1834 = vmatprep.subr.mxu0 0.0
        %1835 = vmatpush1.msra.mxu0 0.0
        %1836 = vmatprep.subr.mxu0 0.0
        %1837 = vmatpush1.msra.mxu0 0.0
        %1838 = vmatprep.subr.mxu0 0.0
        %1839 = vmatpush1.msra.mxu0 0.0
        %1840 = vmatprep.subr.mxu0 0.0
        %1841 = vmatpush1.msra.mxu0 0.0
        %1842 = vmatprep.subr.mxu0 0.0
        %1843 = vmatpush1.msra.mxu0 0.0
        %1844 = vmatprep.subr.mxu0 0.0
        %1845 = vmatpush1.msra.mxu0 0.0
        %1846 = vmatprep.subr.mxu0 0.0
        %1847 = vmatpush1.msra.mxu0 0.0
        %1848 = vmatprep.subr.mxu0 0.0
        %1849 = vmatpush1.msra.mxu0 0.0
        %1850 = vmatprep.subr.mxu0 0.0
        %1851 = vmatpush1.msra.mxu0 0.0
        %1852 = vmatprep.subr.mxu0 0.0
        %1853 = vmatpush1.msra.mxu0 0.0
        %1854 = vmatprep.subr.mxu0 0.0
        %1855 = vmatpush1.msra.mxu0 0.0
        %1856 = vmatprep.subr.mxu0 0.0
        %1857 = vmatpush1.msra.mxu0 0.0
        %1858 = vmatprep.subr.mxu0 0.0
        %1859 = vmatpush1.msra.mxu0 0.0
        %1860 = vmatprep.subr.mxu0 0.0
        %1861 = vmatpush1.msra.mxu0 0.0
        %1862 = vmatprep.subr.mxu0 0.0
        %1863 = vmatpush1.msra.mxu0 0.0
        %1864 = vmatprep.subr.mxu0 0.0
        %1865 = vmatpush1.msra.mxu0 0.0
        %1866 = vmatprep.subr.mxu0 0.0
        %1867 = vmatpush1.msra.mxu0 0.0
        %1868 = vmatprep.subr.mxu0 0.0
        %1869 = vmatpush1.msra.mxu0 0.0
        %1870 = vmatprep.subr.mxu0 0.0
        %1871 = vmatpush1.msra.mxu0 0.0
        %1872 = vmatprep.subr.mxu0 0.0
        %1873 = vmatpush1.msra.mxu0 0.0
        %1874 = vmatprep.subr.mxu0 0.0
        %1875 = vmatpush1.msra.mxu0 0.0
        %1876 = vmatprep.subr.mxu0 0.0
        %1877 = vmatpush1.msra.mxu0 0.0
        %1878 = vmatprep.subr.mxu0 0.0
        %1879 = vmatpush1.msra.mxu0 0.0
        %1880 = vmatprep.subr.mxu0 0.0
        %1881 = vmatpush1.msra.mxu0 0.0
        %1882 = vmatprep.subr.mxu0 0.0
        %1883 = vmatpush1.msra.mxu0 0.0
        %1884 = vmatprep.subr.mxu0 0.0
        %1885 = vmatpush1.msra.mxu0 0.0
        %1886 = vmatprep.mubr.f32.mxu0 0.0
        %1887 = vmatmul.mubr.f32.gmra.mrb[0].mxu0 %v1817
        %v1888 = vpop.f32.mrb[0].mxu0
        %v1889 = vadd.f32 0.0, %v1888
        %v1890 = vpop.f32.mrb[0].mxu0
        %1891 = vmatprep.mubr.f32.mxu0 0.0
        %1892 = vmatmul.mubr.f32.gmra.mrb[0].mxu0 %v1820
        %v1893 = vpop.f32.mrb[0].mxu0
        %v1894 = vadd.f32 0.0, %v1893
        %v1895 = vpop.f32.mrb[0].mxu0
        %1896 = vdwg.mxu0
        %v1897 = vadd.f32 %v1809, %v1889
        %v1898 = vadd.f32 %v1810, %v1894
        %1899 = vrot.lane.b32.xlu0 %v1553, 126
        %v1900 = vpop.permute.xlu0 %1899
        %s1901 = scalar_lea.vmem %s8, 64
        %v1902 = vld [vmem:[%s1901] sm:$0xff]
        %v1903 = vld [vmem:[%s1901 + $0x8] sm:$0xff]
        %v1905 = vsel %vm882, %v1902, 0
        %v1908 = vsel %vm882, %v1903, 0
        %1910 = vmatprep.subr.mxu0 0.0
        %1911 = vmatpush1.msra.mxu0 %v1900
        %1912 = vmatprep.subr.mxu0 0.0
        %1913 = vmatpush1.msra.mxu0 0.0
        %1914 = vmatprep.subr.mxu0 0.0
        %1915 = vmatpush1.msra.mxu0 0.0
        %1916 = vmatprep.subr.mxu0 0.0
        %1917 = vmatpush1.msra.mxu0 0.0
        %1918 = vmatprep.subr.mxu0 0.0
        %1919 = vmatpush1.msra.mxu0 0.0
        %1920 = vmatprep.subr.mxu0 0.0
        %1921 = vmatpush1.msra.mxu0 0.0
        %1922 = vmatprep.subr.mxu0 0.0
        %1923 = vmatpush1.msra.mxu0 0.0
        %1924 = vmatprep.subr.mxu0 0.0
        %1925 = vmatpush1.msra.mxu0 0.0
        %1926 = vmatprep.subr.mxu0 0.0
        %1927 = vmatpush1.msra.mxu0 0.0
        %1928 = vmatprep.subr.mxu0 0.0
        %1929 = vmatpush1.msra.mxu0 0.0
        %1930 = vmatprep.subr.mxu0 0.0
        %1931 = vmatpush1.msra.mxu0 0.0
        %1932 = vmatprep.subr.mxu0 0.0
        %1933 = vmatpush1.msra.mxu0 0.0
        %1934 = vmatprep.subr.mxu0 0.0
        %1935 = vmatpush1.msra.mxu0 0.0
        %1936 = vmatprep.subr.mxu0 0.0
        %1937 = vmatpush1.msra.mxu0 0.0
        %1938 = vmatprep.subr.mxu0 0.0
        %1939 = vmatpush1.msra.mxu0 0.0
        %1940 = vmatprep.subr.mxu0 0.0
        %1941 = vmatpush1.msra.mxu0 0.0
        %1942 = vmatprep.subr.mxu0 0.0
        %1943 = vmatpush1.msra.mxu0 0.0
        %1944 = vmatprep.subr.mxu0 0.0
        %1945 = vmatpush1.msra.mxu0 0.0
        %1946 = vmatprep.subr.mxu0 0.0
        %1947 = vmatpush1.msra.mxu0 0.0
        %1948 = vmatprep.subr.mxu0 0.0
        %1949 = vmatpush1.msra.mxu0 0.0
        %1950 = vmatprep.subr.mxu0 0.0
        %1951 = vmatpush1.msra.mxu0 0.0
        %1952 = vmatprep.subr.mxu0 0.0
        %1953 = vmatpush1.msra.mxu0 0.0
        %1954 = vmatprep.subr.mxu0 0.0
        %1955 = vmatpush1.msra.mxu0 0.0
        %1956 = vmatprep.subr.mxu0 0.0
        %1957 = vmatpush1.msra.mxu0 0.0
        %1958 = vmatprep.subr.mxu0 0.0
        %1959 = vmatpush1.msra.mxu0 0.0
        %1960 = vmatprep.subr.mxu0 0.0
        %1961 = vmatpush1.msra.mxu0 0.0
        %1962 = vmatprep.subr.mxu0 0.0
        %1963 = vmatpush1.msra.mxu0 0.0
        %1964 = vmatprep.subr.mxu0 0.0
        %1965 = vmatpush1.msra.mxu0 0.0
        %1966 = vmatprep.subr.mxu0 0.0
        %1967 = vmatpush1.msra.mxu0 0.0
        %1968 = vmatprep.subr.mxu0 0.0
        %1969 = vmatpush1.msra.mxu0 0.0
        %1970 = vmatprep.subr.mxu0 0.0
        %1971 = vmatpush1.msra.mxu0 0.0
        %1972 = vmatprep.subr.mxu0 0.0
        %1973 = vmatpush1.msra.mxu0 0.0
        %1974 = vmatprep.mubr.f32.mxu0 0.0
        %1975 = vmatmul.mubr.f32.gmra.mrb[0].mxu0 %v1905
        %v1976 = vpop.f32.mrb[0].mxu0
        %v1977 = vadd.f32 0.0, %v1976
        %v1978 = vpop.f32.mrb[0].mxu0
        %1979 = vmatprep.mubr.f32.mxu0 0.0
        %1980 = vmatmul.mubr.f32.gmra.mrb[0].mxu0 %v1908
        %v1981 = vpop.f32.mrb[0].mxu0
        %v1982 = vadd.f32 0.0, %v1981
        %v1983 = vpop.f32.mrb[0].mxu0
        %1984 = vdwg.mxu0
        %v1985 = vadd.f32 %v1897, %v1977
        %v1986 = vadd.f32 %v1898, %v1982
        %v1987 = vld [vmem:[%s9] sm:$0xff]
        %v1988 = vld [vmem:[%s9 + $0x8] sm:$0xff]
        %1990 = vset.pattern.permute.xlu0 0
        %1991 = vperm.xlu0 %1990, %v1987
        %v1992 = vpop.permute.xlu0 %1991
        %1995 = vset.pattern.permute.xlu0 0
        %1996 = vperm.xlu0 %1995, %v1988
        %v1997 = vpop.permute.xlu0 %1996
        %v1999 = vadd.f32 %v1985, %v1992
        %v2000 = vadd.f32 %v1986, %v1997
        %v2001 = vmax.f32 %v1999, 0.0
        %v2002 = vmax.f32 %v2000, 0.0
        %v2003 = vmul.f32 %v2001, %v528
        %v2004 = vmul.f32 %v2002, %v528
        %2005 = vrot.lane.b32.xlu0 %v2003, 2
        %v2006 = vpop.permute.xlu0 %2005
        %2007 = vrot.lane.b32.xlu0 %v2004, 2
        %v2008 = vpop.permute.xlu0 %2007
        %v2009 = vld [vmem:[%s10] sm:$0xff]
        %2010 = vrot.lane.b32.xlu0 %v2003, 1
        %v2011 = vpop.permute.xlu0 %2010
        %2012 = vrot.lane.b32.xlu0 %v2004, 1
        %v2013 = vpop.permute.xlu0 %2012
        %s2014 = scalar_lea.vmem %s10, 8
        %v2015 = vld [vmem:[%s2014] sm:$0xff]
        %vm2016 = vcmask 130048
        %v2018 = vsel %vm2016, %v2015, 0
        %2020 = vmatprep.subr.mxu0 0.0
        %2021 = vmatpush1.msra.mxu0 %v2011
        %2022 = vmatprep.subr.mxu0 0.0
        %2023 = vmatpush1.msra.mxu0 %v2013
        %2024 = vmatprep.subr.mxu0 0.0
        %2025 = vmatpush1.msra.mxu0 0.0
        %2026 = vmatprep.subr.mxu0 0.0
        %2027 = vmatpush1.msra.mxu0 0.0
        %2028 = vmatprep.subr.mxu0 0.0
        %2029 = vmatpush1.msra.mxu0 0.0
        %2030 = vmatprep.subr.mxu0 0.0
        %2031 = vmatpush1.msra.mxu0 0.0
        %2032 = vmatprep.subr.mxu0 0.0
        %2033 = vmatpush1.msra.mxu0 0.0
        %2034 = vmatprep.subr.mxu0 0.0
        %2035 = vmatpush1.msra.mxu0 0.0
        %2036 = vmatprep.subr.mxu0 0.0
        %2037 = vmatpush1.msra.mxu0 0.0
        %2038 = vmatprep.subr.mxu0 0.0
        %2039 = vmatpush1.msra.mxu0 0.0
        %2040 = vmatprep.subr.mxu0 0.0
        %2041 = vmatpush1.msra.mxu0 0.0
        %2042 = vmatprep.subr.mxu0 0.0
        %2043 = vmatpush1.msra.mxu0 0.0
        %2044 = vmatprep.subr.mxu0 0.0
        %2045 = vmatpush1.msra.mxu0 0.0
        %2046 = vmatprep.subr.mxu0 0.0
        %2047 = vmatpush1.msra.mxu0 0.0
        %2048 = vmatprep.subr.mxu0 0.0
        %2049 = vmatpush1.msra.mxu0 0.0
        %2050 = vmatprep.subr.mxu0 0.0
        %2051 = vmatpush1.msra.mxu0 0.0
        %2052 = vmatprep.subr.mxu0 0.0
        %2053 = vmatpush1.msra.mxu0 0.0
        %2054 = vmatprep.subr.mxu0 0.0
        %2055 = vmatpush1.msra.mxu0 0.0
        %2056 = vmatprep.subr.mxu0 0.0
        %2057 = vmatpush1.msra.mxu0 0.0
        %2058 = vmatprep.subr.mxu0 0.0
        %2059 = vmatpush1.msra.mxu0 0.0
        %2060 = vmatprep.subr.mxu0 0.0
        %2061 = vmatpush1.msra.mxu0 0.0
        %2062 = vmatprep.subr.mxu0 0.0
        %2063 = vmatpush1.msra.mxu0 0.0
        %2064 = vmatprep.subr.mxu0 0.0
        %2065 = vmatpush1.msra.mxu0 0.0
        %2066 = vmatprep.subr.mxu0 0.0
        %2067 = vmatpush1.msra.mxu0 0.0
        %2068 = vmatprep.subr.mxu0 0.0
        %2069 = vmatpush1.msra.mxu0 0.0
        %2070 = vmatprep.subr.mxu0 0.0
        %2071 = vmatpush1.msra.mxu0 0.0
        %2072 = vmatprep.subr.mxu0 0.0
        %2073 = vmatpush1.msra.mxu0 0.0
        %2074 = vmatprep.subr.mxu0 0.0
        %2075 = vmatpush1.msra.mxu0 0.0
        %2076 = vmatprep.subr.mxu0 0.0
        %2077 = vmatpush1.msra.mxu0 0.0
        %2078 = vmatprep.subr.mxu0 0.0
        %2079 = vmatpush1.msra.mxu0 0.0
        %2080 = vmatprep.subr.mxu0 0.0
        %2081 = vmatpush1.msra.mxu0 0.0
        %2082 = vmatprep.subr.mxu0 0.0
        %2083 = vmatpush1.msra.mxu0 0.0
        %2084 = vmatprep.mubr.f32.mxu0 0.0
        %2085 = vmatmul.mubr.f32.gmra.mrb[0].mxu0 %v2018
        %v2086 = vpop.f32.mrb[0].mxu0
        %v2087 = vadd.f32 0.0, %v2086
        %v2088 = vpop.f32.mrb[0].mxu0
        %2089 = vdwg.mxu0
        %v2091 = vsel %vm2016, %v2009, 0
        %2093 = vmatprep.subr.mxu0 0.0
        %2094 = vmatpush1.msra.mxu0 %v2006
        %2095 = vmatprep.subr.mxu0 0.0
        %2096 = vmatpush1.msra.mxu0 %v2008
        %2097 = vmatprep.subr.mxu0 0.0
        %2098 = vmatpush1.msra.mxu0 0.0
        %2099 = vmatprep.subr.mxu0 0.0
        %2100 = vmatpush1.msra.mxu0 0.0
        %2101 = vmatprep.subr.mxu0 0.0
        %2102 = vmatpush1.msra.mxu0 0.0
        %2103 = vmatprep.subr.mxu0 0.0
        %2104 = vmatpush1.msra.mxu0 0.0
        %2105 = vmatprep.subr.mxu0 0.0
        %2106 = vmatpush1.msra.mxu0 0.0
        %2107 = vmatprep.subr.mxu0 0.0
        %2108 = vmatpush1.msra.mxu0 0.0
        %2109 = vmatprep.subr.mxu0 0.0
        %2110 = vmatpush1.msra.mxu0 0.0
        %2111 = vmatprep.subr.mxu0 0.0
        %2112 = vmatpush1.msra.mxu0 0.0
        %2113 = vmatprep.subr.mxu0 0.0
        %2114 = vmatpush1.msra.mxu0 0.0
        %2115 = vmatprep.subr.mxu0 0.0
        %2116 = vmatpush1.msra.mxu0 0.0
        %2117 = vmatprep.subr.mxu0 0.0
        %2118 = vmatpush1.msra.mxu0 0.0
        %2119 = vmatprep.subr.mxu0 0.0
        %2120 = vmatpush1.msra.mxu0 0.0
        %2121 = vmatprep.subr.mxu0 0.0
        %2122 = vmatpush1.msra.mxu0 0.0
        %2123 = vmatprep.subr.mxu0 0.0
        %2124 = vmatpush1.msra.mxu0 0.0
        %2125 = vmatprep.subr.mxu0 0.0
        %2126 = vmatpush1.msra.mxu0 0.0
        %2127 = vmatprep.subr.mxu0 0.0
        %2128 = vmatpush1.msra.mxu0 0.0
        %2129 = vmatprep.subr.mxu0 0.0
        %2130 = vmatpush1.msra.mxu0 0.0
        %2131 = vmatprep.subr.mxu0 0.0
        %2132 = vmatpush1.msra.mxu0 0.0
        %2133 = vmatprep.subr.mxu0 0.0
        %2134 = vmatpush1.msra.mxu0 0.0
        %2135 = vmatprep.subr.mxu0 0.0
        %2136 = vmatpush1.msra.mxu0 0.0
        %2137 = vmatprep.subr.mxu0 0.0
        %2138 = vmatpush1.msra.mxu0 0.0
        %2139 = vmatprep.subr.mxu0 0.0
        %2140 = vmatpush1.msra.mxu0 0.0
        %2141 = vmatprep.subr.mxu0 0.0
        %2142 = vmatpush1.msra.mxu0 0.0
        %2143 = vmatprep.subr.mxu0 0.0
        %2144 = vmatpush1.msra.mxu0 0.0
        %2145 = vmatprep.subr.mxu0 0.0
        %2146 = vmatpush1.msra.mxu0 0.0
        %2147 = vmatprep.subr.mxu0 0.0
        %2148 = vmatpush1.msra.mxu0 0.0
        %2149 = vmatprep.subr.mxu0 0.0
        %2150 = vmatpush1.msra.mxu0 0.0
        %2151 = vmatprep.subr.mxu0 0.0
        %2152 = vmatpush1.msra.mxu0 0.0
        %2153 = vmatprep.subr.mxu0 0.0
        %2154 = vmatpush1.msra.mxu0 0.0
        %2155 = vmatprep.subr.mxu0 0.0
        %2156 = vmatpush1.msra.mxu0 0.0
        %2157 = vmatprep.mubr.f32.mxu0 0.0
        %2158 = vmatmul.mubr.f32.gmra.mrb[0].mxu0 %v2091
        %v2159 = vpop.f32.mrb[0].mxu0
        %v2160 = vadd.f32 %v2087, %v2159
        %v2161 = vpop.f32.mrb[0].mxu0
        %2162 = vdwg.mxu0
        %s2163 = scalar_lea.vmem %s10, 16
        %v2164 = vld [vmem:[%s2163] sm:$0xff]
        %v2166 = vsel %vm2016, %v2164, 0
        %2168 = vmatprep.subr.mxu0 0.0
        %2169 = vmatpush1.msra.mxu0 %v2003
        %2170 = vmatprep.subr.mxu0 0.0
        %2171 = vmatpush1.msra.mxu0 %v2004
        %2172 = vmatprep.subr.mxu0 0.0
        %2173 = vmatpush1.msra.mxu0 0.0
        %2174 = vmatprep.subr.mxu0 0.0
        %2175 = vmatpush1.msra.mxu0 0.0
        %2176 = vmatprep.subr.mxu0 0.0
        %2177 = vmatpush1.msra.mxu0 0.0
        %2178 = vmatprep.subr.mxu0 0.0
        %2179 = vmatpush1.msra.mxu0 0.0
        %2180 = vmatprep.subr.mxu0 0.0
        %2181 = vmatpush1.msra.mxu0 0.0
        %2182 = vmatprep.subr.mxu0 0.0
        %2183 = vmatpush1.msra.mxu0 0.0
        %2184 = vmatprep.subr.mxu0 0.0
        %2185 = vmatpush1.msra.mxu0 0.0
        %2186 = vmatprep.subr.mxu0 0.0
        %2187 = vmatpush1.msra.mxu0 0.0
        %2188 = vmatprep.subr.mxu0 0.0
        %2189 = vmatpush1.msra.mxu0 0.0
        %2190 = vmatprep.subr.mxu0 0.0
        %2191 = vmatpush1.msra.mxu0 0.0
        %2192 = vmatprep.subr.mxu0 0.0
        %2193 = vmatpush1.msra.mxu0 0.0
        %2194 = vmatprep.subr.mxu0 0.0
        %2195 = vmatpush1.msra.mxu0 0.0
        %2196 = vmatprep.subr.mxu0 0.0
        %2197 = vmatpush1.msra.mxu0 0.0
        %2198 = vmatprep.subr.mxu0 0.0
        %2199 = vmatpush1.msra.mxu0 0.0
        %2200 = vmatprep.subr.mxu0 0.0
        %2201 = vmatpush1.msra.mxu0 0.0
        %2202 = vmatprep.subr.mxu0 0.0
        %2203 = vmatpush1.msra.mxu0 0.0
        %2204 = vmatprep.subr.mxu0 0.0
        %2205 = vmatpush1.msra.mxu0 0.0
        %2206 = vmatprep.subr.mxu0 0.0
        %2207 = vmatpush1.msra.mxu0 0.0
        %2208 = vmatprep.subr.mxu0 0.0
        %2209 = vmatpush1.msra.mxu0 0.0
        %2210 = vmatprep.subr.mxu0 0.0
        %2211 = vmatpush1.msra.mxu0 0.0
        %2212 = vmatprep.subr.mxu0 0.0
        %2213 = vmatpush1.msra.mxu0 0.0
        %2214 = vmatprep.subr.mxu0 0.0
        %2215 = vmatpush1.msra.mxu0 0.0
        %2216 = vmatprep.subr.mxu0 0.0
        %2217 = vmatpush1.msra.mxu0 0.0
        %2218 = vmatprep.subr.mxu0 0.0
        %2219 = vmatpush1.msra.mxu0 0.0
        %2220 = vmatprep.subr.mxu0 0.0
        %2221 = vmatpush1.msra.mxu0 0.0
        %2222 = vmatprep.subr.mxu0 0.0
        %2223 = vmatpush1.msra.mxu0 0.0
        %2224 = vmatprep.subr.mxu0 0.0
        %2225 = vmatpush1.msra.mxu0 0.0
        %2226 = vmatprep.subr.mxu0 0.0
        %2227 = vmatpush1.msra.mxu0 0.0
        %2228 = vmatprep.subr.mxu0 0.0
        %2229 = vmatpush1.msra.mxu0 0.0
        %2230 = vmatprep.subr.mxu0 0.0
        %2231 = vmatpush1.msra.mxu0 0.0
        %2232 = vmatprep.mubr.f32.mxu0 0.0
        %2233 = vmatmul.mubr.f32.gmra.mrb[0].mxu0 %v2166
        %v2234 = vpop.f32.mrb[0].mxu0
        %v2235 = vadd.f32 0.0, %v2234
        %v2236 = vpop.f32.mrb[0].mxu0
        %2237 = vdwg.mxu0
        %v2238 = vadd.f32 %v2160, %v2235
        %2239 = vrot.lane.b32.xlu0 %v2003, 127
        %v2240 = vpop.permute.xlu0 %2239
        %2241 = vrot.lane.b32.xlu0 %v2004, 127
        %v2242 = vpop.permute.xlu0 %2241
        %s2243 = scalar_lea.vmem %s10, 24
        %v2244 = vld [vmem:[%s2243] sm:$0xff]
        %v2246 = vsel %vm2016, %v2244, 0
        %2248 = vmatprep.subr.mxu0 0.0
        %2249 = vmatpush1.msra.mxu0 %v2240
        %2250 = vmatprep.subr.mxu0 0.0
        %2251 = vmatpush1.msra.mxu0 %v2242
        %2252 = vmatprep.subr.mxu0 0.0
        %2253 = vmatpush1.msra.mxu0 0.0
        %2254 = vmatprep.subr.mxu0 0.0
        %2255 = vmatpush1.msra.mxu0 0.0
        %2256 = vmatprep.subr.mxu0 0.0
        %2257 = vmatpush1.msra.mxu0 0.0
        %2258 = vmatprep.subr.mxu0 0.0
        %2259 = vmatpush1.msra.mxu0 0.0
        %2260 = vmatprep.subr.mxu0 0.0
        %2261 = vmatpush1.msra.mxu0 0.0
        %2262 = vmatprep.subr.mxu0 0.0
        %2263 = vmatpush1.msra.mxu0 0.0
        %2264 = vmatprep.subr.mxu0 0.0
        %2265 = vmatpush1.msra.mxu0 0.0
        %2266 = vmatprep.subr.mxu0 0.0
        %2267 = vmatpush1.msra.mxu0 0.0
        %2268 = vmatprep.subr.mxu0 0.0
        %2269 = vmatpush1.msra.mxu0 0.0
        %2270 = vmatprep.subr.mxu0 0.0
        %2271 = vmatpush1.msra.mxu0 0.0
        %2272 = vmatprep.subr.mxu0 0.0
        %2273 = vmatpush1.msra.mxu0 0.0
        %2274 = vmatprep.subr.mxu0 0.0
        %2275 = vmatpush1.msra.mxu0 0.0
        %2276 = vmatprep.subr.mxu0 0.0
        %2277 = vmatpush1.msra.mxu0 0.0
        %2278 = vmatprep.subr.mxu0 0.0
        %2279 = vmatpush1.msra.mxu0 0.0
        %2280 = vmatprep.subr.mxu0 0.0
        %2281 = vmatpush1.msra.mxu0 0.0
        %2282 = vmatprep.subr.mxu0 0.0
        %2283 = vmatpush1.msra.mxu0 0.0
        %2284 = vmatprep.subr.mxu0 0.0
        %2285 = vmatpush1.msra.mxu0 0.0
        %2286 = vmatprep.subr.mxu0 0.0
        %2287 = vmatpush1.msra.mxu0 0.0
        %2288 = vmatprep.subr.mxu0 0.0
        %2289 = vmatpush1.msra.mxu0 0.0
        %2290 = vmatprep.subr.mxu0 0.0
        %2291 = vmatpush1.msra.mxu0 0.0
        %2292 = vmatprep.subr.mxu0 0.0
        %2293 = vmatpush1.msra.mxu0 0.0
        %2294 = vmatprep.subr.mxu0 0.0
        %2295 = vmatpush1.msra.mxu0 0.0
        %2296 = vmatprep.subr.mxu0 0.0
        %2297 = vmatpush1.msra.mxu0 0.0
        %2298 = vmatprep.subr.mxu0 0.0
        %2299 = vmatpush1.msra.mxu0 0.0
        %2300 = vmatprep.subr.mxu0 0.0
        %2301 = vmatpush1.msra.mxu0 0.0
        %2302 = vmatprep.subr.mxu0 0.0
        %2303 = vmatpush1.msra.mxu0 0.0
        %2304 = vmatprep.subr.mxu0 0.0
        %2305 = vmatpush1.msra.mxu0 0.0
        %2306 = vmatprep.subr.mxu0 0.0
        %2307 = vmatpush1.msra.mxu0 0.0
        %2308 = vmatprep.subr.mxu0 0.0
        %2309 = vmatpush1.msra.mxu0 0.0
        %2310 = vmatprep.subr.mxu0 0.0
        %2311 = vmatpush1.msra.mxu0 0.0
        %2312 = vmatprep.mubr.f32.mxu0 0.0
        %2313 = vmatmul.mubr.f32.gmra.mrb[0].mxu0 %v2246
        %v2314 = vpop.f32.mrb[0].mxu0
        %v2315 = vadd.f32 0.0, %v2314
        %v2316 = vpop.f32.mrb[0].mxu0
        %2317 = vdwg.mxu0
        %v2318 = vadd.f32 %v2238, %v2315
        %2319 = vrot.lane.b32.xlu0 %v2003, 126
        %v2320 = vpop.permute.xlu0 %2319
        %2321 = vrot.lane.b32.xlu0 %v2004, 126
        %v2322 = vpop.permute.xlu0 %2321
        %s2323 = scalar_lea.vmem %s10, 32
        %v2324 = vld [vmem:[%s2323] sm:$0xff]
        %v2326 = vsel %vm2016, %v2324, 0
        %2328 = vmatprep.subr.mxu0 0.0
        %2329 = vmatpush1.msra.mxu0 %v2320
        %2330 = vmatprep.subr.mxu0 0.0
        %2331 = vmatpush1.msra.mxu0 %v2322
        %2332 = vmatprep.subr.mxu0 0.0
        %2333 = vmatpush1.msra.mxu0 0.0
        %2334 = vmatprep.subr.mxu0 0.0
        %2335 = vmatpush1.msra.mxu0 0.0
        %2336 = vmatprep.subr.mxu0 0.0
        %2337 = vmatpush1.msra.mxu0 0.0
        %2338 = vmatprep.subr.mxu0 0.0
        %2339 = vmatpush1.msra.mxu0 0.0
        %2340 = vmatprep.subr.mxu0 0.0
        %2341 = vmatpush1.msra.mxu0 0.0
        %2342 = vmatprep.subr.mxu0 0.0
        %2343 = vmatpush1.msra.mxu0 0.0
        %2344 = vmatprep.subr.mxu0 0.0
        %2345 = vmatpush1.msra.mxu0 0.0
        %2346 = vmatprep.subr.mxu0 0.0
        %2347 = vmatpush1.msra.mxu0 0.0
        %2348 = vmatprep.subr.mxu0 0.0
        %2349 = vmatpush1.msra.mxu0 0.0
        %2350 = vmatprep.subr.mxu0 0.0
        %2351 = vmatpush1.msra.mxu0 0.0
        %2352 = vmatprep.subr.mxu0 0.0
        %2353 = vmatpush1.msra.mxu0 0.0
        %2354 = vmatprep.subr.mxu0 0.0
        %2355 = vmatpush1.msra.mxu0 0.0
        %2356 = vmatprep.subr.mxu0 0.0
        %2357 = vmatpush1.msra.mxu0 0.0
        %2358 = vmatprep.subr.mxu0 0.0
        %2359 = vmatpush1.msra.mxu0 0.0
        %2360 = vmatprep.subr.mxu0 0.0
        %2361 = vmatpush1.msra.mxu0 0.0
        %2362 = vmatprep.subr.mxu0 0.0
        %2363 = vmatpush1.msra.mxu0 0.0
        %2364 = vmatprep.subr.mxu0 0.0
        %2365 = vmatpush1.msra.mxu0 0.0
        %2366 = vmatprep.subr.mxu0 0.0
        %2367 = vmatpush1.msra.mxu0 0.0
        %2368 = vmatprep.subr.mxu0 0.0
        %2369 = vmatpush1.msra.mxu0 0.0
        %2370 = vmatprep.subr.mxu0 0.0
        %2371 = vmatpush1.msra.mxu0 0.0
        %2372 = vmatprep.subr.mxu0 0.0
        %2373 = vmatpush1.msra.mxu0 0.0
        %2374 = vmatprep.subr.mxu0 0.0
        %2375 = vmatpush1.msra.mxu0 0.0
        %2376 = vmatprep.subr.mxu0 0.0
        %2377 = vmatpush1.msra.mxu0 0.0
        %2378 = vmatprep.subr.mxu0 0.0
        %2379 = vmatpush1.msra.mxu0 0.0
        %2380 = vmatprep.subr.mxu0 0.0
        %2381 = vmatpush1.msra.mxu0 0.0
        %2382 = vmatprep.subr.mxu0 0.0
        %2383 = vmatpush1.msra.mxu0 0.0
        %2384 = vmatprep.subr.mxu0 0.0
        %2385 = vmatpush1.msra.mxu0 0.0
        %2386 = vmatprep.subr.mxu0 0.0
        %2387 = vmatpush1.msra.mxu0 0.0
        %2388 = vmatprep.subr.mxu0 0.0
        %2389 = vmatpush1.msra.mxu0 0.0
        %2390 = vmatprep.subr.mxu0 0.0
        %2391 = vmatpush1.msra.mxu0 0.0
        %2392 = vmatprep.mubr.f32.mxu0 0.0
        %2393 = vmatmul.mubr.f32.gmra.mrb[0].mxu0 %v2326
        %v2394 = vpop.f32.mrb[0].mxu0
        %v2395 = vadd.f32 0.0, %v2394
        %v2396 = vpop.f32.mrb[0].mxu0
        %2397 = vdwg.mxu0
        %v2398 = vadd.f32 %v2318, %v2395
        %v2399 = vld [vmem:[%s11] sm:$0xff]
        %2401 = vset.pattern.permute.xlu0 0
        %2402 = vperm.xlu0 %2401, %v2399
        %v2403 = vpop.permute.xlu0 %2402
        %v2405 = vadd.f32 %v2398, %v2403
        %v2406 = vmul.f32 %v2405, %v528
        %v2407 = vld [vmem:[%s523] sm:$0xff]
        %v2408 = vld [vmem:[%s523 + $0x8] sm:$0xff]
        %v2409 = vld [vmem:[%s523 + $0x10] sm:$0xff]
        %v2410 = vld [vmem:[%s523 + $0x18] sm:$0xff]
        %v2411 = vld [vmem:[%s523 + $0x20] sm:$0xff]
        %v2412 = vld [vmem:[%s523 + $0x28] sm:$0xff]
        %v2413 = vld [vmem:[%s523 + $0x30] sm:$0xff]
        %v2414 = vld [vmem:[%s523 + $0x38] sm:$0xff]
        %v2415 = vld [vmem:[%s523 + $0x40] sm:$0xff]
        %v2416 = vld [vmem:[%s523 + $0x48] sm:$0xff]
        %v2417 = vld [vmem:[%s523 + $0x50] sm:$0xff]
        %v2418 = vld [vmem:[%s523 + $0x58] sm:$0xff]
        %v2419 = vld [vmem:[%s523 + $0x60] sm:$0xff]
        %v2420 = vld [vmem:[%s523 + $0x68] sm:$0xff]
        %v2421 = vld [vmem:[%s523 + $0x70] sm:$0xff]
        %v2422 = vld [vmem:[%s523 + $0x78] sm:$0xff]
        %v2423 = vld [vmem:[%s1] sm:$0x1]
        %v2424 = vld [vmem:[%s12] sm:$0xff]
        %v2425 = vld [vmem:[%s12 + $0x8] sm:$0xff]
        %2427 = vset.pattern.permute.xlu0 0
        %2428 = vperm.xlu0 %2427, %v2407
        %v2429 = vpop.permute.xlu0 %2428
        %2432 = vset.pattern.permute.xlu0 0
        %2433 = vperm.xlu0 %2432, %v2408
        %v2434 = vpop.permute.xlu0 %2433
        %2437 = vset.pattern.permute.xlu0 0
        %2438 = vperm.xlu0 %2437, %v2409
        %v2439 = vpop.permute.xlu0 %2438
        %2442 = vset.pattern.permute.xlu0 0
        %2443 = vperm.xlu0 %2442, %v2410
        %v2444 = vpop.permute.xlu0 %2443
        %2447 = vset.pattern.permute.xlu0 0
        %2448 = vperm.xlu0 %2447, %v2411
        %v2449 = vpop.permute.xlu0 %2448
        %2452 = vset.pattern.permute.xlu0 0
        %2453 = vperm.xlu0 %2452, %v2412
        %v2454 = vpop.permute.xlu0 %2453
        %2457 = vset.pattern.permute.xlu0 0
        %2458 = vperm.xlu0 %2457, %v2413
        %v2459 = vpop.permute.xlu0 %2458
        %2462 = vset.pattern.permute.xlu0 0
        %2463 = vperm.xlu0 %2462, %v2414
        %v2464 = vpop.permute.xlu0 %2463
        %2467 = vset.pattern.permute.xlu0 0
        %2468 = vperm.xlu0 %2467, %v2415
        %v2469 = vpop.permute.xlu0 %2468
        %2472 = vset.pattern.permute.xlu0 0
        %2473 = vperm.xlu0 %2472, %v2416
        %v2474 = vpop.permute.xlu0 %2473
        %2477 = vset.pattern.permute.xlu0 0
        %2478 = vperm.xlu0 %2477, %v2417
        %v2479 = vpop.permute.xlu0 %2478
        %2482 = vset.pattern.permute.xlu0 0
        %2483 = vperm.xlu0 %2482, %v2418
        %v2484 = vpop.permute.xlu0 %2483
        %2487 = vset.pattern.permute.xlu0 0
        %2488 = vperm.xlu0 %2487, %v2419
        %v2489 = vpop.permute.xlu0 %2488
        %2492 = vset.pattern.permute.xlu0 0
        %2493 = vperm.xlu0 %2492, %v2420
        %v2494 = vpop.permute.xlu0 %2493
        %2497 = vset.pattern.permute.xlu0 0
        %2498 = vperm.xlu0 %2497, %v2421
        %v2499 = vpop.permute.xlu0 %2498
        %2502 = vset.pattern.permute.xlu0 0
        %2503 = vperm.xlu0 %2502, %v2422
        %v2504 = vpop.permute.xlu0 %2503
        %v2507 = vlaneseq
        %v2508 = vshrl.u32 %v2507, 7
        %v2509 = vsub.s32 0, %v2508
        %v2510 = vrot.slane %v2423, %v2509
        %v2512 = vsub.f32 %v2429, %v2510
        %v2513 = vsub.f32 %v2434, %v2510
        %v2514 = vsub.f32 %v2439, %v2510
        %v2515 = vsub.f32 %v2444, %v2510
        %v2516 = vsub.f32 %v2449, %v2510
        %v2517 = vsub.f32 %v2454, %v2510
        %v2518 = vsub.f32 %v2459, %v2510
        %v2519 = vsub.f32 %v2464, %v2510
        %v2520 = vsub.f32 %v2469, %v2510
        %v2521 = vsub.f32 %v2474, %v2510
        %v2522 = vsub.f32 %v2479, %v2510
        %v2523 = vsub.f32 %v2484, %v2510
        %v2524 = vsub.f32 %v2489, %v2510
        %v2525 = vsub.f32 %v2494, %v2510
        %v2526 = vsub.f32 %v2499, %v2510
        %v2527 = vsub.f32 %v2504, %v2510
        %v2528 = vmul.f32 %v2512, %v2512
        %v2529 = vmul.f32 %v2513, %v2513
        %v2530 = vmul.f32 %v2514, %v2514
        %v2531 = vmul.f32 %v2515, %v2515
        %v2532 = vmul.f32 %v2516, %v2516
        %v2533 = vmul.f32 %v2517, %v2517
        %v2534 = vmul.f32 %v2518, %v2518
        %v2535 = vmul.f32 %v2519, %v2519
        %v2536 = vmul.f32 %v2520, %v2520
        %v2537 = vmul.f32 %v2521, %v2521
        %v2538 = vmul.f32 %v2522, %v2522
        %v2539 = vmul.f32 %v2523, %v2523
        %v2540 = vmul.f32 %v2524, %v2524
        %v2541 = vmul.f32 %v2525, %v2525
        %v2542 = vmul.f32 %v2526, %v2526
        %v2543 = vmul.f32 %v2527, %v2527
        %v2544 = vmul.f32 %v2528, -0.5
        %v2545 = vmul.f32 %v2529, -0.5
        %v2546 = vmul.f32 %v2530, -0.5
        %v2547 = vmul.f32 %v2531, -0.5
        %v2548 = vmul.f32 %v2532, -0.5
        %v2549 = vmul.f32 %v2533, -0.5
        %v2550 = vmul.f32 %v2534, -0.5
        %v2551 = vmul.f32 %v2535, -0.5
        %v2552 = vmul.f32 %v2536, -0.5
        %v2553 = vmul.f32 %v2537, -0.5
        %v2554 = vmul.f32 %v2538, -0.5
        %v2555 = vmul.f32 %v2539, -0.5
        %v2556 = vmul.f32 %v2540, -0.5
        %v2557 = vmul.f32 %v2541, -0.5
        %v2558 = vmul.f32 %v2542, -0.5
        %v2559 = vmul.f32 %v2543, -0.5
        %v2562 = vcombine.high %v2424, %v2424
        %v2564 = vunpack.c.l.s4 1966171168
        %v2565 = vunpack.c.0.s8 %v2564
        %v2566 = vlaneseq
        %v2567 = vshrl.u32 %v2566, 7
        %v2568 = vsub.s32 %v2565, %v2567
        %v2569 = vrot.slane %v2424, %v2568
        %v2571 = vunpack.c.l.s4 1966171168
        %v2572 = vunpack.c.0.s8 %v2571
        %v2573 = vlaneseq
        %v2574 = vshrl.u32 %v2573, 7
        %v2575 = vsub.s32 %v2572, %v2574
        %v2576 = vrot.slane %v2562, %v2575
        %v2577 = vcombine.high %v2569, %v2569
        %v2578 = vcombine.high %v2576, %v2576
        %v2580 = vunpack.c.l.s4 1966171168
        %v2581 = vunpack.c.0.s8 %v2580
        %v2582 = vlaneseq
        %v2583 = vshrl.u32 %v2582, 7
        %v2584 = vsub.s32 %v2581, %v2583
        %v2585 = vrot.slane %v2569, %v2584
        %v2587 = vunpack.c.l.s4 1966171168
        %v2588 = vunpack.c.0.s8 %v2587
        %v2589 = vlaneseq
        %v2590 = vshrl.u32 %v2589, 7
        %v2591 = vsub.s32 %v2588, %v2590
        %v2592 = vrot.slane %v2576, %v2591
        %v2594 = vunpack.c.l.s4 1966171168
        %v2595 = vunpack.c.0.s8 %v2594
        %v2596 = vlaneseq
        %v2597 = vshrl.u32 %v2596, 7
        %v2598 = vsub.s32 %v2595, %v2597
        %v2599 = vrot.slane %v2577, %v2598
        %v2601 = vunpack.c.l.s4 1966171168
        %v2602 = vunpack.c.0.s8 %v2601
        %v2603 = vlaneseq
        %v2604 = vshrl.u32 %v2603, 7
        %v2605 = vsub.s32 %v2602, %v2604
        %v2606 = vrot.slane %v2578, %v2605
        %v2607 = vcombine.high %v2585, %v2585
        %v2608 = vcombine.high %v2592, %v2592
        %v2609 = vcombine.high %v2599, %v2599
        %v2610 = vcombine.high %v2606, %v2606
        %v2611 = vcombine.high %v2425, %v2425
        %v2613 = vunpack.c.l.s4 1966171168
        %v2614 = vunpack.c.0.s8 %v2613
        %v2615 = vlaneseq
        %v2616 = vshrl.u32 %v2615, 7
        %v2617 = vsub.s32 %v2614, %v2616
        %v2618 = vrot.slane %v2425, %v2617
        %v2620 = vunpack.c.l.s4 1966171168
        %v2621 = vunpack.c.0.s8 %v2620
        %v2622 = vlaneseq
        %v2623 = vshrl.u32 %v2622, 7
        %v2624 = vsub.s32 %v2621, %v2623
        %v2625 = vrot.slane %v2611, %v2624
        %v2626 = vcombine.high %v2618, %v2618
        %v2627 = vcombine.high %v2625, %v2625
        %v2629 = vunpack.c.l.s4 1966171168
        %v2630 = vunpack.c.0.s8 %v2629
        %v2631 = vlaneseq
        %v2632 = vshrl.u32 %v2631, 7
        %v2633 = vsub.s32 %v2630, %v2632
        %v2634 = vrot.slane %v2618, %v2633
        %v2636 = vunpack.c.l.s4 1966171168
        %v2637 = vunpack.c.0.s8 %v2636
        %v2638 = vlaneseq
        %v2639 = vshrl.u32 %v2638, 7
        %v2640 = vsub.s32 %v2637, %v2639
        %v2641 = vrot.slane %v2625, %v2640
        %v2643 = vunpack.c.l.s4 1966171168
        %v2644 = vunpack.c.0.s8 %v2643
        %v2645 = vlaneseq
        %v2646 = vshrl.u32 %v2645, 7
        %v2647 = vsub.s32 %v2644, %v2646
        %v2648 = vrot.slane %v2626, %v2647
        %v2650 = vunpack.c.l.s4 1966171168
        %v2651 = vunpack.c.0.s8 %v2650
        %v2652 = vlaneseq
        %v2653 = vshrl.u32 %v2652, 7
        %v2654 = vsub.s32 %v2651, %v2653
        %v2655 = vrot.slane %v2627, %v2654
        %v2656 = vcombine.high %v2634, %v2634
        %v2657 = vcombine.high %v2641, %v2641
        %v2658 = vcombine.high %v2648, %v2648
        %v2659 = vcombine.high %v2655, %v2655
        %v2660 = vlaneseq
        %v2661 = vshrl.u32 %v2660, 7
        %v2662 = vsub.s32 0, %v2661
        %v2663 = vrot.slane %v2585, %v2662
        %v2664 = vlaneseq
        %v2665 = vshrl.u32 %v2664, 7
        %v2666 = vsub.s32 0, %v2665
        %v2667 = vrot.slane %v2599, %v2666
        %v2668 = vlaneseq
        %v2669 = vshrl.u32 %v2668, 7
        %v2670 = vsub.s32 0, %v2669
        %v2671 = vrot.slane %v2607, %v2670
        %v2672 = vlaneseq
        %v2673 = vshrl.u32 %v2672, 7
        %v2674 = vsub.s32 0, %v2673
        %v2675 = vrot.slane %v2609, %v2674
        %v2676 = vlaneseq
        %v2677 = vshrl.u32 %v2676, 7
        %v2678 = vsub.s32 0, %v2677
        %v2679 = vrot.slane %v2592, %v2678
        %v2680 = vlaneseq
        %v2681 = vshrl.u32 %v2680, 7
        %v2682 = vsub.s32 0, %v2681
        %v2683 = vrot.slane %v2606, %v2682
        %v2684 = vlaneseq
        %v2685 = vshrl.u32 %v2684, 7
        %v2686 = vsub.s32 0, %v2685
        %v2687 = vrot.slane %v2608, %v2686
        %v2688 = vlaneseq
        %v2689 = vshrl.u32 %v2688, 7
        %v2690 = vsub.s32 0, %v2689
        %v2691 = vrot.slane %v2610, %v2690
        %v2692 = vlaneseq
        %v2693 = vshrl.u32 %v2692, 7
        %v2694 = vsub.s32 0, %v2693
        %v2695 = vrot.slane %v2634, %v2694
        %v2696 = vlaneseq
        %v2697 = vshrl.u32 %v2696, 7
        %v2698 = vsub.s32 0, %v2697
        %v2699 = vrot.slane %v2648, %v2698
        %v2700 = vlaneseq
        %v2701 = vshrl.u32 %v2700, 7
        %v2702 = vsub.s32 0, %v2701
        %v2703 = vrot.slane %v2656, %v2702
        %v2704 = vlaneseq
        %v2705 = vshrl.u32 %v2704, 7
        %v2706 = vsub.s32 0, %v2705
        %v2707 = vrot.slane %v2658, %v2706
        %v2708 = vlaneseq
        %v2709 = vshrl.u32 %v2708, 7
        %v2710 = vsub.s32 0, %v2709
        %v2711 = vrot.slane %v2641, %v2710
        %v2712 = vlaneseq
        %v2713 = vshrl.u32 %v2712, 7
        %v2714 = vsub.s32 0, %v2713
        %v2715 = vrot.slane %v2655, %v2714
        %v2716 = vlaneseq
        %v2717 = vshrl.u32 %v2716, 7
        %v2718 = vsub.s32 0, %v2717
        %v2719 = vrot.slane %v2657, %v2718
        %v2720 = vlaneseq
        %v2721 = vshrl.u32 %v2720, 7
        %v2722 = vsub.s32 0, %v2721
        %v2723 = vrot.slane %v2659, %v2722
        %2724 = vset.pattern.permute.xlu0 0
        %2725 = vperm.xlu0 %2724, %v2663
        %v2726 = vpop.permute.xlu0 %2725
        %2728 = vset.pattern.permute.xlu0 0
        %2729 = vperm.xlu0 %2728, %v2667
        %v2730 = vpop.permute.xlu0 %2729
        %2732 = vset.pattern.permute.xlu0 0
        %2733 = vperm.xlu0 %2732, %v2671
        %v2734 = vpop.permute.xlu0 %2733
        %2736 = vset.pattern.permute.xlu0 0
        %2737 = vperm.xlu0 %2736, %v2675
        %v2738 = vpop.permute.xlu0 %2737
        %2740 = vset.pattern.permute.xlu0 0
        %2741 = vperm.xlu0 %2740, %v2679
        %v2742 = vpop.permute.xlu0 %2741
        %2744 = vset.pattern.permute.xlu0 0
        %2745 = vperm.xlu0 %2744, %v2683
        %v2746 = vpop.permute.xlu0 %2745
        %2748 = vset.pattern.permute.xlu0 0
        %2749 = vperm.xlu0 %2748, %v2687
        %v2750 = vpop.permute.xlu0 %2749
        %2752 = vset.pattern.permute.xlu0 0
        %2753 = vperm.xlu0 %2752, %v2691
        %v2754 = vpop.permute.xlu0 %2753
        %2756 = vset.pattern.permute.xlu0 0
        %2757 = vperm.xlu0 %2756, %v2695
        %v2758 = vpop.permute.xlu0 %2757
        %2760 = vset.pattern.permute.xlu0 0
        %2761 = vperm.xlu0 %2760, %v2699
        %v2762 = vpop.permute.xlu0 %2761
        %2764 = vset.pattern.permute.xlu0 0
        %2765 = vperm.xlu0 %2764, %v2703
        %v2766 = vpop.permute.xlu0 %2765
        %2768 = vset.pattern.permute.xlu0 0
        %2769 = vperm.xlu0 %2768, %v2707
        %v2770 = vpop.permute.xlu0 %2769
        %2772 = vset.pattern.permute.xlu0 0
        %2773 = vperm.xlu0 %2772, %v2711
        %v2774 = vpop.permute.xlu0 %2773
        %2776 = vset.pattern.permute.xlu0 0
        %2777 = vperm.xlu0 %2776, %v2715
        %v2778 = vpop.permute.xlu0 %2777
        %2780 = vset.pattern.permute.xlu0 0
        %2781 = vperm.xlu0 %2780, %v2719
        %v2782 = vpop.permute.xlu0 %2781
        %2784 = vset.pattern.permute.xlu0 0
        %2785 = vperm.xlu0 %2784, %v2723
        %v2786 = vpop.permute.xlu0 %2785
        %v2788 = vmul.f32 %v2544, %v2726
        %v2789 = vmul.f32 %v2545, %v2726
        %v2790 = vmul.f32 %v2546, %v2726
        %v2791 = vmul.f32 %v2547, %v2726
        %v2792 = vmul.f32 %v2548, %v2726
        %v2793 = vmul.f32 %v2549, %v2726
        %v2794 = vmul.f32 %v2550, %v2726
        %v2795 = vmul.f32 %v2551, %v2726
        %v2796 = vmul.f32 %v2552, %v2726
        %v2797 = vmul.f32 %v2553, %v2726
        %v2798 = vmul.f32 %v2554, %v2726
        %v2799 = vmul.f32 %v2555, %v2726
        %v2800 = vmul.f32 %v2556, %v2726
        %v2801 = vmul.f32 %v2557, %v2726
        %v2802 = vmul.f32 %v2558, %v2726
        %v2803 = vmul.f32 %v2559, %v2726
        %v2804 = vmul.f32 %v2544, %v2730
        %v2805 = vmul.f32 %v2545, %v2730
        %v2806 = vmul.f32 %v2546, %v2730
        %v2807 = vmul.f32 %v2547, %v2730
        %v2808 = vmul.f32 %v2548, %v2730
        %v2809 = vmul.f32 %v2549, %v2730
        %v2810 = vmul.f32 %v2550, %v2730
        %v2811 = vmul.f32 %v2551, %v2730
        %v2812 = vmul.f32 %v2552, %v2730
        %v2813 = vmul.f32 %v2553, %v2730
        %v2814 = vmul.f32 %v2554, %v2730
        %v2815 = vmul.f32 %v2555, %v2730
        %v2816 = vmul.f32 %v2556, %v2730
        %v2817 = vmul.f32 %v2557, %v2730
        %v2818 = vmul.f32 %v2558, %v2730
        %v2819 = vmul.f32 %v2559, %v2730
        %v2820 = vmul.f32 %v2544, %v2734
        %v2821 = vmul.f32 %v2545, %v2734
        %v2822 = vmul.f32 %v2546, %v2734
        %v2823 = vmul.f32 %v2547, %v2734
        %v2824 = vmul.f32 %v2548, %v2734
        %v2825 = vmul.f32 %v2549, %v2734
        %v2826 = vmul.f32 %v2550, %v2734
        %v2827 = vmul.f32 %v2551, %v2734
        %v2828 = vmul.f32 %v2552, %v2734
        %v2829 = vmul.f32 %v2553, %v2734
        %v2830 = vmul.f32 %v2554, %v2734
        %v2831 = vmul.f32 %v2555, %v2734
        %v2832 = vmul.f32 %v2556, %v2734
        %v2833 = vmul.f32 %v2557, %v2734
        %v2834 = vmul.f32 %v2558, %v2734
        %v2835 = vmul.f32 %v2559, %v2734
        %v2836 = vmul.f32 %v2544, %v2738
        %v2837 = vmul.f32 %v2545, %v2738
        %v2838 = vmul.f32 %v2546, %v2738
        %v2839 = vmul.f32 %v2547, %v2738
        %v2840 = vmul.f32 %v2548, %v2738
        %v2841 = vmul.f32 %v2549, %v2738
        %v2842 = vmul.f32 %v2550, %v2738
        %v2843 = vmul.f32 %v2551, %v2738
        %v2844 = vmul.f32 %v2552, %v2738
        %v2845 = vmul.f32 %v2553, %v2738
        %v2846 = vmul.f32 %v2554, %v2738
        %v2847 = vmul.f32 %v2555, %v2738
        %v2848 = vmul.f32 %v2556, %v2738
        %v2849 = vmul.f32 %v2557, %v2738
        %v2850 = vmul.f32 %v2558, %v2738
        %v2851 = vmul.f32 %v2559, %v2738
        %v2852 = vmul.f32 %v2544, %v2742
        %v2853 = vmul.f32 %v2545, %v2742
        %v2854 = vmul.f32 %v2546, %v2742
        %v2855 = vmul.f32 %v2547, %v2742
        %v2856 = vmul.f32 %v2548, %v2742
        %v2857 = vmul.f32 %v2549, %v2742
        %v2858 = vmul.f32 %v2550, %v2742
        %v2859 = vmul.f32 %v2551, %v2742
        %v2860 = vmul.f32 %v2552, %v2742
        %v2861 = vmul.f32 %v2553, %v2742
        %v2862 = vmul.f32 %v2554, %v2742
        %v2863 = vmul.f32 %v2555, %v2742
        %v2864 = vmul.f32 %v2556, %v2742
        %v2865 = vmul.f32 %v2557, %v2742
        %v2866 = vmul.f32 %v2558, %v2742
        %v2867 = vmul.f32 %v2559, %v2742
        %v2868 = vmul.f32 %v2544, %v2746
        %v2869 = vmul.f32 %v2545, %v2746
        %v2870 = vmul.f32 %v2546, %v2746
        %v2871 = vmul.f32 %v2547, %v2746
        %v2872 = vmul.f32 %v2548, %v2746
        %v2873 = vmul.f32 %v2549, %v2746
        %v2874 = vmul.f32 %v2550, %v2746
        %v2875 = vmul.f32 %v2551, %v2746
        %v2876 = vmul.f32 %v2552, %v2746
        %v2877 = vmul.f32 %v2553, %v2746
        %v2878 = vmul.f32 %v2554, %v2746
        %v2879 = vmul.f32 %v2555, %v2746
        %v2880 = vmul.f32 %v2556, %v2746
        %v2881 = vmul.f32 %v2557, %v2746
        %v2882 = vmul.f32 %v2558, %v2746
        %v2883 = vmul.f32 %v2559, %v2746
        %v2884 = vmul.f32 %v2544, %v2750
        %v2885 = vmul.f32 %v2545, %v2750
        %v2886 = vmul.f32 %v2546, %v2750
        %v2887 = vmul.f32 %v2547, %v2750
        %v2888 = vmul.f32 %v2548, %v2750
        %v2889 = vmul.f32 %v2549, %v2750
        %v2890 = vmul.f32 %v2550, %v2750
        %v2891 = vmul.f32 %v2551, %v2750
        %v2892 = vmul.f32 %v2552, %v2750
        %v2893 = vmul.f32 %v2553, %v2750
        %v2894 = vmul.f32 %v2554, %v2750
        %v2895 = vmul.f32 %v2555, %v2750
        %v2896 = vmul.f32 %v2556, %v2750
        %v2897 = vmul.f32 %v2557, %v2750
        %v2898 = vmul.f32 %v2558, %v2750
        %v2899 = vmul.f32 %v2559, %v2750
        %v2900 = vmul.f32 %v2544, %v2754
        %v2901 = vmul.f32 %v2545, %v2754
        %v2902 = vmul.f32 %v2546, %v2754
        %v2903 = vmul.f32 %v2547, %v2754
        %v2904 = vmul.f32 %v2548, %v2754
        %v2905 = vmul.f32 %v2549, %v2754
        %v2906 = vmul.f32 %v2550, %v2754
        %v2907 = vmul.f32 %v2551, %v2754
        %v2908 = vmul.f32 %v2552, %v2754
        %v2909 = vmul.f32 %v2553, %v2754
        %v2910 = vmul.f32 %v2554, %v2754
        %v2911 = vmul.f32 %v2555, %v2754
        %v2912 = vmul.f32 %v2556, %v2754
        %v2913 = vmul.f32 %v2557, %v2754
        %v2914 = vmul.f32 %v2558, %v2754
        %v2915 = vmul.f32 %v2559, %v2754
        %v2916 = vmul.f32 %v2544, %v2758
        %v2917 = vmul.f32 %v2545, %v2758
        %v2918 = vmul.f32 %v2546, %v2758
        %v2919 = vmul.f32 %v2547, %v2758
        %v2920 = vmul.f32 %v2548, %v2758
        %v2921 = vmul.f32 %v2549, %v2758
        %v2922 = vmul.f32 %v2550, %v2758
        %v2923 = vmul.f32 %v2551, %v2758
        %v2924 = vmul.f32 %v2552, %v2758
        %v2925 = vmul.f32 %v2553, %v2758
        %v2926 = vmul.f32 %v2554, %v2758
        %v2927 = vmul.f32 %v2555, %v2758
        %v2928 = vmul.f32 %v2556, %v2758
        %v2929 = vmul.f32 %v2557, %v2758
        %v2930 = vmul.f32 %v2558, %v2758
        %v2931 = vmul.f32 %v2559, %v2758
        %v2932 = vmul.f32 %v2544, %v2762
        %v2933 = vmul.f32 %v2545, %v2762
        %v2934 = vmul.f32 %v2546, %v2762
        %v2935 = vmul.f32 %v2547, %v2762
        %v2936 = vmul.f32 %v2548, %v2762
        %v2937 = vmul.f32 %v2549, %v2762
        %v2938 = vmul.f32 %v2550, %v2762
        %v2939 = vmul.f32 %v2551, %v2762
        %v2940 = vmul.f32 %v2552, %v2762
        %v2941 = vmul.f32 %v2553, %v2762
        %v2942 = vmul.f32 %v2554, %v2762
        %v2943 = vmul.f32 %v2555, %v2762
        %v2944 = vmul.f32 %v2556, %v2762
        %v2945 = vmul.f32 %v2557, %v2762
        %v2946 = vmul.f32 %v2558, %v2762
        %v2947 = vmul.f32 %v2559, %v2762
        %v2948 = vmul.f32 %v2544, %v2766
        %v2949 = vmul.f32 %v2545, %v2766
        %v2950 = vmul.f32 %v2546, %v2766
        %v2951 = vmul.f32 %v2547, %v2766
        %v2952 = vmul.f32 %v2548, %v2766
        %v2953 = vmul.f32 %v2549, %v2766
        %v2954 = vmul.f32 %v2550, %v2766
        %v2955 = vmul.f32 %v2551, %v2766
        %v2956 = vmul.f32 %v2552, %v2766
        %v2957 = vmul.f32 %v2553, %v2766
        %v2958 = vmul.f32 %v2554, %v2766
        %v2959 = vmul.f32 %v2555, %v2766
        %v2960 = vmul.f32 %v2556, %v2766
        %v2961 = vmul.f32 %v2557, %v2766
        %v2962 = vmul.f32 %v2558, %v2766
        %v2963 = vmul.f32 %v2559, %v2766
        %v2964 = vmul.f32 %v2544, %v2770
        %v2965 = vmul.f32 %v2545, %v2770
        %v2966 = vmul.f32 %v2546, %v2770
        %v2967 = vmul.f32 %v2547, %v2770
        %v2968 = vmul.f32 %v2548, %v2770
        %v2969 = vmul.f32 %v2549, %v2770
        %v2970 = vmul.f32 %v2550, %v2770
        %v2971 = vmul.f32 %v2551, %v2770
        %v2972 = vmul.f32 %v2552, %v2770
        %v2973 = vmul.f32 %v2553, %v2770
        %v2974 = vmul.f32 %v2554, %v2770
        %v2975 = vmul.f32 %v2555, %v2770
        %v2976 = vmul.f32 %v2556, %v2770
        %v2977 = vmul.f32 %v2557, %v2770
        %v2978 = vmul.f32 %v2558, %v2770
        %v2979 = vmul.f32 %v2559, %v2770
        %v2980 = vmul.f32 %v2544, %v2774
        %v2981 = vmul.f32 %v2545, %v2774
        %v2982 = vmul.f32 %v2546, %v2774
        %v2983 = vmul.f32 %v2547, %v2774
        %v2984 = vmul.f32 %v2548, %v2774
        %v2985 = vmul.f32 %v2549, %v2774
        %v2986 = vmul.f32 %v2550, %v2774
        %v2987 = vmul.f32 %v2551, %v2774
        %v2988 = vmul.f32 %v2552, %v2774
        %v2989 = vmul.f32 %v2553, %v2774
        %v2990 = vmul.f32 %v2554, %v2774
        %v2991 = vmul.f32 %v2555, %v2774
        %v2992 = vmul.f32 %v2556, %v2774
        %v2993 = vmul.f32 %v2557, %v2774
        %v2994 = vmul.f32 %v2558, %v2774
        %v2995 = vmul.f32 %v2559, %v2774
        %v2996 = vmul.f32 %v2544, %v2778
        %v2997 = vmul.f32 %v2545, %v2778
        %v2998 = vmul.f32 %v2546, %v2778
        %v2999 = vmul.f32 %v2547, %v2778
        %v3000 = vmul.f32 %v2548, %v2778
        %v3001 = vmul.f32 %v2549, %v2778
        %v3002 = vmul.f32 %v2550, %v2778
        %v3003 = vmul.f32 %v2551, %v2778
        %v3004 = vmul.f32 %v2552, %v2778
        %v3005 = vmul.f32 %v2553, %v2778
        %v3006 = vmul.f32 %v2554, %v2778
        %v3007 = vmul.f32 %v2555, %v2778
        %v3008 = vmul.f32 %v2556, %v2778
        %v3009 = vmul.f32 %v2557, %v2778
        %v3010 = vmul.f32 %v2558, %v2778
        %v3011 = vmul.f32 %v2559, %v2778
        %v3012 = vmul.f32 %v2544, %v2782
        %v3013 = vmul.f32 %v2545, %v2782
        %v3014 = vmul.f32 %v2546, %v2782
        %v3015 = vmul.f32 %v2547, %v2782
        %v3016 = vmul.f32 %v2548, %v2782
        %v3017 = vmul.f32 %v2549, %v2782
        %v3018 = vmul.f32 %v2550, %v2782
        %v3019 = vmul.f32 %v2551, %v2782
        %v3020 = vmul.f32 %v2552, %v2782
        %v3021 = vmul.f32 %v2553, %v2782
        %v3022 = vmul.f32 %v2554, %v2782
        %v3023 = vmul.f32 %v2555, %v2782
        %v3024 = vmul.f32 %v2556, %v2782
        %v3025 = vmul.f32 %v2557, %v2782
        %v3026 = vmul.f32 %v2558, %v2782
        %v3027 = vmul.f32 %v2559, %v2782
        %v3028 = vmul.f32 %v2544, %v2786
        %v3029 = vmul.f32 %v2545, %v2786
        %v3030 = vmul.f32 %v2546, %v2786
        %v3031 = vmul.f32 %v2547, %v2786
        %v3032 = vmul.f32 %v2548, %v2786
        %v3033 = vmul.f32 %v2549, %v2786
        %v3034 = vmul.f32 %v2550, %v2786
        %v3035 = vmul.f32 %v2551, %v2786
        %v3036 = vmul.f32 %v2552, %v2786
        %v3037 = vmul.f32 %v2553, %v2786
        %v3038 = vmul.f32 %v2554, %v2786
        %v3039 = vmul.f32 %v2555, %v2786
        %v3040 = vmul.f32 %v2556, %v2786
        %v3041 = vmul.f32 %v2557, %v2786
        %v3042 = vmul.f32 %v2558, %v2786
        %v3043 = vmul.f32 %v2559, %v2786
        %v3044 = vmul.f32 %v2788, 1.442695
        %v3045 = vpow.pop %v3044
        %v3046 = vmul.f32 %v2789, 1.442695
        %v3047 = vpow.pop %v3046
        %v3048 = vmul.f32 %v2790, 1.442695
        %v3049 = vpow.pop %v3048
        %v3050 = vmul.f32 %v2791, 1.442695
        %v3051 = vpow.pop %v3050
        %v3052 = vmul.f32 %v2792, 1.442695
        %v3053 = vpow.pop %v3052
        %v3054 = vmul.f32 %v2793, 1.442695
        %v3055 = vpow.pop %v3054
        %v3056 = vmul.f32 %v2794, 1.442695
        %v3057 = vpow.pop %v3056
        %v3058 = vmul.f32 %v2795, 1.442695
        %v3059 = vpow.pop %v3058
        %v3060 = vmul.f32 %v2796, 1.442695
        %v3061 = vpow.pop %v3060
        %v3062 = vmul.f32 %v2797, 1.442695
        %v3063 = vpow.pop %v3062
        %v3064 = vmul.f32 %v2798, 1.442695
        %v3065 = vpow.pop %v3064
        %v3066 = vmul.f32 %v2799, 1.442695
        %v3067 = vpow.pop %v3066
        %v3068 = vmul.f32 %v2800, 1.442695
        %v3069 = vpow.pop %v3068
        %v3070 = vmul.f32 %v2801, 1.442695
        %v3071 = vpow.pop %v3070
        %v3072 = vmul.f32 %v2802, 1.442695
        %v3073 = vpow.pop %v3072
        %v3074 = vmul.f32 %v2803, 1.442695
        %v3075 = vpow.pop %v3074
        %v3076 = vmul.f32 %v2804, 1.442695
        %v3077 = vpow.pop %v3076
        %v3078 = vmul.f32 %v2805, 1.442695
        %v3079 = vpow.pop %v3078
        %v3080 = vmul.f32 %v2806, 1.442695
        %v3081 = vpow.pop %v3080
        %v3082 = vmul.f32 %v2807, 1.442695
        %v3083 = vpow.pop %v3082
        %v3084 = vmul.f32 %v2808, 1.442695
        %v3085 = vpow.pop %v3084
        %v3086 = vmul.f32 %v2809, 1.442695
        %v3087 = vpow.pop %v3086
        %v3088 = vmul.f32 %v2810, 1.442695
        %v3089 = vpow.pop %v3088
        %v3090 = vmul.f32 %v2811, 1.442695
        %v3091 = vpow.pop %v3090
        %v3092 = vmul.f32 %v2812, 1.442695
        %v3093 = vpow.pop %v3092
        %v3094 = vmul.f32 %v2813, 1.442695
        %v3095 = vpow.pop %v3094
        %v3096 = vmul.f32 %v2814, 1.442695
        %v3097 = vpow.pop %v3096
        %v3098 = vmul.f32 %v2815, 1.442695
        %v3099 = vpow.pop %v3098
        %v3100 = vmul.f32 %v2816, 1.442695
        %v3101 = vpow.pop %v3100
        %v3102 = vmul.f32 %v2817, 1.442695
        %v3103 = vpow.pop %v3102
        %v3104 = vmul.f32 %v2818, 1.442695
        %v3105 = vpow.pop %v3104
        %v3106 = vmul.f32 %v2819, 1.442695
        %v3107 = vpow.pop %v3106
        %v3108 = vmul.f32 %v2820, 1.442695
        %v3109 = vpow.pop %v3108
        %v3110 = vmul.f32 %v2821, 1.442695
        %v3111 = vpow.pop %v3110
        %v3112 = vmul.f32 %v2822, 1.442695
        %v3113 = vpow.pop %v3112
        %v3114 = vmul.f32 %v2823, 1.442695
        %v3115 = vpow.pop %v3114
        %v3116 = vmul.f32 %v2824, 1.442695
        %v3117 = vpow.pop %v3116
        %v3118 = vmul.f32 %v2825, 1.442695
        %v3119 = vpow.pop %v3118
        %v3120 = vmul.f32 %v2826, 1.442695
        %v3121 = vpow.pop %v3120
        %v3122 = vmul.f32 %v2827, 1.442695
        %v3123 = vpow.pop %v3122
        %v3124 = vmul.f32 %v2828, 1.442695
        %v3125 = vpow.pop %v3124
        %v3126 = vmul.f32 %v2829, 1.442695
        %v3127 = vpow.pop %v3126
        %v3128 = vmul.f32 %v2830, 1.442695
        %v3129 = vpow.pop %v3128
        %v3130 = vmul.f32 %v2831, 1.442695
        %v3131 = vpow.pop %v3130
        %v3132 = vmul.f32 %v2832, 1.442695
        %v3133 = vpow.pop %v3132
        %v3134 = vmul.f32 %v2833, 1.442695
        %v3135 = vpow.pop %v3134
        %v3136 = vmul.f32 %v2834, 1.442695
        %v3137 = vpow.pop %v3136
        %v3138 = vmul.f32 %v2835, 1.442695
        %v3139 = vpow.pop %v3138
        %v3140 = vmul.f32 %v2836, 1.442695
        %v3141 = vpow.pop %v3140
        %v3142 = vmul.f32 %v2837, 1.442695
        %v3143 = vpow.pop %v3142
        %v3144 = vmul.f32 %v2838, 1.442695
        %v3145 = vpow.pop %v3144
        %v3146 = vmul.f32 %v2839, 1.442695
        %v3147 = vpow.pop %v3146
        %v3148 = vmul.f32 %v2840, 1.442695
        %v3149 = vpow.pop %v3148
        %v3150 = vmul.f32 %v2841, 1.442695
        %v3151 = vpow.pop %v3150
        %v3152 = vmul.f32 %v2842, 1.442695
        %v3153 = vpow.pop %v3152
        %v3154 = vmul.f32 %v2843, 1.442695
        %v3155 = vpow.pop %v3154
        %v3156 = vmul.f32 %v2844, 1.442695
        %v3157 = vpow.pop %v3156
        %v3158 = vmul.f32 %v2845, 1.442695
        %v3159 = vpow.pop %v3158
        %v3160 = vmul.f32 %v2846, 1.442695
        %v3161 = vpow.pop %v3160
        %v3162 = vmul.f32 %v2847, 1.442695
        %v3163 = vpow.pop %v3162
        %v3164 = vmul.f32 %v2848, 1.442695
        %v3165 = vpow.pop %v3164
        %v3166 = vmul.f32 %v2849, 1.442695
        %v3167 = vpow.pop %v3166
        %v3168 = vmul.f32 %v2850, 1.442695
        %v3169 = vpow.pop %v3168
        %v3170 = vmul.f32 %v2851, 1.442695
        %v3171 = vpow.pop %v3170
        %v3172 = vmul.f32 %v2852, 1.442695
        %v3173 = vpow.pop %v3172
        %v3174 = vmul.f32 %v2853, 1.442695
        %v3175 = vpow.pop %v3174
        %v3176 = vmul.f32 %v2854, 1.442695
        %v3177 = vpow.pop %v3176
        %v3178 = vmul.f32 %v2855, 1.442695
        %v3179 = vpow.pop %v3178
        %v3180 = vmul.f32 %v2856, 1.442695
        %v3181 = vpow.pop %v3180
        %v3182 = vmul.f32 %v2857, 1.442695
        %v3183 = vpow.pop %v3182
        %v3184 = vmul.f32 %v2858, 1.442695
        %v3185 = vpow.pop %v3184
        %v3186 = vmul.f32 %v2859, 1.442695
        %v3187 = vpow.pop %v3186
        %v3188 = vmul.f32 %v2860, 1.442695
        %v3189 = vpow.pop %v3188
        %v3190 = vmul.f32 %v2861, 1.442695
        %v3191 = vpow.pop %v3190
        %v3192 = vmul.f32 %v2862, 1.442695
        %v3193 = vpow.pop %v3192
        %v3194 = vmul.f32 %v2863, 1.442695
        %v3195 = vpow.pop %v3194
        %v3196 = vmul.f32 %v2864, 1.442695
        %v3197 = vpow.pop %v3196
        %v3198 = vmul.f32 %v2865, 1.442695
        %v3199 = vpow.pop %v3198
        %v3200 = vmul.f32 %v2866, 1.442695
        %v3201 = vpow.pop %v3200
        %v3202 = vmul.f32 %v2867, 1.442695
        %v3203 = vpow.pop %v3202
        %v3204 = vmul.f32 %v2868, 1.442695
        %v3205 = vpow.pop %v3204
        %v3206 = vmul.f32 %v2869, 1.442695
        %v3207 = vpow.pop %v3206
        %v3208 = vmul.f32 %v2870, 1.442695
        %v3209 = vpow.pop %v3208
        %v3210 = vmul.f32 %v2871, 1.442695
        %v3211 = vpow.pop %v3210
        %v3212 = vmul.f32 %v2872, 1.442695
        %v3213 = vpow.pop %v3212
        %v3214 = vmul.f32 %v2873, 1.442695
        %v3215 = vpow.pop %v3214
        %v3216 = vmul.f32 %v2874, 1.442695
        %v3217 = vpow.pop %v3216
        %v3218 = vmul.f32 %v2875, 1.442695
        %v3219 = vpow.pop %v3218
        %v3220 = vmul.f32 %v2876, 1.442695
        %v3221 = vpow.pop %v3220
        %v3222 = vmul.f32 %v2877, 1.442695
        %v3223 = vpow.pop %v3222
        %v3224 = vmul.f32 %v2878, 1.442695
        %v3225 = vpow.pop %v3224
        %v3226 = vmul.f32 %v2879, 1.442695
        %v3227 = vpow.pop %v3226
        %v3228 = vmul.f32 %v2880, 1.442695
        %v3229 = vpow.pop %v3228
        %v3230 = vmul.f32 %v2881, 1.442695
        %v3231 = vpow.pop %v3230
        %v3232 = vmul.f32 %v2882, 1.442695
        %v3233 = vpow.pop %v3232
        %v3234 = vmul.f32 %v2883, 1.442695
        %v3235 = vpow.pop %v3234
        %v3236 = vmul.f32 %v2884, 1.442695
        %v3237 = vpow.pop %v3236
        %v3238 = vmul.f32 %v2885, 1.442695
        %v3239 = vpow.pop %v3238
        %v3240 = vmul.f32 %v2886, 1.442695
        %v3241 = vpow.pop %v3240
        %v3242 = vmul.f32 %v2887, 1.442695
        %v3243 = vpow.pop %v3242
        %v3244 = vmul.f32 %v2888, 1.442695
        %v3245 = vpow.pop %v3244
        %v3246 = vmul.f32 %v2889, 1.442695
        %v3247 = vpow.pop %v3246
        %v3248 = vmul.f32 %v2890, 1.442695
        %v3249 = vpow.pop %v3248
        %v3250 = vmul.f32 %v2891, 1.442695
        %v3251 = vpow.pop %v3250
        %v3252 = vmul.f32 %v2892, 1.442695
        %v3253 = vpow.pop %v3252
        %v3254 = vmul.f32 %v2893, 1.442695
        %v3255 = vpow.pop %v3254
        %v3256 = vmul.f32 %v2894, 1.442695
        %v3257 = vpow.pop %v3256
        %v3258 = vmul.f32 %v2895, 1.442695
        %v3259 = vpow.pop %v3258
        %v3260 = vmul.f32 %v2896, 1.442695
        %v3261 = vpow.pop %v3260
        %v3262 = vmul.f32 %v2897, 1.442695
        %v3263 = vpow.pop %v3262
        %v3264 = vmul.f32 %v2898, 1.442695
        %v3265 = vpow.pop %v3264
        %v3266 = vmul.f32 %v2899, 1.442695
        %v3267 = vpow.pop %v3266
        %v3268 = vmul.f32 %v2900, 1.442695
        %v3269 = vpow.pop %v3268
        %v3270 = vmul.f32 %v2901, 1.442695
        %v3271 = vpow.pop %v3270
        %v3272 = vmul.f32 %v2902, 1.442695
        %v3273 = vpow.pop %v3272
        %v3274 = vmul.f32 %v2903, 1.442695
        %v3275 = vpow.pop %v3274
        %v3276 = vmul.f32 %v2904, 1.442695
        %v3277 = vpow.pop %v3276
        %v3278 = vmul.f32 %v2905, 1.442695
        %v3279 = vpow.pop %v3278
        %v3280 = vmul.f32 %v2906, 1.442695
        %v3281 = vpow.pop %v3280
        %v3282 = vmul.f32 %v2907, 1.442695
        %v3283 = vpow.pop %v3282
        %v3284 = vmul.f32 %v2908, 1.442695
        %v3285 = vpow.pop %v3284
        %v3286 = vmul.f32 %v2909, 1.442695
        %v3287 = vpow.pop %v3286
        %v3288 = vmul.f32 %v2910, 1.442695
        %v3289 = vpow.pop %v3288
        %v3290 = vmul.f32 %v2911, 1.442695
        %v3291 = vpow.pop %v3290
        %v3292 = vmul.f32 %v2912, 1.442695
        %v3293 = vpow.pop %v3292
        %v3294 = vmul.f32 %v2913, 1.442695
        %v3295 = vpow.pop %v3294
        %v3296 = vmul.f32 %v2914, 1.442695
        %v3297 = vpow.pop %v3296
        %v3298 = vmul.f32 %v2915, 1.442695
        %v3299 = vpow.pop %v3298
        %v3300 = vmul.f32 %v2916, 1.442695
        %v3301 = vpow.pop %v3300
        %v3302 = vmul.f32 %v2917, 1.442695
        %v3303 = vpow.pop %v3302
        %v3304 = vmul.f32 %v2918, 1.442695
        %v3305 = vpow.pop %v3304
        %v3306 = vmul.f32 %v2919, 1.442695
        %v3307 = vpow.pop %v3306
        %v3308 = vmul.f32 %v2920, 1.442695
        %v3309 = vpow.pop %v3308
        %v3310 = vmul.f32 %v2921, 1.442695
        %v3311 = vpow.pop %v3310
        %v3312 = vmul.f32 %v2922, 1.442695
        %v3313 = vpow.pop %v3312
        %v3314 = vmul.f32 %v2923, 1.442695
        %v3315 = vpow.pop %v3314
        %v3316 = vmul.f32 %v2924, 1.442695
        %v3317 = vpow.pop %v3316
        %v3318 = vmul.f32 %v2925, 1.442695
        %v3319 = vpow.pop %v3318
        %v3320 = vmul.f32 %v2926, 1.442695
        %v3321 = vpow.pop %v3320
        %v3322 = vmul.f32 %v2927, 1.442695
        %v3323 = vpow.pop %v3322
        %v3324 = vmul.f32 %v2928, 1.442695
        %v3325 = vpow.pop %v3324
        %v3326 = vmul.f32 %v2929, 1.442695
        %v3327 = vpow.pop %v3326
        %v3328 = vmul.f32 %v2930, 1.442695
        %v3329 = vpow.pop %v3328
        %v3330 = vmul.f32 %v2931, 1.442695
        %v3331 = vpow.pop %v3330
        %v3332 = vmul.f32 %v2932, 1.442695
        %v3333 = vpow.pop %v3332
        %v3334 = vmul.f32 %v2933, 1.442695
        %v3335 = vpow.pop %v3334
        %v3336 = vmul.f32 %v2934, 1.442695
        %v3337 = vpow.pop %v3336
        %v3338 = vmul.f32 %v2935, 1.442695
        %v3339 = vpow.pop %v3338
        %v3340 = vmul.f32 %v2936, 1.442695
        %v3341 = vpow.pop %v3340
        %v3342 = vmul.f32 %v2937, 1.442695
        %v3343 = vpow.pop %v3342
        %v3344 = vmul.f32 %v2938, 1.442695
        %v3345 = vpow.pop %v3344
        %v3346 = vmul.f32 %v2939, 1.442695
        %v3347 = vpow.pop %v3346
        %v3348 = vmul.f32 %v2940, 1.442695
        %v3349 = vpow.pop %v3348
        %v3350 = vmul.f32 %v2941, 1.442695
        %v3351 = vpow.pop %v3350
        %v3352 = vmul.f32 %v2942, 1.442695
        %v3353 = vpow.pop %v3352
        %v3354 = vmul.f32 %v2943, 1.442695
        %v3355 = vpow.pop %v3354
        %v3356 = vmul.f32 %v2944, 1.442695
        %v3357 = vpow.pop %v3356
        %v3358 = vmul.f32 %v2945, 1.442695
        %v3359 = vpow.pop %v3358
        %v3360 = vmul.f32 %v2946, 1.442695
        %v3361 = vpow.pop %v3360
        %v3362 = vmul.f32 %v2947, 1.442695
        %v3363 = vpow.pop %v3362
        %v3364 = vmul.f32 %v2948, 1.442695
        %v3365 = vpow.pop %v3364
        %v3366 = vmul.f32 %v2949, 1.442695
        %v3367 = vpow.pop %v3366
        %v3368 = vmul.f32 %v2950, 1.442695
        %v3369 = vpow.pop %v3368
        %v3370 = vmul.f32 %v2951, 1.442695
        %v3371 = vpow.pop %v3370
        %v3372 = vmul.f32 %v2952, 1.442695
        %v3373 = vpow.pop %v3372
        %v3374 = vmul.f32 %v2953, 1.442695
        %v3375 = vpow.pop %v3374
        %v3376 = vmul.f32 %v2954, 1.442695
        %v3377 = vpow.pop %v3376
        %v3378 = vmul.f32 %v2955, 1.442695
        %v3379 = vpow.pop %v3378
        %v3380 = vmul.f32 %v2956, 1.442695
        %v3381 = vpow.pop %v3380
        %v3382 = vmul.f32 %v2957, 1.442695
        %v3383 = vpow.pop %v3382
        %v3384 = vmul.f32 %v2958, 1.442695
        %v3385 = vpow.pop %v3384
        %v3386 = vmul.f32 %v2959, 1.442695
        %v3387 = vpow.pop %v3386
        %v3388 = vmul.f32 %v2960, 1.442695
        %v3389 = vpow.pop %v3388
        %v3390 = vmul.f32 %v2961, 1.442695
        %v3391 = vpow.pop %v3390
        %v3392 = vmul.f32 %v2962, 1.442695
        %v3393 = vpow.pop %v3392
        %v3394 = vmul.f32 %v2963, 1.442695
        %v3395 = vpow.pop %v3394
        %v3396 = vmul.f32 %v2964, 1.442695
        %v3397 = vpow.pop %v3396
        %v3398 = vmul.f32 %v2965, 1.442695
        %v3399 = vpow.pop %v3398
        %v3400 = vmul.f32 %v2966, 1.442695
        %v3401 = vpow.pop %v3400
        %v3402 = vmul.f32 %v2967, 1.442695
        %v3403 = vpow.pop %v3402
        %v3404 = vmul.f32 %v2968, 1.442695
        %v3405 = vpow.pop %v3404
        %v3406 = vmul.f32 %v2969, 1.442695
        %v3407 = vpow.pop %v3406
        %v3408 = vmul.f32 %v2970, 1.442695
        %v3409 = vpow.pop %v3408
        %v3410 = vmul.f32 %v2971, 1.442695
        %v3411 = vpow.pop %v3410
        %v3412 = vmul.f32 %v2972, 1.442695
        %v3413 = vpow.pop %v3412
        %v3414 = vmul.f32 %v2973, 1.442695
        %v3415 = vpow.pop %v3414
        %v3416 = vmul.f32 %v2974, 1.442695
        %v3417 = vpow.pop %v3416
        %v3418 = vmul.f32 %v2975, 1.442695
        %v3419 = vpow.pop %v3418
        %v3420 = vmul.f32 %v2976, 1.442695
        %v3421 = vpow.pop %v3420
        %v3422 = vmul.f32 %v2977, 1.442695
        %v3423 = vpow.pop %v3422
        %v3424 = vmul.f32 %v2978, 1.442695
        %v3425 = vpow.pop %v3424
        %v3426 = vmul.f32 %v2979, 1.442695
        %v3427 = vpow.pop %v3426
        %v3428 = vmul.f32 %v2980, 1.442695
        %v3429 = vpow.pop %v3428
        %v3430 = vmul.f32 %v2981, 1.442695
        %v3431 = vpow.pop %v3430
        %v3432 = vmul.f32 %v2982, 1.442695
        %v3433 = vpow.pop %v3432
        %v3434 = vmul.f32 %v2983, 1.442695
        %v3435 = vpow.pop %v3434
        %v3436 = vmul.f32 %v2984, 1.442695
        %v3437 = vpow.pop %v3436
        %v3438 = vmul.f32 %v2985, 1.442695
        %v3439 = vpow.pop %v3438
        %v3440 = vmul.f32 %v2986, 1.442695
        %v3441 = vpow.pop %v3440
        %v3442 = vmul.f32 %v2987, 1.442695
        %v3443 = vpow.pop %v3442
        %v3444 = vmul.f32 %v2988, 1.442695
        %v3445 = vpow.pop %v3444
        %v3446 = vmul.f32 %v2989, 1.442695
        %v3447 = vpow.pop %v3446
        %v3448 = vmul.f32 %v2990, 1.442695
        %v3449 = vpow.pop %v3448
        %v3450 = vmul.f32 %v2991, 1.442695
        %v3451 = vpow.pop %v3450
        %v3452 = vmul.f32 %v2992, 1.442695
        %v3453 = vpow.pop %v3452
        %v3454 = vmul.f32 %v2993, 1.442695
        %v3455 = vpow.pop %v3454
        %v3456 = vmul.f32 %v2994, 1.442695
        %v3457 = vpow.pop %v3456
        %v3458 = vmul.f32 %v2995, 1.442695
        %v3459 = vpow.pop %v3458
        %v3460 = vmul.f32 %v2996, 1.442695
        %v3461 = vpow.pop %v3460
        %v3462 = vmul.f32 %v2997, 1.442695
        %v3463 = vpow.pop %v3462
        %v3464 = vmul.f32 %v2998, 1.442695
        %v3465 = vpow.pop %v3464
        %v3466 = vmul.f32 %v2999, 1.442695
        %v3467 = vpow.pop %v3466
        %v3468 = vmul.f32 %v3000, 1.442695
        %v3469 = vpow.pop %v3468
        %v3470 = vmul.f32 %v3001, 1.442695
        %v3471 = vpow.pop %v3470
        %v3472 = vmul.f32 %v3002, 1.442695
        %v3473 = vpow.pop %v3472
        %v3474 = vmul.f32 %v3003, 1.442695
        %v3475 = vpow.pop %v3474
        %v3476 = vmul.f32 %v3004, 1.442695
        %v3477 = vpow.pop %v3476
        %v3478 = vmul.f32 %v3005, 1.442695
        %v3479 = vpow.pop %v3478
        %v3480 = vmul.f32 %v3006, 1.442695
        %v3481 = vpow.pop %v3480
        %v3482 = vmul.f32 %v3007, 1.442695
        %v3483 = vpow.pop %v3482
        %v3484 = vmul.f32 %v3008, 1.442695
        %v3485 = vpow.pop %v3484
        %v3486 = vmul.f32 %v3009, 1.442695
        %v3487 = vpow.pop %v3486
        %v3488 = vmul.f32 %v3010, 1.442695
        %v3489 = vpow.pop %v3488
        %v3490 = vmul.f32 %v3011, 1.442695
        %v3491 = vpow.pop %v3490
        %v3492 = vmul.f32 %v3012, 1.442695
        %v3493 = vpow.pop %v3492
        %v3494 = vmul.f32 %v3013, 1.442695
        %v3495 = vpow.pop %v3494
        %v3496 = vmul.f32 %v3014, 1.442695
        %v3497 = vpow.pop %v3496
        %v3498 = vmul.f32 %v3015, 1.442695
        %v3499 = vpow.pop %v3498
        %v3500 = vmul.f32 %v3016, 1.442695
        %v3501 = vpow.pop %v3500
        %v3502 = vmul.f32 %v3017, 1.442695
        %v3503 = vpow.pop %v3502
        %v3504 = vmul.f32 %v3018, 1.442695
        %v3505 = vpow.pop %v3504
        %v3506 = vmul.f32 %v3019, 1.442695
        %v3507 = vpow.pop %v3506
        %v3508 = vmul.f32 %v3020, 1.442695
        %v3509 = vpow.pop %v3508
        %v3510 = vmul.f32 %v3021, 1.442695
        %v3511 = vpow.pop %v3510
        %v3512 = vmul.f32 %v3022, 1.442695
        %v3513 = vpow.pop %v3512
        %v3514 = vmul.f32 %v3023, 1.442695
        %v3515 = vpow.pop %v3514
        %v3516 = vmul.f32 %v3024, 1.442695
        %v3517 = vpow.pop %v3516
        %v3518 = vmul.f32 %v3025, 1.442695
        %v3519 = vpow.pop %v3518
        %v3520 = vmul.f32 %v3026, 1.442695
        %v3521 = vpow.pop %v3520
        %v3522 = vmul.f32 %v3027, 1.442695
        %v3523 = vpow.pop %v3522
        %v3524 = vmul.f32 %v3028, 1.442695
        %v3525 = vpow.pop %v3524
        %v3526 = vmul.f32 %v3029, 1.442695
        %v3527 = vpow.pop %v3526
        %v3528 = vmul.f32 %v3030, 1.442695
        %v3529 = vpow.pop %v3528
        %v3530 = vmul.f32 %v3031, 1.442695
        %v3531 = vpow.pop %v3530
        %v3532 = vmul.f32 %v3032, 1.442695
        %v3533 = vpow.pop %v3532
        %v3534 = vmul.f32 %v3033, 1.442695
        %v3535 = vpow.pop %v3534
        %v3536 = vmul.f32 %v3034, 1.442695
        %v3537 = vpow.pop %v3536
        %v3538 = vmul.f32 %v3035, 1.442695
        %v3539 = vpow.pop %v3538
        %v3540 = vmul.f32 %v3036, 1.442695
        %v3541 = vpow.pop %v3540
        %v3542 = vmul.f32 %v3037, 1.442695
        %v3543 = vpow.pop %v3542
        %v3544 = vmul.f32 %v3038, 1.442695
        %v3545 = vpow.pop %v3544
        %v3546 = vmul.f32 %v3039, 1.442695
        %v3547 = vpow.pop %v3546
        %v3548 = vmul.f32 %v3040, 1.442695
        %v3549 = vpow.pop %v3548
        %v3550 = vmul.f32 %v3041, 1.442695
        %v3551 = vpow.pop %v3550
        %v3552 = vmul.f32 %v3042, 1.442695
        %v3553 = vpow.pop %v3552
        %v3554 = vmul.f32 %v3043, 1.442695
        %v3555 = vpow.pop %v3554
        %v3557 = vcombine.high %v2406, %v2406
        %v3559 = vunpack.c.l.s4 1966171168
        %v3560 = vunpack.c.0.s8 %v3559
        %v3561 = vlaneseq
        %v3562 = vshrl.u32 %v3561, 7
        %v3563 = vsub.s32 %v3560, %v3562
        %v3564 = vrot.slane %v2406, %v3563
        %v3566 = vunpack.c.l.s4 1966171168
        %v3567 = vunpack.c.0.s8 %v3566
        %v3568 = vlaneseq
        %v3569 = vshrl.u32 %v3568, 7
        %v3570 = vsub.s32 %v3567, %v3569
        %v3571 = vrot.slane %v3557, %v3570
        %v3572 = vcombine.high %v3564, %v3564
        %v3573 = vcombine.high %v3571, %v3571
        %v3575 = vunpack.c.l.s4 1966171168
        %v3576 = vunpack.c.0.s8 %v3575
        %v3577 = vlaneseq
        %v3578 = vshrl.u32 %v3577, 7
        %v3579 = vsub.s32 %v3576, %v3578
        %v3580 = vrot.slane %v3564, %v3579
        %v3582 = vunpack.c.l.s4 1966171168
        %v3583 = vunpack.c.0.s8 %v3582
        %v3584 = vlaneseq
        %v3585 = vshrl.u32 %v3584, 7
        %v3586 = vsub.s32 %v3583, %v3585
        %v3587 = vrot.slane %v3571, %v3586
        %v3589 = vunpack.c.l.s4 1966171168
        %v3590 = vunpack.c.0.s8 %v3589
        %v3591 = vlaneseq
        %v3592 = vshrl.u32 %v3591, 7
        %v3593 = vsub.s32 %v3590, %v3592
        %v3594 = vrot.slane %v3572, %v3593
        %v3596 = vunpack.c.l.s4 1966171168
        %v3597 = vunpack.c.0.s8 %v3596
        %v3598 = vlaneseq
        %v3599 = vshrl.u32 %v3598, 7
        %v3600 = vsub.s32 %v3597, %v3599
        %v3601 = vrot.slane %v3573, %v3600
        %v3602 = vcombine.high %v3580, %v3580
        %v3603 = vcombine.high %v3587, %v3587
        %v3604 = vcombine.high %v3594, %v3594
        %v3605 = vcombine.high %v3601, %v3601
        %v3606 = vlaneseq
        %v3607 = vshrl.u32 %v3606, 7
        %v3608 = vsub.s32 0, %v3607
        %v3609 = vrot.slane %v3580, %v3608
        %v3610 = vlaneseq
        %v3611 = vshrl.u32 %v3610, 7
        %v3612 = vsub.s32 0, %v3611
        %v3613 = vrot.slane %v3594, %v3612
        %v3614 = vlaneseq
        %v3615 = vshrl.u32 %v3614, 7
        %v3616 = vsub.s32 0, %v3615
        %v3617 = vrot.slane %v3602, %v3616
        %v3618 = vlaneseq
        %v3619 = vshrl.u32 %v3618, 7
        %v3620 = vsub.s32 0, %v3619
        %v3621 = vrot.slane %v3604, %v3620
        %v3622 = vlaneseq
        %v3623 = vshrl.u32 %v3622, 7
        %v3624 = vsub.s32 0, %v3623
        %v3625 = vrot.slane %v3587, %v3624
        %v3626 = vlaneseq
        %v3627 = vshrl.u32 %v3626, 7
        %v3628 = vsub.s32 0, %v3627
        %v3629 = vrot.slane %v3601, %v3628
        %v3630 = vlaneseq
        %v3631 = vshrl.u32 %v3630, 7
        %v3632 = vsub.s32 0, %v3631
        %v3633 = vrot.slane %v3603, %v3632
        %v3634 = vlaneseq
        %v3635 = vshrl.u32 %v3634, 7
        %v3636 = vsub.s32 0, %v3635
        %v3637 = vrot.slane %v3605, %v3636
        %v3646 = vmul.f32 %v3609, %v3045
        %v3647 = vmul.f32 %v3609, %v3047
        %v3648 = vmul.f32 %v3609, %v3049
        %v3649 = vmul.f32 %v3609, %v3051
        %v3650 = vmul.f32 %v3609, %v3053
        %v3651 = vmul.f32 %v3609, %v3055
        %v3652 = vmul.f32 %v3609, %v3057
        %v3653 = vmul.f32 %v3609, %v3059
        %v3654 = vmul.f32 %v3609, %v3061
        %v3655 = vmul.f32 %v3609, %v3063
        %v3656 = vmul.f32 %v3609, %v3065
        %v3657 = vmul.f32 %v3609, %v3067
        %v3658 = vmul.f32 %v3609, %v3069
        %v3659 = vmul.f32 %v3609, %v3071
        %v3660 = vmul.f32 %v3609, %v3073
        %v3661 = vmul.f32 %v3609, %v3075
        %v3662 = vmul.f32 %v3613, %v3077
        %v3663 = vmul.f32 %v3613, %v3079
        %v3664 = vmul.f32 %v3613, %v3081
        %v3665 = vmul.f32 %v3613, %v3083
        %v3666 = vmul.f32 %v3613, %v3085
        %v3667 = vmul.f32 %v3613, %v3087
        %v3668 = vmul.f32 %v3613, %v3089
        %v3669 = vmul.f32 %v3613, %v3091
        %v3670 = vmul.f32 %v3613, %v3093
        %v3671 = vmul.f32 %v3613, %v3095
        %v3672 = vmul.f32 %v3613, %v3097
        %v3673 = vmul.f32 %v3613, %v3099
        %v3674 = vmul.f32 %v3613, %v3101
        %v3675 = vmul.f32 %v3613, %v3103
        %v3676 = vmul.f32 %v3613, %v3105
        %v3677 = vmul.f32 %v3613, %v3107
        %v3678 = vmul.f32 %v3617, %v3109
        %v3679 = vmul.f32 %v3617, %v3111
        %v3680 = vmul.f32 %v3617, %v3113
        %v3681 = vmul.f32 %v3617, %v3115
        %v3682 = vmul.f32 %v3617, %v3117
        %v3683 = vmul.f32 %v3617, %v3119
        %v3684 = vmul.f32 %v3617, %v3121
        %v3685 = vmul.f32 %v3617, %v3123
        %v3686 = vmul.f32 %v3617, %v3125
        %v3687 = vmul.f32 %v3617, %v3127
        %v3688 = vmul.f32 %v3617, %v3129
        %v3689 = vmul.f32 %v3617, %v3131
        %v3690 = vmul.f32 %v3617, %v3133
        %v3691 = vmul.f32 %v3617, %v3135
        %v3692 = vmul.f32 %v3617, %v3137
        %v3693 = vmul.f32 %v3617, %v3139
        %v3694 = vmul.f32 %v3621, %v3141
        %v3695 = vmul.f32 %v3621, %v3143
        %v3696 = vmul.f32 %v3621, %v3145
        %v3697 = vmul.f32 %v3621, %v3147
        %v3698 = vmul.f32 %v3621, %v3149
        %v3699 = vmul.f32 %v3621, %v3151
        %v3700 = vmul.f32 %v3621, %v3153
        %v3701 = vmul.f32 %v3621, %v3155
        %v3702 = vmul.f32 %v3621, %v3157
        %v3703 = vmul.f32 %v3621, %v3159
        %v3704 = vmul.f32 %v3621, %v3161
        %v3705 = vmul.f32 %v3621, %v3163
        %v3706 = vmul.f32 %v3621, %v3165
        %v3707 = vmul.f32 %v3621, %v3167
        %v3708 = vmul.f32 %v3621, %v3169
        %v3709 = vmul.f32 %v3621, %v3171
        %v3710 = vmul.f32 %v3625, %v3173
        %v3711 = vmul.f32 %v3625, %v3175
        %v3712 = vmul.f32 %v3625, %v3177
        %v3713 = vmul.f32 %v3625, %v3179
        %v3714 = vmul.f32 %v3625, %v3181
        %v3715 = vmul.f32 %v3625, %v3183
        %v3716 = vmul.f32 %v3625, %v3185
        %v3717 = vmul.f32 %v3625, %v3187
        %v3718 = vmul.f32 %v3625, %v3189
        %v3719 = vmul.f32 %v3625, %v3191
        %v3720 = vmul.f32 %v3625, %v3193
        %v3721 = vmul.f32 %v3625, %v3195
        %v3722 = vmul.f32 %v3625, %v3197
        %v3723 = vmul.f32 %v3625, %v3199
        %v3724 = vmul.f32 %v3625, %v3201
        %v3725 = vmul.f32 %v3625, %v3203
        %v3726 = vmul.f32 %v3629, %v3205
        %v3727 = vmul.f32 %v3629, %v3207
        %v3728 = vmul.f32 %v3629, %v3209
        %v3729 = vmul.f32 %v3629, %v3211
        %v3730 = vmul.f32 %v3629, %v3213
        %v3731 = vmul.f32 %v3629, %v3215
        %v3732 = vmul.f32 %v3629, %v3217
        %v3733 = vmul.f32 %v3629, %v3219
        %v3734 = vmul.f32 %v3629, %v3221
        %v3735 = vmul.f32 %v3629, %v3223
        %v3736 = vmul.f32 %v3629, %v3225
        %v3737 = vmul.f32 %v3629, %v3227
        %v3738 = vmul.f32 %v3629, %v3229
        %v3739 = vmul.f32 %v3629, %v3231
        %v3740 = vmul.f32 %v3629, %v3233
        %v3741 = vmul.f32 %v3629, %v3235
        %v3742 = vmul.f32 %v3633, %v3237
        %v3743 = vmul.f32 %v3633, %v3239
        %v3744 = vmul.f32 %v3633, %v3241
        %v3745 = vmul.f32 %v3633, %v3243
        %v3746 = vmul.f32 %v3633, %v3245
        %v3747 = vmul.f32 %v3633, %v3247
        %v3748 = vmul.f32 %v3633, %v3249
        %v3749 = vmul.f32 %v3633, %v3251
        %v3750 = vmul.f32 %v3633, %v3253
        %v3751 = vmul.f32 %v3633, %v3255
        %v3752 = vmul.f32 %v3633, %v3257
        %v3753 = vmul.f32 %v3633, %v3259
        %v3754 = vmul.f32 %v3633, %v3261
        %v3755 = vmul.f32 %v3633, %v3263
        %v3756 = vmul.f32 %v3633, %v3265
        %v3757 = vmul.f32 %v3633, %v3267
        %v3758 = vmul.f32 %v3637, %v3269
        %v3759 = vmul.f32 %v3637, %v3271
        %v3760 = vmul.f32 %v3637, %v3273
        %v3761 = vmul.f32 %v3637, %v3275
        %v3762 = vmul.f32 %v3637, %v3277
        %v3763 = vmul.f32 %v3637, %v3279
        %v3764 = vmul.f32 %v3637, %v3281
        %v3765 = vmul.f32 %v3637, %v3283
        %v3766 = vmul.f32 %v3637, %v3285
        %v3767 = vmul.f32 %v3637, %v3287
        %v3768 = vmul.f32 %v3637, %v3289
        %v3769 = vmul.f32 %v3637, %v3291
        %v3770 = vmul.f32 %v3637, %v3293
        %v3771 = vmul.f32 %v3637, %v3295
        %v3772 = vmul.f32 %v3637, %v3297
        %v3773 = vmul.f32 %v3637, %v3299
        %v3774 = vmul.f32 %v3609, %v3301
        %v3775 = vmul.f32 %v3609, %v3303
        %v3776 = vmul.f32 %v3609, %v3305
        %v3777 = vmul.f32 %v3609, %v3307
        %v3778 = vmul.f32 %v3609, %v3309
        %v3779 = vmul.f32 %v3609, %v3311
        %v3780 = vmul.f32 %v3609, %v3313
        %v3781 = vmul.f32 %v3609, %v3315
        %v3782 = vmul.f32 %v3609, %v3317
        %v3783 = vmul.f32 %v3609, %v3319
        %v3784 = vmul.f32 %v3609, %v3321
        %v3785 = vmul.f32 %v3609, %v3323
        %v3786 = vmul.f32 %v3609, %v3325
        %v3787 = vmul.f32 %v3609, %v3327
        %v3788 = vmul.f32 %v3609, %v3329
        %v3789 = vmul.f32 %v3609, %v3331
        %v3790 = vmul.f32 %v3613, %v3333
        %v3791 = vmul.f32 %v3613, %v3335
        %v3792 = vmul.f32 %v3613, %v3337
        %v3793 = vmul.f32 %v3613, %v3339
        %v3794 = vmul.f32 %v3613, %v3341
        %v3795 = vmul.f32 %v3613, %v3343
        %v3796 = vmul.f32 %v3613, %v3345
        %v3797 = vmul.f32 %v3613, %v3347
        %v3798 = vmul.f32 %v3613, %v3349
        %v3799 = vmul.f32 %v3613, %v3351
        %v3800 = vmul.f32 %v3613, %v3353
        %v3801 = vmul.f32 %v3613, %v3355
        %v3802 = vmul.f32 %v3613, %v3357
        %v3803 = vmul.f32 %v3613, %v3359
        %v3804 = vmul.f32 %v3613, %v3361
        %v3805 = vmul.f32 %v3613, %v3363
        %v3806 = vmul.f32 %v3617, %v3365
        %v3807 = vmul.f32 %v3617, %v3367
        %v3808 = vmul.f32 %v3617, %v3369
        %v3809 = vmul.f32 %v3617, %v3371
        %v3810 = vmul.f32 %v3617, %v3373
        %v3811 = vmul.f32 %v3617, %v3375
        %v3812 = vmul.f32 %v3617, %v3377
        %v3813 = vmul.f32 %v3617, %v3379
        %v3814 = vmul.f32 %v3617, %v3381
        %v3815 = vmul.f32 %v3617, %v3383
        %v3816 = vmul.f32 %v3617, %v3385
        %v3817 = vmul.f32 %v3617, %v3387
        %v3818 = vmul.f32 %v3617, %v3389
        %v3819 = vmul.f32 %v3617, %v3391
        %v3820 = vmul.f32 %v3617, %v3393
        %v3821 = vmul.f32 %v3617, %v3395
        %v3822 = vmul.f32 %v3621, %v3397
        %v3823 = vmul.f32 %v3621, %v3399
        %v3824 = vmul.f32 %v3621, %v3401
        %v3825 = vmul.f32 %v3621, %v3403
        %v3826 = vmul.f32 %v3621, %v3405
        %v3827 = vmul.f32 %v3621, %v3407
        %v3828 = vmul.f32 %v3621, %v3409
        %v3829 = vmul.f32 %v3621, %v3411
        %v3830 = vmul.f32 %v3621, %v3413
        %v3831 = vmul.f32 %v3621, %v3415
        %v3832 = vmul.f32 %v3621, %v3417
        %v3833 = vmul.f32 %v3621, %v3419
        %v3834 = vmul.f32 %v3621, %v3421
        %v3835 = vmul.f32 %v3621, %v3423
        %v3836 = vmul.f32 %v3621, %v3425
        %v3837 = vmul.f32 %v3621, %v3427
        %v3838 = vmul.f32 %v3625, %v3429
        %v3839 = vmul.f32 %v3625, %v3431
        %v3840 = vmul.f32 %v3625, %v3433
        %v3841 = vmul.f32 %v3625, %v3435
        %v3842 = vmul.f32 %v3625, %v3437
        %v3843 = vmul.f32 %v3625, %v3439
        %v3844 = vmul.f32 %v3625, %v3441
        %v3845 = vmul.f32 %v3625, %v3443
        %v3846 = vmul.f32 %v3625, %v3445
        %v3847 = vmul.f32 %v3625, %v3447
        %v3848 = vmul.f32 %v3625, %v3449
        %v3849 = vmul.f32 %v3625, %v3451
        %v3850 = vmul.f32 %v3625, %v3453
        %v3851 = vmul.f32 %v3625, %v3455
        %v3852 = vmul.f32 %v3625, %v3457
        %v3853 = vmul.f32 %v3625, %v3459
        %v3854 = vmul.f32 %v3629, %v3461
        %v3855 = vmul.f32 %v3629, %v3463
        %v3856 = vmul.f32 %v3629, %v3465
        %v3857 = vmul.f32 %v3629, %v3467
        %v3858 = vmul.f32 %v3629, %v3469
        %v3859 = vmul.f32 %v3629, %v3471
        %v3860 = vmul.f32 %v3629, %v3473
        %v3861 = vmul.f32 %v3629, %v3475
        %v3862 = vmul.f32 %v3629, %v3477
        %v3863 = vmul.f32 %v3629, %v3479
        %v3864 = vmul.f32 %v3629, %v3481
        %v3865 = vmul.f32 %v3629, %v3483
        %v3866 = vmul.f32 %v3629, %v3485
        %v3867 = vmul.f32 %v3629, %v3487
        %v3868 = vmul.f32 %v3629, %v3489
        %v3869 = vmul.f32 %v3629, %v3491
        %v3870 = vmul.f32 %v3633, %v3493
        %v3871 = vmul.f32 %v3633, %v3495
        %v3872 = vmul.f32 %v3633, %v3497
        %v3873 = vmul.f32 %v3633, %v3499
        %v3874 = vmul.f32 %v3633, %v3501
        %v3875 = vmul.f32 %v3633, %v3503
        %v3876 = vmul.f32 %v3633, %v3505
        %v3877 = vmul.f32 %v3633, %v3507
        %v3878 = vmul.f32 %v3633, %v3509
        %v3879 = vmul.f32 %v3633, %v3511
        %v3880 = vmul.f32 %v3633, %v3513
        %v3881 = vmul.f32 %v3633, %v3515
        %v3882 = vmul.f32 %v3633, %v3517
        %v3883 = vmul.f32 %v3633, %v3519
        %v3884 = vmul.f32 %v3633, %v3521
        %v3885 = vmul.f32 %v3633, %v3523
        %v3886 = vmul.f32 %v3637, %v3525
        %v3887 = vmul.f32 %v3637, %v3527
        %v3888 = vmul.f32 %v3637, %v3529
        %v3889 = vmul.f32 %v3637, %v3531
        %v3890 = vmul.f32 %v3637, %v3533
        %v3891 = vmul.f32 %v3637, %v3535
        %v3892 = vmul.f32 %v3637, %v3537
        %v3893 = vmul.f32 %v3637, %v3539
        %v3894 = vmul.f32 %v3637, %v3541
        %v3895 = vmul.f32 %v3637, %v3543
        %v3896 = vmul.f32 %v3637, %v3545
        %v3897 = vmul.f32 %v3637, %v3547
        %v3898 = vmul.f32 %v3637, %v3549
        %v3899 = vmul.f32 %v3637, %v3551
        %v3900 = vmul.f32 %v3637, %v3553
        %v3901 = vmul.f32 %v3637, %v3555
        %3902 = vadd.xlane.f32.xlu0 %v3646
        %v3903 = vpop.xlane.xlu0 %3902
        %3904 = vadd.xlane.f32.xlu0 %v3647
        %v3905 = vpop.xlane.xlu0 %3904
        %3906 = vadd.xlane.f32.xlu0 %v3648
        %v3907 = vpop.xlane.xlu0 %3906
        %3908 = vadd.xlane.f32.xlu0 %v3649
        %v3909 = vpop.xlane.xlu0 %3908
        %3910 = vadd.xlane.f32.xlu0 %v3650
        %v3911 = vpop.xlane.xlu0 %3910
        %3912 = vadd.xlane.f32.xlu0 %v3651
        %v3913 = vpop.xlane.xlu0 %3912
        %3914 = vadd.xlane.f32.xlu0 %v3652
        %v3915 = vpop.xlane.xlu0 %3914
        %3916 = vadd.xlane.f32.xlu0 %v3653
        %v3917 = vpop.xlane.xlu0 %3916
        %3918 = vadd.xlane.f32.xlu0 %v3654
        %v3919 = vpop.xlane.xlu0 %3918
        %3920 = vadd.xlane.f32.xlu0 %v3655
        %v3921 = vpop.xlane.xlu0 %3920
        %3922 = vadd.xlane.f32.xlu0 %v3656
        %v3923 = vpop.xlane.xlu0 %3922
        %3924 = vadd.xlane.f32.xlu0 %v3657
        %v3925 = vpop.xlane.xlu0 %3924
        %3926 = vadd.xlane.f32.xlu0 %v3658
        %v3927 = vpop.xlane.xlu0 %3926
        %3928 = vadd.xlane.f32.xlu0 %v3659
        %v3929 = vpop.xlane.xlu0 %3928
        %3930 = vadd.xlane.f32.xlu0 %v3660
        %v3931 = vpop.xlane.xlu0 %3930
        %3932 = vadd.xlane.f32.xlu0 %v3661
        %v3933 = vpop.xlane.xlu0 %3932
        %3934 = vadd.xlane.f32.xlu0 %v3662
        %v3935 = vpop.xlane.xlu0 %3934
        %3936 = vadd.xlane.f32.xlu0 %v3663
        %v3937 = vpop.xlane.xlu0 %3936
        %3938 = vadd.xlane.f32.xlu0 %v3664
        %v3939 = vpop.xlane.xlu0 %3938
        %3940 = vadd.xlane.f32.xlu0 %v3665
        %v3941 = vpop.xlane.xlu0 %3940
        %3942 = vadd.xlane.f32.xlu0 %v3666
        %v3943 = vpop.xlane.xlu0 %3942
        %3944 = vadd.xlane.f32.xlu0 %v3667
        %v3945 = vpop.xlane.xlu0 %3944
        %3946 = vadd.xlane.f32.xlu0 %v3668
        %v3947 = vpop.xlane.xlu0 %3946
        %3948 = vadd.xlane.f32.xlu0 %v3669
        %v3949 = vpop.xlane.xlu0 %3948
        %3950 = vadd.xlane.f32.xlu0 %v3670
        %v3951 = vpop.xlane.xlu0 %3950
        %3952 = vadd.xlane.f32.xlu0 %v3671
        %v3953 = vpop.xlane.xlu0 %3952
        %3954 = vadd.xlane.f32.xlu0 %v3672
        %v3955 = vpop.xlane.xlu0 %3954
        %3956 = vadd.xlane.f32.xlu0 %v3673
        %v3957 = vpop.xlane.xlu0 %3956
        %3958 = vadd.xlane.f32.xlu0 %v3674
        %v3959 = vpop.xlane.xlu0 %3958
        %3960 = vadd.xlane.f32.xlu0 %v3675
        %v3961 = vpop.xlane.xlu0 %3960
        %3962 = vadd.xlane.f32.xlu0 %v3676
        %v3963 = vpop.xlane.xlu0 %3962
        %3964 = vadd.xlane.f32.xlu0 %v3677
        %v3965 = vpop.xlane.xlu0 %3964
        %3966 = vadd.xlane.f32.xlu0 %v3678
        %v3967 = vpop.xlane.xlu0 %3966
        %3968 = vadd.xlane.f32.xlu0 %v3679
        %v3969 = vpop.xlane.xlu0 %3968
        %3970 = vadd.xlane.f32.xlu0 %v3680
        %v3971 = vpop.xlane.xlu0 %3970
        %3972 = vadd.xlane.f32.xlu0 %v3681
        %v3973 = vpop.xlane.xlu0 %3972
        %3974 = vadd.xlane.f32.xlu0 %v3682
        %v3975 = vpop.xlane.xlu0 %3974
        %3976 = vadd.xlane.f32.xlu0 %v3683
        %v3977 = vpop.xlane.xlu0 %3976
        %3978 = vadd.xlane.f32.xlu0 %v3684
        %v3979 = vpop.xlane.xlu0 %3978
        %3980 = vadd.xlane.f32.xlu0 %v3685
        %v3981 = vpop.xlane.xlu0 %3980
        %3982 = vadd.xlane.f32.xlu0 %v3686
        %v3983 = vpop.xlane.xlu0 %3982
        %3984 = vadd.xlane.f32.xlu0 %v3687
        %v3985 = vpop.xlane.xlu0 %3984
        %3986 = vadd.xlane.f32.xlu0 %v3688
        %v3987 = vpop.xlane.xlu0 %3986
        %3988 = vadd.xlane.f32.xlu0 %v3689
        %v3989 = vpop.xlane.xlu0 %3988
        %3990 = vadd.xlane.f32.xlu0 %v3690
        %v3991 = vpop.xlane.xlu0 %3990
        %3992 = vadd.xlane.f32.xlu0 %v3691
        %v3993 = vpop.xlane.xlu0 %3992
        %3994 = vadd.xlane.f32.xlu0 %v3692
        %v3995 = vpop.xlane.xlu0 %3994
        %3996 = vadd.xlane.f32.xlu0 %v3693
        %v3997 = vpop.xlane.xlu0 %3996
        %3998 = vadd.xlane.f32.xlu0 %v3694
        %v3999 = vpop.xlane.xlu0 %3998
        %4000 = vadd.xlane.f32.xlu0 %v3695
        %v4001 = vpop.xlane.xlu0 %4000
        %4002 = vadd.xlane.f32.xlu0 %v3696
        %v4003 = vpop.xlane.xlu0 %4002
        %4004 = vadd.xlane.f32.xlu0 %v3697
        %v4005 = vpop.xlane.xlu0 %4004
        %4006 = vadd.xlane.f32.xlu0 %v3698
        %v4007 = vpop.xlane.xlu0 %4006
        %4008 = vadd.xlane.f32.xlu0 %v3699
        %v4009 = vpop.xlane.xlu0 %4008
        %4010 = vadd.xlane.f32.xlu0 %v3700
        %v4011 = vpop.xlane.xlu0 %4010
        %4012 = vadd.xlane.f32.xlu0 %v3701
        %v4013 = vpop.xlane.xlu0 %4012
        %4014 = vadd.xlane.f32.xlu0 %v3702
        %v4015 = vpop.xlane.xlu0 %4014
        %4016 = vadd.xlane.f32.xlu0 %v3703
        %v4017 = vpop.xlane.xlu0 %4016
        %4018 = vadd.xlane.f32.xlu0 %v3704
        %v4019 = vpop.xlane.xlu0 %4018
        %4020 = vadd.xlane.f32.xlu0 %v3705
        %v4021 = vpop.xlane.xlu0 %4020
        %4022 = vadd.xlane.f32.xlu0 %v3706
        %v4023 = vpop.xlane.xlu0 %4022
        %4024 = vadd.xlane.f32.xlu0 %v3707
        %v4025 = vpop.xlane.xlu0 %4024
        %4026 = vadd.xlane.f32.xlu0 %v3708
        %v4027 = vpop.xlane.xlu0 %4026
        %4028 = vadd.xlane.f32.xlu0 %v3709
        %v4029 = vpop.xlane.xlu0 %4028
        %4030 = vadd.xlane.f32.xlu0 %v3710
        %v4031 = vpop.xlane.xlu0 %4030
        %4032 = vadd.xlane.f32.xlu0 %v3711
        %v4033 = vpop.xlane.xlu0 %4032
        %4034 = vadd.xlane.f32.xlu0 %v3712
        %v4035 = vpop.xlane.xlu0 %4034
        %4036 = vadd.xlane.f32.xlu0 %v3713
        %v4037 = vpop.xlane.xlu0 %4036
        %4038 = vadd.xlane.f32.xlu0 %v3714
        %v4039 = vpop.xlane.xlu0 %4038
        %4040 = vadd.xlane.f32.xlu0 %v3715
        %v4041 = vpop.xlane.xlu0 %4040
        %4042 = vadd.xlane.f32.xlu0 %v3716
        %v4043 = vpop.xlane.xlu0 %4042
        %4044 = vadd.xlane.f32.xlu0 %v3717
        %v4045 = vpop.xlane.xlu0 %4044
        %4046 = vadd.xlane.f32.xlu0 %v3718
        %v4047 = vpop.xlane.xlu0 %4046
        %4048 = vadd.xlane.f32.xlu0 %v3719
        %v4049 = vpop.xlane.xlu0 %4048
        %4050 = vadd.xlane.f32.xlu0 %v3720
        %v4051 = vpop.xlane.xlu0 %4050
        %4052 = vadd.xlane.f32.xlu0 %v3721
        %v4053 = vpop.xlane.xlu0 %4052
        %4054 = vadd.xlane.f32.xlu0 %v3722
        %v4055 = vpop.xlane.xlu0 %4054
        %4056 = vadd.xlane.f32.xlu0 %v3723
        %v4057 = vpop.xlane.xlu0 %4056
        %4058 = vadd.xlane.f32.xlu0 %v3724
        %v4059 = vpop.xlane.xlu0 %4058
        %4060 = vadd.xlane.f32.xlu0 %v3725
        %v4061 = vpop.xlane.xlu0 %4060
        %4062 = vadd.xlane.f32.xlu0 %v3726
        %v4063 = vpop.xlane.xlu0 %4062
        %4064 = vadd.xlane.f32.xlu0 %v3727
        %v4065 = vpop.xlane.xlu0 %4064
        %4066 = vadd.xlane.f32.xlu0 %v3728
        %v4067 = vpop.xlane.xlu0 %4066
        %4068 = vadd.xlane.f32.xlu0 %v3729
        %v4069 = vpop.xlane.xlu0 %4068
        %4070 = vadd.xlane.f32.xlu0 %v3730
        %v4071 = vpop.xlane.xlu0 %4070
        %4072 = vadd.xlane.f32.xlu0 %v3731
        %v4073 = vpop.xlane.xlu0 %4072
        %4074 = vadd.xlane.f32.xlu0 %v3732
        %v4075 = vpop.xlane.xlu0 %4074
        %4076 = vadd.xlane.f32.xlu0 %v3733
        %v4077 = vpop.xlane.xlu0 %4076
        %4078 = vadd.xlane.f32.xlu0 %v3734
        %v4079 = vpop.xlane.xlu0 %4078
        %4080 = vadd.xlane.f32.xlu0 %v3735
        %v4081 = vpop.xlane.xlu0 %4080
        %4082 = vadd.xlane.f32.xlu0 %v3736
        %v4083 = vpop.xlane.xlu0 %4082
        %4084 = vadd.xlane.f32.xlu0 %v3737
        %v4085 = vpop.xlane.xlu0 %4084
        %4086 = vadd.xlane.f32.xlu0 %v3738
        %v4087 = vpop.xlane.xlu0 %4086
        %4088 = vadd.xlane.f32.xlu0 %v3739
        %v4089 = vpop.xlane.xlu0 %4088
        %4090 = vadd.xlane.f32.xlu0 %v3740
        %v4091 = vpop.xlane.xlu0 %4090
        %4092 = vadd.xlane.f32.xlu0 %v3741
        %v4093 = vpop.xlane.xlu0 %4092
        %4094 = vadd.xlane.f32.xlu0 %v3742
        %v4095 = vpop.xlane.xlu0 %4094
        %4096 = vadd.xlane.f32.xlu0 %v3743
        %v4097 = vpop.xlane.xlu0 %4096
        %4098 = vadd.xlane.f32.xlu0 %v3744
        %v4099 = vpop.xlane.xlu0 %4098
        %4100 = vadd.xlane.f32.xlu0 %v3745
        %v4101 = vpop.xlane.xlu0 %4100
        %4102 = vadd.xlane.f32.xlu0 %v3746
        %v4103 = vpop.xlane.xlu0 %4102
        %4104 = vadd.xlane.f32.xlu0 %v3747
        %v4105 = vpop.xlane.xlu0 %4104
        %4106 = vadd.xlane.f32.xlu0 %v3748
        %v4107 = vpop.xlane.xlu0 %4106
        %4108 = vadd.xlane.f32.xlu0 %v3749
        %v4109 = vpop.xlane.xlu0 %4108
        %4110 = vadd.xlane.f32.xlu0 %v3750
        %v4111 = vpop.xlane.xlu0 %4110
        %4112 = vadd.xlane.f32.xlu0 %v3751
        %v4113 = vpop.xlane.xlu0 %4112
        %4114 = vadd.xlane.f32.xlu0 %v3752
        %v4115 = vpop.xlane.xlu0 %4114
        %4116 = vadd.xlane.f32.xlu0 %v3753
        %v4117 = vpop.xlane.xlu0 %4116
        %4118 = vadd.xlane.f32.xlu0 %v3754
        %v4119 = vpop.xlane.xlu0 %4118
        %4120 = vadd.xlane.f32.xlu0 %v3755
        %v4121 = vpop.xlane.xlu0 %4120
        %4122 = vadd.xlane.f32.xlu0 %v3756
        %v4123 = vpop.xlane.xlu0 %4122
        %4124 = vadd.xlane.f32.xlu0 %v3757
        %v4125 = vpop.xlane.xlu0 %4124
        %4126 = vadd.xlane.f32.xlu0 %v3758
        %v4127 = vpop.xlane.xlu0 %4126
        %4128 = vadd.xlane.f32.xlu0 %v3759
        %v4129 = vpop.xlane.xlu0 %4128
        %4130 = vadd.xlane.f32.xlu0 %v3760
        %v4131 = vpop.xlane.xlu0 %4130
        %4132 = vadd.xlane.f32.xlu0 %v3761
        %v4133 = vpop.xlane.xlu0 %4132
        %4134 = vadd.xlane.f32.xlu0 %v3762
        %v4135 = vpop.xlane.xlu0 %4134
        %4136 = vadd.xlane.f32.xlu0 %v3763
        %v4137 = vpop.xlane.xlu0 %4136
        %4138 = vadd.xlane.f32.xlu0 %v3764
        %v4139 = vpop.xlane.xlu0 %4138
        %4140 = vadd.xlane.f32.xlu0 %v3765
        %v4141 = vpop.xlane.xlu0 %4140
        %4142 = vadd.xlane.f32.xlu0 %v3766
        %v4143 = vpop.xlane.xlu0 %4142
        %4144 = vadd.xlane.f32.xlu0 %v3767
        %v4145 = vpop.xlane.xlu0 %4144
        %4146 = vadd.xlane.f32.xlu0 %v3768
        %v4147 = vpop.xlane.xlu0 %4146
        %4148 = vadd.xlane.f32.xlu0 %v3769
        %v4149 = vpop.xlane.xlu0 %4148
        %4150 = vadd.xlane.f32.xlu0 %v3770
        %v4151 = vpop.xlane.xlu0 %4150
        %4152 = vadd.xlane.f32.xlu0 %v3771
        %v4153 = vpop.xlane.xlu0 %4152
        %4154 = vadd.xlane.f32.xlu0 %v3772
        %v4155 = vpop.xlane.xlu0 %4154
        %4156 = vadd.xlane.f32.xlu0 %v3773
        %v4157 = vpop.xlane.xlu0 %4156
        %4158 = vadd.xlane.f32.xlu0 %v3774
        %v4159 = vpop.xlane.xlu0 %4158
        %4160 = vadd.xlane.f32.xlu0 %v3775
        %v4161 = vpop.xlane.xlu0 %4160
        %4162 = vadd.xlane.f32.xlu0 %v3776
        %v4163 = vpop.xlane.xlu0 %4162
        %4164 = vadd.xlane.f32.xlu0 %v3777
        %v4165 = vpop.xlane.xlu0 %4164
        %4166 = vadd.xlane.f32.xlu0 %v3778
        %v4167 = vpop.xlane.xlu0 %4166
        %4168 = vadd.xlane.f32.xlu0 %v3779
        %v4169 = vpop.xlane.xlu0 %4168
        %4170 = vadd.xlane.f32.xlu0 %v3780
        %v4171 = vpop.xlane.xlu0 %4170
        %4172 = vadd.xlane.f32.xlu0 %v3781
        %v4173 = vpop.xlane.xlu0 %4172
        %4174 = vadd.xlane.f32.xlu0 %v3782
        %v4175 = vpop.xlane.xlu0 %4174
        %4176 = vadd.xlane.f32.xlu0 %v3783
        %v4177 = vpop.xlane.xlu0 %4176
        %4178 = vadd.xlane.f32.xlu0 %v3784
        %v4179 = vpop.xlane.xlu0 %4178
        %4180 = vadd.xlane.f32.xlu0 %v3785
        %v4181 = vpop.xlane.xlu0 %4180
        %4182 = vadd.xlane.f32.xlu0 %v3786
        %v4183 = vpop.xlane.xlu0 %4182
        %4184 = vadd.xlane.f32.xlu0 %v3787
        %v4185 = vpop.xlane.xlu0 %4184
        %4186 = vadd.xlane.f32.xlu0 %v3788
        %v4187 = vpop.xlane.xlu0 %4186
        %4188 = vadd.xlane.f32.xlu0 %v3789
        %v4189 = vpop.xlane.xlu0 %4188
        %4190 = vadd.xlane.f32.xlu0 %v3790
        %v4191 = vpop.xlane.xlu0 %4190
        %4192 = vadd.xlane.f32.xlu0 %v3791
        %v4193 = vpop.xlane.xlu0 %4192
        %4194 = vadd.xlane.f32.xlu0 %v3792
        %v4195 = vpop.xlane.xlu0 %4194
        %4196 = vadd.xlane.f32.xlu0 %v3793
        %v4197 = vpop.xlane.xlu0 %4196
        %4198 = vadd.xlane.f32.xlu0 %v3794
        %v4199 = vpop.xlane.xlu0 %4198
        %4200 = vadd.xlane.f32.xlu0 %v3795
        %v4201 = vpop.xlane.xlu0 %4200
        %4202 = vadd.xlane.f32.xlu0 %v3796
        %v4203 = vpop.xlane.xlu0 %4202
        %4204 = vadd.xlane.f32.xlu0 %v3797
        %v4205 = vpop.xlane.xlu0 %4204
        %4206 = vadd.xlane.f32.xlu0 %v3798
        %v4207 = vpop.xlane.xlu0 %4206
        %4208 = vadd.xlane.f32.xlu0 %v3799
        %v4209 = vpop.xlane.xlu0 %4208
        %4210 = vadd.xlane.f32.xlu0 %v3800
        %v4211 = vpop.xlane.xlu0 %4210
        %4212 = vadd.xlane.f32.xlu0 %v3801
        %v4213 = vpop.xlane.xlu0 %4212
        %4214 = vadd.xlane.f32.xlu0 %v3802
        %v4215 = vpop.xlane.xlu0 %4214
        %4216 = vadd.xlane.f32.xlu0 %v3803
        %v4217 = vpop.xlane.xlu0 %4216
        %4218 = vadd.xlane.f32.xlu0 %v3804
        %v4219 = vpop.xlane.xlu0 %4218
        %4220 = vadd.xlane.f32.xlu0 %v3805
        %v4221 = vpop.xlane.xlu0 %4220
        %4222 = vadd.xlane.f32.xlu0 %v3806
        %v4223 = vpop.xlane.xlu0 %4222
        %4224 = vadd.xlane.f32.xlu0 %v3807
        %v4225 = vpop.xlane.xlu0 %4224
        %4226 = vadd.xlane.f32.xlu0 %v3808
        %v4227 = vpop.xlane.xlu0 %4226
        %4228 = vadd.xlane.f32.xlu0 %v3809
        %v4229 = vpop.xlane.xlu0 %4228
        %4230 = vadd.xlane.f32.xlu0 %v3810
        %v4231 = vpop.xlane.xlu0 %4230
        %4232 = vadd.xlane.f32.xlu0 %v3811
        %v4233 = vpop.xlane.xlu0 %4232
        %4234 = vadd.xlane.f32.xlu0 %v3812
        %v4235 = vpop.xlane.xlu0 %4234
        %4236 = vadd.xlane.f32.xlu0 %v3813
        %v4237 = vpop.xlane.xlu0 %4236
        %4238 = vadd.xlane.f32.xlu0 %v3814
        %v4239 = vpop.xlane.xlu0 %4238
        %4240 = vadd.xlane.f32.xlu0 %v3815
        %v4241 = vpop.xlane.xlu0 %4240
        %4242 = vadd.xlane.f32.xlu0 %v3816
        %v4243 = vpop.xlane.xlu0 %4242
        %4244 = vadd.xlane.f32.xlu0 %v3817
        %v4245 = vpop.xlane.xlu0 %4244
        %4246 = vadd.xlane.f32.xlu0 %v3818
        %v4247 = vpop.xlane.xlu0 %4246
        %4248 = vadd.xlane.f32.xlu0 %v3819
        %v4249 = vpop.xlane.xlu0 %4248
        %4250 = vadd.xlane.f32.xlu0 %v3820
        %v4251 = vpop.xlane.xlu0 %4250
        %4252 = vadd.xlane.f32.xlu0 %v3821
        %v4253 = vpop.xlane.xlu0 %4252
        %4254 = vadd.xlane.f32.xlu0 %v3822
        %v4255 = vpop.xlane.xlu0 %4254
        %4256 = vadd.xlane.f32.xlu0 %v3823
        %v4257 = vpop.xlane.xlu0 %4256
        %4258 = vadd.xlane.f32.xlu0 %v3824
        %v4259 = vpop.xlane.xlu0 %4258
        %4260 = vadd.xlane.f32.xlu0 %v3825
        %v4261 = vpop.xlane.xlu0 %4260
        %4262 = vadd.xlane.f32.xlu0 %v3826
        %v4263 = vpop.xlane.xlu0 %4262
        %4264 = vadd.xlane.f32.xlu0 %v3827
        %v4265 = vpop.xlane.xlu0 %4264
        %4266 = vadd.xlane.f32.xlu0 %v3828
        %v4267 = vpop.xlane.xlu0 %4266
        %4268 = vadd.xlane.f32.xlu0 %v3829
        %v4269 = vpop.xlane.xlu0 %4268
        %4270 = vadd.xlane.f32.xlu0 %v3830
        %v4271 = vpop.xlane.xlu0 %4270
        %4272 = vadd.xlane.f32.xlu0 %v3831
        %v4273 = vpop.xlane.xlu0 %4272
        %4274 = vadd.xlane.f32.xlu0 %v3832
        %v4275 = vpop.xlane.xlu0 %4274
        %4276 = vadd.xlane.f32.xlu0 %v3833
        %v4277 = vpop.xlane.xlu0 %4276
        %4278 = vadd.xlane.f32.xlu0 %v3834
        %v4279 = vpop.xlane.xlu0 %4278
        %4280 = vadd.xlane.f32.xlu0 %v3835
        %v4281 = vpop.xlane.xlu0 %4280
        %4282 = vadd.xlane.f32.xlu0 %v3836
        %v4283 = vpop.xlane.xlu0 %4282
        %4284 = vadd.xlane.f32.xlu0 %v3837
        %v4285 = vpop.xlane.xlu0 %4284
        %4286 = vadd.xlane.f32.xlu0 %v3838
        %v4287 = vpop.xlane.xlu0 %4286
        %4288 = vadd.xlane.f32.xlu0 %v3839
        %v4289 = vpop.xlane.xlu0 %4288
        %4290 = vadd.xlane.f32.xlu0 %v3840
        %v4291 = vpop.xlane.xlu0 %4290
        %4292 = vadd.xlane.f32.xlu0 %v3841
        %v4293 = vpop.xlane.xlu0 %4292
        %4294 = vadd.xlane.f32.xlu0 %v3842
        %v4295 = vpop.xlane.xlu0 %4294
        %4296 = vadd.xlane.f32.xlu0 %v3843
        %v4297 = vpop.xlane.xlu0 %4296
        %4298 = vadd.xlane.f32.xlu0 %v3844
        %v4299 = vpop.xlane.xlu0 %4298
        %4300 = vadd.xlane.f32.xlu0 %v3845
        %v4301 = vpop.xlane.xlu0 %4300
        %4302 = vadd.xlane.f32.xlu0 %v3846
        %v4303 = vpop.xlane.xlu0 %4302
        %4304 = vadd.xlane.f32.xlu0 %v3847
        %v4305 = vpop.xlane.xlu0 %4304
        %4306 = vadd.xlane.f32.xlu0 %v3848
        %v4307 = vpop.xlane.xlu0 %4306
        %4308 = vadd.xlane.f32.xlu0 %v3849
        %v4309 = vpop.xlane.xlu0 %4308
        %4310 = vadd.xlane.f32.xlu0 %v3850
        %v4311 = vpop.xlane.xlu0 %4310
        %4312 = vadd.xlane.f32.xlu0 %v3851
        %v4313 = vpop.xlane.xlu0 %4312
        %4314 = vadd.xlane.f32.xlu0 %v3852
        %v4315 = vpop.xlane.xlu0 %4314
        %4316 = vadd.xlane.f32.xlu0 %v3853
        %v4317 = vpop.xlane.xlu0 %4316
        %4318 = vadd.xlane.f32.xlu0 %v3854
        %v4319 = vpop.xlane.xlu0 %4318
        %4320 = vadd.xlane.f32.xlu0 %v3855
        %v4321 = vpop.xlane.xlu0 %4320
        %4322 = vadd.xlane.f32.xlu0 %v3856
        %v4323 = vpop.xlane.xlu0 %4322
        %4324 = vadd.xlane.f32.xlu0 %v3857
        %v4325 = vpop.xlane.xlu0 %4324
        %4326 = vadd.xlane.f32.xlu0 %v3858
        %v4327 = vpop.xlane.xlu0 %4326
        %4328 = vadd.xlane.f32.xlu0 %v3859
        %v4329 = vpop.xlane.xlu0 %4328
        %4330 = vadd.xlane.f32.xlu0 %v3860
        %v4331 = vpop.xlane.xlu0 %4330
        %4332 = vadd.xlane.f32.xlu0 %v3861
        %v4333 = vpop.xlane.xlu0 %4332
        %4334 = vadd.xlane.f32.xlu0 %v3862
        %v4335 = vpop.xlane.xlu0 %4334
        %4336 = vadd.xlane.f32.xlu0 %v3863
        %v4337 = vpop.xlane.xlu0 %4336
        %4338 = vadd.xlane.f32.xlu0 %v3864
        %v4339 = vpop.xlane.xlu0 %4338
        %4340 = vadd.xlane.f32.xlu0 %v3865
        %v4341 = vpop.xlane.xlu0 %4340
        %4342 = vadd.xlane.f32.xlu0 %v3866
        %v4343 = vpop.xlane.xlu0 %4342
        %4344 = vadd.xlane.f32.xlu0 %v3867
        %v4345 = vpop.xlane.xlu0 %4344
        %4346 = vadd.xlane.f32.xlu0 %v3868
        %v4347 = vpop.xlane.xlu0 %4346
        %4348 = vadd.xlane.f32.xlu0 %v3869
        %v4349 = vpop.xlane.xlu0 %4348
        %4350 = vadd.xlane.f32.xlu0 %v3870
        %v4351 = vpop.xlane.xlu0 %4350
        %4352 = vadd.xlane.f32.xlu0 %v3871
        %v4353 = vpop.xlane.xlu0 %4352
        %4354 = vadd.xlane.f32.xlu0 %v3872
        %v4355 = vpop.xlane.xlu0 %4354
        %4356 = vadd.xlane.f32.xlu0 %v3873
        %v4357 = vpop.xlane.xlu0 %4356
        %4358 = vadd.xlane.f32.xlu0 %v3874
        %v4359 = vpop.xlane.xlu0 %4358
        %4360 = vadd.xlane.f32.xlu0 %v3875
        %v4361 = vpop.xlane.xlu0 %4360
        %4362 = vadd.xlane.f32.xlu0 %v3876
        %v4363 = vpop.xlane.xlu0 %4362
        %4364 = vadd.xlane.f32.xlu0 %v3877
        %v4365 = vpop.xlane.xlu0 %4364
        %4366 = vadd.xlane.f32.xlu0 %v3878
        %v4367 = vpop.xlane.xlu0 %4366
        %4368 = vadd.xlane.f32.xlu0 %v3879
        %v4369 = vpop.xlane.xlu0 %4368
        %4370 = vadd.xlane.f32.xlu0 %v3880
        %v4371 = vpop.xlane.xlu0 %4370
        %4372 = vadd.xlane.f32.xlu0 %v3881
        %v4373 = vpop.xlane.xlu0 %4372
        %4374 = vadd.xlane.f32.xlu0 %v3882
        %v4375 = vpop.xlane.xlu0 %4374
        %4376 = vadd.xlane.f32.xlu0 %v3883
        %v4377 = vpop.xlane.xlu0 %4376
        %4378 = vadd.xlane.f32.xlu0 %v3884
        %v4379 = vpop.xlane.xlu0 %4378
        %4380 = vadd.xlane.f32.xlu0 %v3885
        %v4381 = vpop.xlane.xlu0 %4380
        %4382 = vadd.xlane.f32.xlu0 %v3886
        %v4383 = vpop.xlane.xlu0 %4382
        %4384 = vadd.xlane.f32.xlu0 %v3887
        %v4385 = vpop.xlane.xlu0 %4384
        %4386 = vadd.xlane.f32.xlu0 %v3888
        %v4387 = vpop.xlane.xlu0 %4386
        %4388 = vadd.xlane.f32.xlu0 %v3889
        %v4389 = vpop.xlane.xlu0 %4388
        %4390 = vadd.xlane.f32.xlu0 %v3890
        %v4391 = vpop.xlane.xlu0 %4390
        %4392 = vadd.xlane.f32.xlu0 %v3891
        %v4393 = vpop.xlane.xlu0 %4392
        %4394 = vadd.xlane.f32.xlu0 %v3892
        %v4395 = vpop.xlane.xlu0 %4394
        %4396 = vadd.xlane.f32.xlu0 %v3893
        %v4397 = vpop.xlane.xlu0 %4396
        %4398 = vadd.xlane.f32.xlu0 %v3894
        %v4399 = vpop.xlane.xlu0 %4398
        %4400 = vadd.xlane.f32.xlu0 %v3895
        %v4401 = vpop.xlane.xlu0 %4400
        %4402 = vadd.xlane.f32.xlu0 %v3896
        %v4403 = vpop.xlane.xlu0 %4402
        %4404 = vadd.xlane.f32.xlu0 %v3897
        %v4405 = vpop.xlane.xlu0 %4404
        %4406 = vadd.xlane.f32.xlu0 %v3898
        %v4407 = vpop.xlane.xlu0 %4406
        %4408 = vadd.xlane.f32.xlu0 %v3899
        %v4409 = vpop.xlane.xlu0 %4408
        %4410 = vadd.xlane.f32.xlu0 %v3900
        %v4411 = vpop.xlane.xlu0 %4410
        %4412 = vadd.xlane.f32.xlu0 %v3901
        %v4413 = vpop.xlane.xlu0 %4412
        %v4414 = vld [vmem:[%s13] sm:$0x3]
        %v4415 = vld [vmem:[%s14] sm:$0x3]
        %4417 = vset.pattern.permute.xlu0 0
        %4418 = vperm.xlu0 %4417, %v4415
        %v4419 = vpop.permute.xlu0 %4418
        %v4677 = vlaneseq
        %v4678 = vshrl.u32 %v4677, 7
        %v4679 = vsub.s32 %v525, %v4678
        %v4680 = vrot.slane %v3903, %v4679
        %v4681 = vlaneseq
        %v4682 = vshrl.u32 %v4681, 7
        %v4683 = vsub.s32 %v1082, %v4682
        %v4684 = vrot.slane %v3905, %v4683
        %v4685 = vsel %vm1087, %v4684, %v4680
        %v4686 = vlaneseq
        %v4687 = vshrl.u32 %v4686, 7
        %v4688 = vsub.s32 %v1089, %v4687
        %v4689 = vrot.slane %v3907, %v4688
        %v4690 = vsel %vm1094, %v4689, %v4685
        %v4691 = vlaneseq
        %v4692 = vshrl.u32 %v4691, 7
        %v4693 = vsub.s32 %v1096, %v4692
        %v4694 = vrot.slane %v3909, %v4693
        %v4695 = vsel %vm1101, %v4694, %v4690
        %v4696 = vlaneseq
        %v4697 = vshrl.u32 %v4696, 7
        %v4698 = vsub.s32 %v1103, %v4697
        %v4699 = vrot.slane %v3911, %v4698
        %v4700 = vsel %vm1108, %v4699, %v4695
        %v4701 = vlaneseq
        %v4702 = vshrl.u32 %v4701, 7
        %v4703 = vsub.s32 %v1110, %v4702
        %v4704 = vrot.slane %v3913, %v4703
        %v4705 = vsel %vm1115, %v4704, %v4700
        %v4706 = vlaneseq
        %v4707 = vshrl.u32 %v4706, 7
        %v4708 = vsub.s32 %v1117, %v4707
        %v4709 = vrot.slane %v3915, %v4708
        %v4710 = vsel %vm1122, %v4709, %v4705
        %v4711 = vlaneseq
        %v4712 = vshrl.u32 %v4711, 7
        %v4713 = vsub.s32 %v1124, %v4712
        %v4714 = vrot.slane %v3917, %v4713
        %v4715 = vsel %vm1129, %v4714, %v4710
        %v4716 = vlaneseq
        %v4717 = vshrl.u32 %v4716, 7
        %v4718 = vsub.s32 %v1131, %v4717
        %v4719 = vrot.slane %v3919, %v4718
        %v4720 = vsel %vm1136, %v4719, %v4715
        %v4721 = vlaneseq
        %v4722 = vshrl.u32 %v4721, 7
        %v4723 = vsub.s32 %v1138, %v4722
        %v4724 = vrot.slane %v3921, %v4723
        %v4725 = vsel %vm1143, %v4724, %v4720
        %v4726 = vlaneseq
        %v4727 = vshrl.u32 %v4726, 7
        %v4728 = vsub.s32 %v1145, %v4727
        %v4729 = vrot.slane %v3923, %v4728
        %v4730 = vsel %vm1150, %v4729, %v4725
        %v4731 = vlaneseq
        %v4732 = vshrl.u32 %v4731, 7
        %v4733 = vsub.s32 %v1152, %v4732
        %v4734 = vrot.slane %v3925, %v4733
        %v4735 = vsel %vm1157, %v4734, %v4730
        %v4736 = vlaneseq
        %v4737 = vshrl.u32 %v4736, 7
        %v4738 = vsub.s32 %v1159, %v4737
        %v4739 = vrot.slane %v3927, %v4738
        %v4740 = vsel %vm1164, %v4739, %v4735
        %v4741 = vlaneseq
        %v4742 = vshrl.u32 %v4741, 7
        %v4743 = vsub.s32 %v1166, %v4742
        %v4744 = vrot.slane %v3929, %v4743
        %v4745 = vsel %vm1171, %v4744, %v4740
        %v4746 = vlaneseq
        %v4747 = vshrl.u32 %v4746, 7
        %v4748 = vsub.s32 %v1173, %v4747
        %v4749 = vrot.slane %v3931, %v4748
        %v4750 = vsel %vm1178, %v4749, %v4745
        %v4751 = vlaneseq
        %v4752 = vshrl.u32 %v4751, 7
        %v4753 = vsub.s32 %v1180, %v4752
        %v4754 = vrot.slane %v3933, %v4753
        %v4755 = vsel %vm1185, %v4754, %v4750
        %v4756 = vlaneseq
        %v4757 = vshrl.u32 %v4756, 7
        %v4758 = vsub.s32 %v525, %v4757
        %v4759 = vrot.slane %v3935, %v4758
        %v4760 = vlaneseq
        %v4761 = vshrl.u32 %v4760, 7
        %v4762 = vsub.s32 %v1082, %v4761
        %v4763 = vrot.slane %v3937, %v4762
        %v4764 = vsel %vm1087, %v4763, %v4759
        %v4765 = vlaneseq
        %v4766 = vshrl.u32 %v4765, 7
        %v4767 = vsub.s32 %v1089, %v4766
        %v4768 = vrot.slane %v3939, %v4767
        %v4769 = vsel %vm1094, %v4768, %v4764
        %v4770 = vlaneseq
        %v4771 = vshrl.u32 %v4770, 7
        %v4772 = vsub.s32 %v1096, %v4771
        %v4773 = vrot.slane %v3941, %v4772
        %v4774 = vsel %vm1101, %v4773, %v4769
        %v4775 = vlaneseq
        %v4776 = vshrl.u32 %v4775, 7
        %v4777 = vsub.s32 %v1103, %v4776
        %v4778 = vrot.slane %v3943, %v4777
        %v4779 = vsel %vm1108, %v4778, %v4774
        %v4780 = vlaneseq
        %v4781 = vshrl.u32 %v4780, 7
        %v4782 = vsub.s32 %v1110, %v4781
        %v4783 = vrot.slane %v3945, %v4782
        %v4784 = vsel %vm1115, %v4783, %v4779
        %v4785 = vlaneseq
        %v4786 = vshrl.u32 %v4785, 7
        %v4787 = vsub.s32 %v1117, %v4786
        %v4788 = vrot.slane %v3947, %v4787
        %v4789 = vsel %vm1122, %v4788, %v4784
        %v4790 = vlaneseq
        %v4791 = vshrl.u32 %v4790, 7
        %v4792 = vsub.s32 %v1124, %v4791
        %v4793 = vrot.slane %v3949, %v4792
        %v4794 = vsel %vm1129, %v4793, %v4789
        %v4795 = vlaneseq
        %v4796 = vshrl.u32 %v4795, 7
        %v4797 = vsub.s32 %v1131, %v4796
        %v4798 = vrot.slane %v3951, %v4797
        %v4799 = vsel %vm1136, %v4798, %v4794
        %v4800 = vlaneseq
        %v4801 = vshrl.u32 %v4800, 7
        %v4802 = vsub.s32 %v1138, %v4801
        %v4803 = vrot.slane %v3953, %v4802
        %v4804 = vsel %vm1143, %v4803, %v4799
        %v4805 = vlaneseq
        %v4806 = vshrl.u32 %v4805, 7
        %v4807 = vsub.s32 %v1145, %v4806
        %v4808 = vrot.slane %v3955, %v4807
        %v4809 = vsel %vm1150, %v4808, %v4804
        %v4810 = vlaneseq
        %v4811 = vshrl.u32 %v4810, 7
        %v4812 = vsub.s32 %v1152, %v4811
        %v4813 = vrot.slane %v3957, %v4812
        %v4814 = vsel %vm1157, %v4813, %v4809
        %v4815 = vlaneseq
        %v4816 = vshrl.u32 %v4815, 7
        %v4817 = vsub.s32 %v1159, %v4816
        %v4818 = vrot.slane %v3959, %v4817
        %v4819 = vsel %vm1164, %v4818, %v4814
        %v4820 = vlaneseq
        %v4821 = vshrl.u32 %v4820, 7
        %v4822 = vsub.s32 %v1166, %v4821
        %v4823 = vrot.slane %v3961, %v4822
        %v4824 = vsel %vm1171, %v4823, %v4819
        %v4825 = vlaneseq
        %v4826 = vshrl.u32 %v4825, 7
        %v4827 = vsub.s32 %v1173, %v4826
        %v4828 = vrot.slane %v3963, %v4827
        %v4829 = vsel %vm1178, %v4828, %v4824
        %v4830 = vlaneseq
        %v4831 = vshrl.u32 %v4830, 7
        %v4832 = vsub.s32 %v1180, %v4831
        %v4833 = vrot.slane %v3965, %v4832
        %v4834 = vsel %vm1185, %v4833, %v4829
        %v4835 = vlaneseq
        %v4836 = vshrl.u32 %v4835, 7
        %v4837 = vsub.s32 %v525, %v4836
        %v4838 = vrot.slane %v3967, %v4837
        %v4839 = vlaneseq
        %v4840 = vshrl.u32 %v4839, 7
        %v4841 = vsub.s32 %v1082, %v4840
        %v4842 = vrot.slane %v3969, %v4841
        %v4843 = vsel %vm1087, %v4842, %v4838
        %v4844 = vlaneseq
        %v4845 = vshrl.u32 %v4844, 7
        %v4846 = vsub.s32 %v1089, %v4845
        %v4847 = vrot.slane %v3971, %v4846
        %v4848 = vsel %vm1094, %v4847, %v4843
        %v4849 = vlaneseq
        %v4850 = vshrl.u32 %v4849, 7
        %v4851 = vsub.s32 %v1096, %v4850
        %v4852 = vrot.slane %v3973, %v4851
        %v4853 = vsel %vm1101, %v4852, %v4848
        %v4854 = vlaneseq
        %v4855 = vshrl.u32 %v4854, 7
        %v4856 = vsub.s32 %v1103, %v4855
        %v4857 = vrot.slane %v3975, %v4856
        %v4858 = vsel %vm1108, %v4857, %v4853
        %v4859 = vlaneseq
        %v4860 = vshrl.u32 %v4859, 7
        %v4861 = vsub.s32 %v1110, %v4860
        %v4862 = vrot.slane %v3977, %v4861
        %v4863 = vsel %vm1115, %v4862, %v4858
        %v4864 = vlaneseq
        %v4865 = vshrl.u32 %v4864, 7
        %v4866 = vsub.s32 %v1117, %v4865
        %v4867 = vrot.slane %v3979, %v4866
        %v4868 = vsel %vm1122, %v4867, %v4863
        %v4869 = vlaneseq
        %v4870 = vshrl.u32 %v4869, 7
        %v4871 = vsub.s32 %v1124, %v4870
        %v4872 = vrot.slane %v3981, %v4871
        %v4873 = vsel %vm1129, %v4872, %v4868
        %v4874 = vlaneseq
        %v4875 = vshrl.u32 %v4874, 7
        %v4876 = vsub.s32 %v1131, %v4875
        %v4877 = vrot.slane %v3983, %v4876
        %v4878 = vsel %vm1136, %v4877, %v4873
        %v4879 = vlaneseq
        %v4880 = vshrl.u32 %v4879, 7
        %v4881 = vsub.s32 %v1138, %v4880
        %v4882 = vrot.slane %v3985, %v4881
        %v4883 = vsel %vm1143, %v4882, %v4878
        %v4884 = vlaneseq
        %v4885 = vshrl.u32 %v4884, 7
        %v4886 = vsub.s32 %v1145, %v4885
        %v4887 = vrot.slane %v3987, %v4886
        %v4888 = vsel %vm1150, %v4887, %v4883
        %v4889 = vlaneseq
        %v4890 = vshrl.u32 %v4889, 7
        %v4891 = vsub.s32 %v1152, %v4890
        %v4892 = vrot.slane %v3989, %v4891
        %v4893 = vsel %vm1157, %v4892, %v4888
        %v4894 = vlaneseq
        %v4895 = vshrl.u32 %v4894, 7
        %v4896 = vsub.s32 %v1159, %v4895
        %v4897 = vrot.slane %v3991, %v4896
        %v4898 = vsel %vm1164, %v4897, %v4893
        %v4899 = vlaneseq
        %v4900 = vshrl.u32 %v4899, 7
        %v4901 = vsub.s32 %v1166, %v4900
        %v4902 = vrot.slane %v3993, %v4901
        %v4903 = vsel %vm1171, %v4902, %v4898
        %v4904 = vlaneseq
        %v4905 = vshrl.u32 %v4904, 7
        %v4906 = vsub.s32 %v1173, %v4905
        %v4907 = vrot.slane %v3995, %v4906
        %v4908 = vsel %vm1178, %v4907, %v4903
        %v4909 = vlaneseq
        %v4910 = vshrl.u32 %v4909, 7
        %v4911 = vsub.s32 %v1180, %v4910
        %v4912 = vrot.slane %v3997, %v4911
        %v4913 = vsel %vm1185, %v4912, %v4908
        %v4914 = vlaneseq
        %v4915 = vshrl.u32 %v4914, 7
        %v4916 = vsub.s32 %v525, %v4915
        %v4917 = vrot.slane %v3999, %v4916
        %v4918 = vlaneseq
        %v4919 = vshrl.u32 %v4918, 7
        %v4920 = vsub.s32 %v1082, %v4919
        %v4921 = vrot.slane %v4001, %v4920
        %v4922 = vsel %vm1087, %v4921, %v4917
        %v4923 = vlaneseq
        %v4924 = vshrl.u32 %v4923, 7
        %v4925 = vsub.s32 %v1089, %v4924
        %v4926 = vrot.slane %v4003, %v4925
        %v4927 = vsel %vm1094, %v4926, %v4922
        %v4928 = vlaneseq
        %v4929 = vshrl.u32 %v4928, 7
        %v4930 = vsub.s32 %v1096, %v4929
        %v4931 = vrot.slane %v4005, %v4930
        %v4932 = vsel %vm1101, %v4931, %v4927
        %v4933 = vlaneseq
        %v4934 = vshrl.u32 %v4933, 7
        %v4935 = vsub.s32 %v1103, %v4934
        %v4936 = vrot.slane %v4007, %v4935
        %v4937 = vsel %vm1108, %v4936, %v4932
        %v4938 = vlaneseq
        %v4939 = vshrl.u32 %v4938, 7
        %v4940 = vsub.s32 %v1110, %v4939
        %v4941 = vrot.slane %v4009, %v4940
        %v4942 = vsel %vm1115, %v4941, %v4937
        %v4943 = vlaneseq
        %v4944 = vshrl.u32 %v4943, 7
        %v4945 = vsub.s32 %v1117, %v4944
        %v4946 = vrot.slane %v4011, %v4945
        %v4947 = vsel %vm1122, %v4946, %v4942
        %v4948 = vlaneseq
        %v4949 = vshrl.u32 %v4948, 7
        %v4950 = vsub.s32 %v1124, %v4949
        %v4951 = vrot.slane %v4013, %v4950
        %v4952 = vsel %vm1129, %v4951, %v4947
        %v4953 = vlaneseq
        %v4954 = vshrl.u32 %v4953, 7
        %v4955 = vsub.s32 %v1131, %v4954
        %v4956 = vrot.slane %v4015, %v4955
        %v4957 = vsel %vm1136, %v4956, %v4952
        %v4958 = vlaneseq
        %v4959 = vshrl.u32 %v4958, 7
        %v4960 = vsub.s32 %v1138, %v4959
        %v4961 = vrot.slane %v4017, %v4960
        %v4962 = vsel %vm1143, %v4961, %v4957
        %v4963 = vlaneseq
        %v4964 = vshrl.u32 %v4963, 7
        %v4965 = vsub.s32 %v1145, %v4964
        %v4966 = vrot.slane %v4019, %v4965
        %v4967 = vsel %vm1150, %v4966, %v4962
        %v4968 = vlaneseq
        %v4969 = vshrl.u32 %v4968, 7
        %v4970 = vsub.s32 %v1152, %v4969
        %v4971 = vrot.slane %v4021, %v4970
        %v4972 = vsel %vm1157, %v4971, %v4967
        %v4973 = vlaneseq
        %v4974 = vshrl.u32 %v4973, 7
        %v4975 = vsub.s32 %v1159, %v4974
        %v4976 = vrot.slane %v4023, %v4975
        %v4977 = vsel %vm1164, %v4976, %v4972
        %v4978 = vlaneseq
        %v4979 = vshrl.u32 %v4978, 7
        %v4980 = vsub.s32 %v1166, %v4979
        %v4981 = vrot.slane %v4025, %v4980
        %v4982 = vsel %vm1171, %v4981, %v4977
        %v4983 = vlaneseq
        %v4984 = vshrl.u32 %v4983, 7
        %v4985 = vsub.s32 %v1173, %v4984
        %v4986 = vrot.slane %v4027, %v4985
        %v4987 = vsel %vm1178, %v4986, %v4982
        %v4988 = vlaneseq
        %v4989 = vshrl.u32 %v4988, 7
        %v4990 = vsub.s32 %v1180, %v4989
        %v4991 = vrot.slane %v4029, %v4990
        %v4992 = vsel %vm1185, %v4991, %v4987
        %v4993 = vlaneseq
        %v4994 = vshrl.u32 %v4993, 7
        %v4995 = vsub.s32 %v525, %v4994
        %v4996 = vrot.slane %v4031, %v4995
        %v4997 = vlaneseq
        %v4998 = vshrl.u32 %v4997, 7
        %v4999 = vsub.s32 %v1082, %v4998
        %v5000 = vrot.slane %v4033, %v4999
        %v5001 = vsel %vm1087, %v5000, %v4996
        %v5002 = vlaneseq
        %v5003 = vshrl.u32 %v5002, 7
        %v5004 = vsub.s32 %v1089, %v5003
        %v5005 = vrot.slane %v4035, %v5004
        %v5006 = vsel %vm1094, %v5005, %v5001
        %v5007 = vlaneseq
        %v5008 = vshrl.u32 %v5007, 7
        %v5009 = vsub.s32 %v1096, %v5008
        %v5010 = vrot.slane %v4037, %v5009
        %v5011 = vsel %vm1101, %v5010, %v5006
        %v5012 = vlaneseq
        %v5013 = vshrl.u32 %v5012, 7
        %v5014 = vsub.s32 %v1103, %v5013
        %v5015 = vrot.slane %v4039, %v5014
        %v5016 = vsel %vm1108, %v5015, %v5011
        %v5017 = vlaneseq
        %v5018 = vshrl.u32 %v5017, 7
        %v5019 = vsub.s32 %v1110, %v5018
        %v5020 = vrot.slane %v4041, %v5019
        %v5021 = vsel %vm1115, %v5020, %v5016
        %v5022 = vlaneseq
        %v5023 = vshrl.u32 %v5022, 7
        %v5024 = vsub.s32 %v1117, %v5023
        %v5025 = vrot.slane %v4043, %v5024
        %v5026 = vsel %vm1122, %v5025, %v5021
        %v5027 = vlaneseq
        %v5028 = vshrl.u32 %v5027, 7
        %v5029 = vsub.s32 %v1124, %v5028
        %v5030 = vrot.slane %v4045, %v5029
        %v5031 = vsel %vm1129, %v5030, %v5026
        %v5032 = vlaneseq
        %v5033 = vshrl.u32 %v5032, 7
        %v5034 = vsub.s32 %v1131, %v5033
        %v5035 = vrot.slane %v4047, %v5034
        %v5036 = vsel %vm1136, %v5035, %v5031
        %v5037 = vlaneseq
        %v5038 = vshrl.u32 %v5037, 7
        %v5039 = vsub.s32 %v1138, %v5038
        %v5040 = vrot.slane %v4049, %v5039
        %v5041 = vsel %vm1143, %v5040, %v5036
        %v5042 = vlaneseq
        %v5043 = vshrl.u32 %v5042, 7
        %v5044 = vsub.s32 %v1145, %v5043
        %v5045 = vrot.slane %v4051, %v5044
        %v5046 = vsel %vm1150, %v5045, %v5041
        %v5047 = vlaneseq
        %v5048 = vshrl.u32 %v5047, 7
        %v5049 = vsub.s32 %v1152, %v5048
        %v5050 = vrot.slane %v4053, %v5049
        %v5051 = vsel %vm1157, %v5050, %v5046
        %v5052 = vlaneseq
        %v5053 = vshrl.u32 %v5052, 7
        %v5054 = vsub.s32 %v1159, %v5053
        %v5055 = vrot.slane %v4055, %v5054
        %v5056 = vsel %vm1164, %v5055, %v5051
        %v5057 = vlaneseq
        %v5058 = vshrl.u32 %v5057, 7
        %v5059 = vsub.s32 %v1166, %v5058
        %v5060 = vrot.slane %v4057, %v5059
        %v5061 = vsel %vm1171, %v5060, %v5056
        %v5062 = vlaneseq
        %v5063 = vshrl.u32 %v5062, 7
        %v5064 = vsub.s32 %v1173, %v5063
        %v5065 = vrot.slane %v4059, %v5064
        %v5066 = vsel %vm1178, %v5065, %v5061
        %v5067 = vlaneseq
        %v5068 = vshrl.u32 %v5067, 7
        %v5069 = vsub.s32 %v1180, %v5068
        %v5070 = vrot.slane %v4061, %v5069
        %v5071 = vsel %vm1185, %v5070, %v5066
        %v5072 = vlaneseq
        %v5073 = vshrl.u32 %v5072, 7
        %v5074 = vsub.s32 %v525, %v5073
        %v5075 = vrot.slane %v4063, %v5074
        %v5076 = vlaneseq
        %v5077 = vshrl.u32 %v5076, 7
        %v5078 = vsub.s32 %v1082, %v5077
        %v5079 = vrot.slane %v4065, %v5078
        %v5080 = vsel %vm1087, %v5079, %v5075
        %v5081 = vlaneseq
        %v5082 = vshrl.u32 %v5081, 7
        %v5083 = vsub.s32 %v1089, %v5082
        %v5084 = vrot.slane %v4067, %v5083
        %v5085 = vsel %vm1094, %v5084, %v5080
        %v5086 = vlaneseq
        %v5087 = vshrl.u32 %v5086, 7
        %v5088 = vsub.s32 %v1096, %v5087
        %v5089 = vrot.slane %v4069, %v5088
        %v5090 = vsel %vm1101, %v5089, %v5085
        %v5091 = vlaneseq
        %v5092 = vshrl.u32 %v5091, 7
        %v5093 = vsub.s32 %v1103, %v5092
        %v5094 = vrot.slane %v4071, %v5093
        %v5095 = vsel %vm1108, %v5094, %v5090
        %v5096 = vlaneseq
        %v5097 = vshrl.u32 %v5096, 7
        %v5098 = vsub.s32 %v1110, %v5097
        %v5099 = vrot.slane %v4073, %v5098
        %v5100 = vsel %vm1115, %v5099, %v5095
        %v5101 = vlaneseq
        %v5102 = vshrl.u32 %v5101, 7
        %v5103 = vsub.s32 %v1117, %v5102
        %v5104 = vrot.slane %v4075, %v5103
        %v5105 = vsel %vm1122, %v5104, %v5100
        %v5106 = vlaneseq
        %v5107 = vshrl.u32 %v5106, 7
        %v5108 = vsub.s32 %v1124, %v5107
        %v5109 = vrot.slane %v4077, %v5108
        %v5110 = vsel %vm1129, %v5109, %v5105
        %v5111 = vlaneseq
        %v5112 = vshrl.u32 %v5111, 7
        %v5113 = vsub.s32 %v1131, %v5112
        %v5114 = vrot.slane %v4079, %v5113
        %v5115 = vsel %vm1136, %v5114, %v5110
        %v5116 = vlaneseq
        %v5117 = vshrl.u32 %v5116, 7
        %v5118 = vsub.s32 %v1138, %v5117
        %v5119 = vrot.slane %v4081, %v5118
        %v5120 = vsel %vm1143, %v5119, %v5115
        %v5121 = vlaneseq
        %v5122 = vshrl.u32 %v5121, 7
        %v5123 = vsub.s32 %v1145, %v5122
        %v5124 = vrot.slane %v4083, %v5123
        %v5125 = vsel %vm1150, %v5124, %v5120
        %v5126 = vlaneseq
        %v5127 = vshrl.u32 %v5126, 7
        %v5128 = vsub.s32 %v1152, %v5127
        %v5129 = vrot.slane %v4085, %v5128
        %v5130 = vsel %vm1157, %v5129, %v5125
        %v5131 = vlaneseq
        %v5132 = vshrl.u32 %v5131, 7
        %v5133 = vsub.s32 %v1159, %v5132
        %v5134 = vrot.slane %v4087, %v5133
        %v5135 = vsel %vm1164, %v5134, %v5130
        %v5136 = vlaneseq
        %v5137 = vshrl.u32 %v5136, 7
        %v5138 = vsub.s32 %v1166, %v5137
        %v5139 = vrot.slane %v4089, %v5138
        %v5140 = vsel %vm1171, %v5139, %v5135
        %v5141 = vlaneseq
        %v5142 = vshrl.u32 %v5141, 7
        %v5143 = vsub.s32 %v1173, %v5142
        %v5144 = vrot.slane %v4091, %v5143
        %v5145 = vsel %vm1178, %v5144, %v5140
        %v5146 = vlaneseq
        %v5147 = vshrl.u32 %v5146, 7
        %v5148 = vsub.s32 %v1180, %v5147
        %v5149 = vrot.slane %v4093, %v5148
        %v5150 = vsel %vm1185, %v5149, %v5145
        %v5151 = vlaneseq
        %v5152 = vshrl.u32 %v5151, 7
        %v5153 = vsub.s32 %v525, %v5152
        %v5154 = vrot.slane %v4095, %v5153
        %v5155 = vlaneseq
        %v5156 = vshrl.u32 %v5155, 7
        %v5157 = vsub.s32 %v1082, %v5156
        %v5158 = vrot.slane %v4097, %v5157
        %v5159 = vsel %vm1087, %v5158, %v5154
        %v5160 = vlaneseq
        %v5161 = vshrl.u32 %v5160, 7
        %v5162 = vsub.s32 %v1089, %v5161
        %v5163 = vrot.slane %v4099, %v5162
        %v5164 = vsel %vm1094, %v5163, %v5159
        %v5165 = vlaneseq
        %v5166 = vshrl.u32 %v5165, 7
        %v5167 = vsub.s32 %v1096, %v5166
        %v5168 = vrot.slane %v4101, %v5167
        %v5169 = vsel %vm1101, %v5168, %v5164
        %v5170 = vlaneseq
        %v5171 = vshrl.u32 %v5170, 7
        %v5172 = vsub.s32 %v1103, %v5171
        %v5173 = vrot.slane %v4103, %v5172
        %v5174 = vsel %vm1108, %v5173, %v5169
        %v5175 = vlaneseq
        %v5176 = vshrl.u32 %v5175, 7
        %v5177 = vsub.s32 %v1110, %v5176
        %v5178 = vrot.slane %v4105, %v5177
        %v5179 = vsel %vm1115, %v5178, %v5174
        %v5180 = vlaneseq
        %v5181 = vshrl.u32 %v5180, 7
        %v5182 = vsub.s32 %v1117, %v5181
        %v5183 = vrot.slane %v4107, %v5182
        %v5184 = vsel %vm1122, %v5183, %v5179
        %v5185 = vlaneseq
        %v5186 = vshrl.u32 %v5185, 7
        %v5187 = vsub.s32 %v1124, %v5186
        %v5188 = vrot.slane %v4109, %v5187
        %v5189 = vsel %vm1129, %v5188, %v5184
        %v5190 = vlaneseq
        %v5191 = vshrl.u32 %v5190, 7
        %v5192 = vsub.s32 %v1131, %v5191
        %v5193 = vrot.slane %v4111, %v5192
        %v5194 = vsel %vm1136, %v5193, %v5189
        %v5195 = vlaneseq
        %v5196 = vshrl.u32 %v5195, 7
        %v5197 = vsub.s32 %v1138, %v5196
        %v5198 = vrot.slane %v4113, %v5197
        %v5199 = vsel %vm1143, %v5198, %v5194
        %v5200 = vlaneseq
        %v5201 = vshrl.u32 %v5200, 7
        %v5202 = vsub.s32 %v1145, %v5201
        %v5203 = vrot.slane %v4115, %v5202
        %v5204 = vsel %vm1150, %v5203, %v5199
        %v5205 = vlaneseq
        %v5206 = vshrl.u32 %v5205, 7
        %v5207 = vsub.s32 %v1152, %v5206
        %v5208 = vrot.slane %v4117, %v5207
        %v5209 = vsel %vm1157, %v5208, %v5204
        %v5210 = vlaneseq
        %v5211 = vshrl.u32 %v5210, 7
        %v5212 = vsub.s32 %v1159, %v5211
        %v5213 = vrot.slane %v4119, %v5212
        %v5214 = vsel %vm1164, %v5213, %v5209
        %v5215 = vlaneseq
        %v5216 = vshrl.u32 %v5215, 7
        %v5217 = vsub.s32 %v1166, %v5216
        %v5218 = vrot.slane %v4121, %v5217
        %v5219 = vsel %vm1171, %v5218, %v5214
        %v5220 = vlaneseq
        %v5221 = vshrl.u32 %v5220, 7
        %v5222 = vsub.s32 %v1173, %v5221
        %v5223 = vrot.slane %v4123, %v5222
        %v5224 = vsel %vm1178, %v5223, %v5219
        %v5225 = vlaneseq
        %v5226 = vshrl.u32 %v5225, 7
        %v5227 = vsub.s32 %v1180, %v5226
        %v5228 = vrot.slane %v4125, %v5227
        %v5229 = vsel %vm1185, %v5228, %v5224
        %v5230 = vlaneseq
        %v5231 = vshrl.u32 %v5230, 7
        %v5232 = vsub.s32 %v525, %v5231
        %v5233 = vrot.slane %v4127, %v5232
        %v5234 = vlaneseq
        %v5235 = vshrl.u32 %v5234, 7
        %v5236 = vsub.s32 %v1082, %v5235
        %v5237 = vrot.slane %v4129, %v5236
        %v5238 = vsel %vm1087, %v5237, %v5233
        %v5239 = vlaneseq
        %v5240 = vshrl.u32 %v5239, 7
        %v5241 = vsub.s32 %v1089, %v5240
        %v5242 = vrot.slane %v4131, %v5241
        %v5243 = vsel %vm1094, %v5242, %v5238
        %v5244 = vlaneseq
        %v5245 = vshrl.u32 %v5244, 7
        %v5246 = vsub.s32 %v1096, %v5245
        %v5247 = vrot.slane %v4133, %v5246
        %v5248 = vsel %vm1101, %v5247, %v5243
        %v5249 = vlaneseq
        %v5250 = vshrl.u32 %v5249, 7
        %v5251 = vsub.s32 %v1103, %v5250
        %v5252 = vrot.slane %v4135, %v5251
        %v5253 = vsel %vm1108, %v5252, %v5248
        %v5254 = vlaneseq
        %v5255 = vshrl.u32 %v5254, 7
        %v5256 = vsub.s32 %v1110, %v5255
        %v5257 = vrot.slane %v4137, %v5256
        %v5258 = vsel %vm1115, %v5257, %v5253
        %v5259 = vlaneseq
        %v5260 = vshrl.u32 %v5259, 7
        %v5261 = vsub.s32 %v1117, %v5260
        %v5262 = vrot.slane %v4139, %v5261
        %v5263 = vsel %vm1122, %v5262, %v5258
        %v5264 = vlaneseq
        %v5265 = vshrl.u32 %v5264, 7
        %v5266 = vsub.s32 %v1124, %v5265
        %v5267 = vrot.slane %v4141, %v5266
        %v5268 = vsel %vm1129, %v5267, %v5263
        %v5269 = vlaneseq
        %v5270 = vshrl.u32 %v5269, 7
        %v5271 = vsub.s32 %v1131, %v5270
        %v5272 = vrot.slane %v4143, %v5271
        %v5273 = vsel %vm1136, %v5272, %v5268
        %v5274 = vlaneseq
        %v5275 = vshrl.u32 %v5274, 7
        %v5276 = vsub.s32 %v1138, %v5275
        %v5277 = vrot.slane %v4145, %v5276
        %v5278 = vsel %vm1143, %v5277, %v5273
        %v5279 = vlaneseq
        %v5280 = vshrl.u32 %v5279, 7
        %v5281 = vsub.s32 %v1145, %v5280
        %v5282 = vrot.slane %v4147, %v5281
        %v5283 = vsel %vm1150, %v5282, %v5278
        %v5284 = vlaneseq
        %v5285 = vshrl.u32 %v5284, 7
        %v5286 = vsub.s32 %v1152, %v5285
        %v5287 = vrot.slane %v4149, %v5286
        %v5288 = vsel %vm1157, %v5287, %v5283
        %v5289 = vlaneseq
        %v5290 = vshrl.u32 %v5289, 7
        %v5291 = vsub.s32 %v1159, %v5290
        %v5292 = vrot.slane %v4151, %v5291
        %v5293 = vsel %vm1164, %v5292, %v5288
        %v5294 = vlaneseq
        %v5295 = vshrl.u32 %v5294, 7
        %v5296 = vsub.s32 %v1166, %v5295
        %v5297 = vrot.slane %v4153, %v5296
        %v5298 = vsel %vm1171, %v5297, %v5293
        %v5299 = vlaneseq
        %v5300 = vshrl.u32 %v5299, 7
        %v5301 = vsub.s32 %v1173, %v5300
        %v5302 = vrot.slane %v4155, %v5301
        %v5303 = vsel %vm1178, %v5302, %v5298
        %v5304 = vlaneseq
        %v5305 = vshrl.u32 %v5304, 7
        %v5306 = vsub.s32 %v1180, %v5305
        %v5307 = vrot.slane %v4157, %v5306
        %v5308 = vsel %vm1185, %v5307, %v5303
        %v5309 = vlaneseq
        %v5310 = vshrl.u32 %v5309, 7
        %v5311 = vsub.s32 %v525, %v5310
        %v5312 = vrot.slane %v4159, %v5311
        %v5313 = vlaneseq
        %v5314 = vshrl.u32 %v5313, 7
        %v5315 = vsub.s32 %v1082, %v5314
        %v5316 = vrot.slane %v4161, %v5315
        %v5317 = vsel %vm1087, %v5316, %v5312
        %v5318 = vlaneseq
        %v5319 = vshrl.u32 %v5318, 7
        %v5320 = vsub.s32 %v1089, %v5319
        %v5321 = vrot.slane %v4163, %v5320
        %v5322 = vsel %vm1094, %v5321, %v5317
        %v5323 = vlaneseq
        %v5324 = vshrl.u32 %v5323, 7
        %v5325 = vsub.s32 %v1096, %v5324
        %v5326 = vrot.slane %v4165, %v5325
        %v5327 = vsel %vm1101, %v5326, %v5322
        %v5328 = vlaneseq
        %v5329 = vshrl.u32 %v5328, 7
        %v5330 = vsub.s32 %v1103, %v5329
        %v5331 = vrot.slane %v4167, %v5330
        %v5332 = vsel %vm1108, %v5331, %v5327
        %v5333 = vlaneseq
        %v5334 = vshrl.u32 %v5333, 7
        %v5335 = vsub.s32 %v1110, %v5334
        %v5336 = vrot.slane %v4169, %v5335
        %v5337 = vsel %vm1115, %v5336, %v5332
        %v5338 = vlaneseq
        %v5339 = vshrl.u32 %v5338, 7
        %v5340 = vsub.s32 %v1117, %v5339
        %v5341 = vrot.slane %v4171, %v5340
        %v5342 = vsel %vm1122, %v5341, %v5337
        %v5343 = vlaneseq
        %v5344 = vshrl.u32 %v5343, 7
        %v5345 = vsub.s32 %v1124, %v5344
        %v5346 = vrot.slane %v4173, %v5345
        %v5347 = vsel %vm1129, %v5346, %v5342
        %v5348 = vlaneseq
        %v5349 = vshrl.u32 %v5348, 7
        %v5350 = vsub.s32 %v1131, %v5349
        %v5351 = vrot.slane %v4175, %v5350
        %v5352 = vsel %vm1136, %v5351, %v5347
        %v5353 = vlaneseq
        %v5354 = vshrl.u32 %v5353, 7
        %v5355 = vsub.s32 %v1138, %v5354
        %v5356 = vrot.slane %v4177, %v5355
        %v5357 = vsel %vm1143, %v5356, %v5352
        %v5358 = vlaneseq
        %v5359 = vshrl.u32 %v5358, 7
        %v5360 = vsub.s32 %v1145, %v5359
        %v5361 = vrot.slane %v4179, %v5360
        %v5362 = vsel %vm1150, %v5361, %v5357
        %v5363 = vlaneseq
        %v5364 = vshrl.u32 %v5363, 7
        %v5365 = vsub.s32 %v1152, %v5364
        %v5366 = vrot.slane %v4181, %v5365
        %v5367 = vsel %vm1157, %v5366, %v5362
        %v5368 = vlaneseq
        %v5369 = vshrl.u32 %v5368, 7
        %v5370 = vsub.s32 %v1159, %v5369
        %v5371 = vrot.slane %v4183, %v5370
        %v5372 = vsel %vm1164, %v5371, %v5367
        %v5373 = vlaneseq
        %v5374 = vshrl.u32 %v5373, 7
        %v5375 = vsub.s32 %v1166, %v5374
        %v5376 = vrot.slane %v4185, %v5375
        %v5377 = vsel %vm1171, %v5376, %v5372
        %v5378 = vlaneseq
        %v5379 = vshrl.u32 %v5378, 7
        %v5380 = vsub.s32 %v1173, %v5379
        %v5381 = vrot.slane %v4187, %v5380
        %v5382 = vsel %vm1178, %v5381, %v5377
        %v5383 = vlaneseq
        %v5384 = vshrl.u32 %v5383, 7
        %v5385 = vsub.s32 %v1180, %v5384
        %v5386 = vrot.slane %v4189, %v5385
        %v5387 = vsel %vm1185, %v5386, %v5382
        %v5388 = vlaneseq
        %v5389 = vshrl.u32 %v5388, 7
        %v5390 = vsub.s32 %v525, %v5389
        %v5391 = vrot.slane %v4191, %v5390
        %v5392 = vlaneseq
        %v5393 = vshrl.u32 %v5392, 7
        %v5394 = vsub.s32 %v1082, %v5393
        %v5395 = vrot.slane %v4193, %v5394
        %v5396 = vsel %vm1087, %v5395, %v5391
        %v5397 = vlaneseq
        %v5398 = vshrl.u32 %v5397, 7
        %v5399 = vsub.s32 %v1089, %v5398
        %v5400 = vrot.slane %v4195, %v5399
        %v5401 = vsel %vm1094, %v5400, %v5396
        %v5402 = vlaneseq
        %v5403 = vshrl.u32 %v5402, 7
        %v5404 = vsub.s32 %v1096, %v5403
        %v5405 = vrot.slane %v4197, %v5404
        %v5406 = vsel %vm1101, %v5405, %v5401
        %v5407 = vlaneseq
        %v5408 = vshrl.u32 %v5407, 7
        %v5409 = vsub.s32 %v1103, %v5408
        %v5410 = vrot.slane %v4199, %v5409
        %v5411 = vsel %vm1108, %v5410, %v5406
        %v5412 = vlaneseq
        %v5413 = vshrl.u32 %v5412, 7
        %v5414 = vsub.s32 %v1110, %v5413
        %v5415 = vrot.slane %v4201, %v5414
        %v5416 = vsel %vm1115, %v5415, %v5411
        %v5417 = vlaneseq
        %v5418 = vshrl.u32 %v5417, 7
        %v5419 = vsub.s32 %v1117, %v5418
        %v5420 = vrot.slane %v4203, %v5419
        %v5421 = vsel %vm1122, %v5420, %v5416
        %v5422 = vlaneseq
        %v5423 = vshrl.u32 %v5422, 7
        %v5424 = vsub.s32 %v1124, %v5423
        %v5425 = vrot.slane %v4205, %v5424
        %v5426 = vsel %vm1129, %v5425, %v5421
        %v5427 = vlaneseq
        %v5428 = vshrl.u32 %v5427, 7
        %v5429 = vsub.s32 %v1131, %v5428
        %v5430 = vrot.slane %v4207, %v5429
        %v5431 = vsel %vm1136, %v5430, %v5426
        %v5432 = vlaneseq
        %v5433 = vshrl.u32 %v5432, 7
        %v5434 = vsub.s32 %v1138, %v5433
        %v5435 = vrot.slane %v4209, %v5434
        %v5436 = vsel %vm1143, %v5435, %v5431
        %v5437 = vlaneseq
        %v5438 = vshrl.u32 %v5437, 7
        %v5439 = vsub.s32 %v1145, %v5438
        %v5440 = vrot.slane %v4211, %v5439
        %v5441 = vsel %vm1150, %v5440, %v5436
        %v5442 = vlaneseq
        %v5443 = vshrl.u32 %v5442, 7
        %v5444 = vsub.s32 %v1152, %v5443
        %v5445 = vrot.slane %v4213, %v5444
        %v5446 = vsel %vm1157, %v5445, %v5441
        %v5447 = vlaneseq
        %v5448 = vshrl.u32 %v5447, 7
        %v5449 = vsub.s32 %v1159, %v5448
        %v5450 = vrot.slane %v4215, %v5449
        %v5451 = vsel %vm1164, %v5450, %v5446
        %v5452 = vlaneseq
        %v5453 = vshrl.u32 %v5452, 7
        %v5454 = vsub.s32 %v1166, %v5453
        %v5455 = vrot.slane %v4217, %v5454
        %v5456 = vsel %vm1171, %v5455, %v5451
        %v5457 = vlaneseq
        %v5458 = vshrl.u32 %v5457, 7
        %v5459 = vsub.s32 %v1173, %v5458
        %v5460 = vrot.slane %v4219, %v5459
        %v5461 = vsel %vm1178, %v5460, %v5456
        %v5462 = vlaneseq
        %v5463 = vshrl.u32 %v5462, 7
        %v5464 = vsub.s32 %v1180, %v5463
        %v5465 = vrot.slane %v4221, %v5464
        %v5466 = vsel %vm1185, %v5465, %v5461
        %v5467 = vlaneseq
        %v5468 = vshrl.u32 %v5467, 7
        %v5469 = vsub.s32 %v525, %v5468
        %v5470 = vrot.slane %v4223, %v5469
        %v5471 = vlaneseq
        %v5472 = vshrl.u32 %v5471, 7
        %v5473 = vsub.s32 %v1082, %v5472
        %v5474 = vrot.slane %v4225, %v5473
        %v5475 = vsel %vm1087, %v5474, %v5470
        %v5476 = vlaneseq
        %v5477 = vshrl.u32 %v5476, 7
        %v5478 = vsub.s32 %v1089, %v5477
        %v5479 = vrot.slane %v4227, %v5478
        %v5480 = vsel %vm1094, %v5479, %v5475
        %v5481 = vlaneseq
        %v5482 = vshrl.u32 %v5481, 7
        %v5483 = vsub.s32 %v1096, %v5482
        %v5484 = vrot.slane %v4229, %v5483
        %v5485 = vsel %vm1101, %v5484, %v5480
        %v5486 = vlaneseq
        %v5487 = vshrl.u32 %v5486, 7
        %v5488 = vsub.s32 %v1103, %v5487
        %v5489 = vrot.slane %v4231, %v5488
        %v5490 = vsel %vm1108, %v5489, %v5485
        %v5491 = vlaneseq
        %v5492 = vshrl.u32 %v5491, 7
        %v5493 = vsub.s32 %v1110, %v5492
        %v5494 = vrot.slane %v4233, %v5493
        %v5495 = vsel %vm1115, %v5494, %v5490
        %v5496 = vlaneseq
        %v5497 = vshrl.u32 %v5496, 7
        %v5498 = vsub.s32 %v1117, %v5497
        %v5499 = vrot.slane %v4235, %v5498
        %v5500 = vsel %vm1122, %v5499, %v5495
        %v5501 = vlaneseq
        %v5502 = vshrl.u32 %v5501, 7
        %v5503 = vsub.s32 %v1124, %v5502
        %v5504 = vrot.slane %v4237, %v5503
        %v5505 = vsel %vm1129, %v5504, %v5500
        %v5506 = vlaneseq
        %v5507 = vshrl.u32 %v5506, 7
        %v5508 = vsub.s32 %v1131, %v5507
        %v5509 = vrot.slane %v4239, %v5508
        %v5510 = vsel %vm1136, %v5509, %v5505
        %v5511 = vlaneseq
        %v5512 = vshrl.u32 %v5511, 7
        %v5513 = vsub.s32 %v1138, %v5512
        %v5514 = vrot.slane %v4241, %v5513
        %v5515 = vsel %vm1143, %v5514, %v5510
        %v5516 = vlaneseq
        %v5517 = vshrl.u32 %v5516, 7
        %v5518 = vsub.s32 %v1145, %v5517
        %v5519 = vrot.slane %v4243, %v5518
        %v5520 = vsel %vm1150, %v5519, %v5515
        %v5521 = vlaneseq
        %v5522 = vshrl.u32 %v5521, 7
        %v5523 = vsub.s32 %v1152, %v5522
        %v5524 = vrot.slane %v4245, %v5523
        %v5525 = vsel %vm1157, %v5524, %v5520
        %v5526 = vlaneseq
        %v5527 = vshrl.u32 %v5526, 7
        %v5528 = vsub.s32 %v1159, %v5527
        %v5529 = vrot.slane %v4247, %v5528
        %v5530 = vsel %vm1164, %v5529, %v5525
        %v5531 = vlaneseq
        %v5532 = vshrl.u32 %v5531, 7
        %v5533 = vsub.s32 %v1166, %v5532
        %v5534 = vrot.slane %v4249, %v5533
        %v5535 = vsel %vm1171, %v5534, %v5530
        %v5536 = vlaneseq
        %v5537 = vshrl.u32 %v5536, 7
        %v5538 = vsub.s32 %v1173, %v5537
        %v5539 = vrot.slane %v4251, %v5538
        %v5540 = vsel %vm1178, %v5539, %v5535
        %v5541 = vlaneseq
        %v5542 = vshrl.u32 %v5541, 7
        %v5543 = vsub.s32 %v1180, %v5542
        %v5544 = vrot.slane %v4253, %v5543
        %v5545 = vsel %vm1185, %v5544, %v5540
        %v5546 = vlaneseq
        %v5547 = vshrl.u32 %v5546, 7
        %v5548 = vsub.s32 %v525, %v5547
        %v5549 = vrot.slane %v4255, %v5548
        %v5550 = vlaneseq
        %v5551 = vshrl.u32 %v5550, 7
        %v5552 = vsub.s32 %v1082, %v5551
        %v5553 = vrot.slane %v4257, %v5552
        %v5554 = vsel %vm1087, %v5553, %v5549
        %v5555 = vlaneseq
        %v5556 = vshrl.u32 %v5555, 7
        %v5557 = vsub.s32 %v1089, %v5556
        %v5558 = vrot.slane %v4259, %v5557
        %v5559 = vsel %vm1094, %v5558, %v5554
        %v5560 = vlaneseq
        %v5561 = vshrl.u32 %v5560, 7
        %v5562 = vsub.s32 %v1096, %v5561
        %v5563 = vrot.slane %v4261, %v5562
        %v5564 = vsel %vm1101, %v5563, %v5559
        %v5565 = vlaneseq
        %v5566 = vshrl.u32 %v5565, 7
        %v5567 = vsub.s32 %v1103, %v5566
        %v5568 = vrot.slane %v4263, %v5567
        %v5569 = vsel %vm1108, %v5568, %v5564
        %v5570 = vlaneseq
        %v5571 = vshrl.u32 %v5570, 7
        %v5572 = vsub.s32 %v1110, %v5571
        %v5573 = vrot.slane %v4265, %v5572
        %v5574 = vsel %vm1115, %v5573, %v5569
        %v5575 = vlaneseq
        %v5576 = vshrl.u32 %v5575, 7
        %v5577 = vsub.s32 %v1117, %v5576
        %v5578 = vrot.slane %v4267, %v5577
        %v5579 = vsel %vm1122, %v5578, %v5574
        %v5580 = vlaneseq
        %v5581 = vshrl.u32 %v5580, 7
        %v5582 = vsub.s32 %v1124, %v5581
        %v5583 = vrot.slane %v4269, %v5582
        %v5584 = vsel %vm1129, %v5583, %v5579
        %v5585 = vlaneseq
        %v5586 = vshrl.u32 %v5585, 7
        %v5587 = vsub.s32 %v1131, %v5586
        %v5588 = vrot.slane %v4271, %v5587
        %v5589 = vsel %vm1136, %v5588, %v5584
        %v5590 = vlaneseq
        %v5591 = vshrl.u32 %v5590, 7
        %v5592 = vsub.s32 %v1138, %v5591
        %v5593 = vrot.slane %v4273, %v5592
        %v5594 = vsel %vm1143, %v5593, %v5589
        %v5595 = vlaneseq
        %v5596 = vshrl.u32 %v5595, 7
        %v5597 = vsub.s32 %v1145, %v5596
        %v5598 = vrot.slane %v4275, %v5597
        %v5599 = vsel %vm1150, %v5598, %v5594
        %v5600 = vlaneseq
        %v5601 = vshrl.u32 %v5600, 7
        %v5602 = vsub.s32 %v1152, %v5601
        %v5603 = vrot.slane %v4277, %v5602
        %v5604 = vsel %vm1157, %v5603, %v5599
        %v5605 = vlaneseq
        %v5606 = vshrl.u32 %v5605, 7
        %v5607 = vsub.s32 %v1159, %v5606
        %v5608 = vrot.slane %v4279, %v5607
        %v5609 = vsel %vm1164, %v5608, %v5604
        %v5610 = vlaneseq
        %v5611 = vshrl.u32 %v5610, 7
        %v5612 = vsub.s32 %v1166, %v5611
        %v5613 = vrot.slane %v4281, %v5612
        %v5614 = vsel %vm1171, %v5613, %v5609
        %v5615 = vlaneseq
        %v5616 = vshrl.u32 %v5615, 7
        %v5617 = vsub.s32 %v1173, %v5616
        %v5618 = vrot.slane %v4283, %v5617
        %v5619 = vsel %vm1178, %v5618, %v5614
        %v5620 = vlaneseq
        %v5621 = vshrl.u32 %v5620, 7
        %v5622 = vsub.s32 %v1180, %v5621
        %v5623 = vrot.slane %v4285, %v5622
        %v5624 = vsel %vm1185, %v5623, %v5619
        %v5625 = vlaneseq
        %v5626 = vshrl.u32 %v5625, 7
        %v5627 = vsub.s32 %v525, %v5626
        %v5628 = vrot.slane %v4287, %v5627
        %v5629 = vlaneseq
        %v5630 = vshrl.u32 %v5629, 7
        %v5631 = vsub.s32 %v1082, %v5630
        %v5632 = vrot.slane %v4289, %v5631
        %v5633 = vsel %vm1087, %v5632, %v5628
        %v5634 = vlaneseq
        %v5635 = vshrl.u32 %v5634, 7
        %v5636 = vsub.s32 %v1089, %v5635
        %v5637 = vrot.slane %v4291, %v5636
        %v5638 = vsel %vm1094, %v5637, %v5633
        %v5639 = vlaneseq
        %v5640 = vshrl.u32 %v5639, 7
        %v5641 = vsub.s32 %v1096, %v5640
        %v5642 = vrot.slane %v4293, %v5641
        %v5643 = vsel %vm1101, %v5642, %v5638
        %v5644 = vlaneseq
        %v5645 = vshrl.u32 %v5644, 7
        %v5646 = vsub.s32 %v1103, %v5645
        %v5647 = vrot.slane %v4295, %v5646
        %v5648 = vsel %vm1108, %v5647, %v5643
        %v5649 = vlaneseq
        %v5650 = vshrl.u32 %v5649, 7
        %v5651 = vsub.s32 %v1110, %v5650
        %v5652 = vrot.slane %v4297, %v5651
        %v5653 = vsel %vm1115, %v5652, %v5648
        %v5654 = vlaneseq
        %v5655 = vshrl.u32 %v5654, 7
        %v5656 = vsub.s32 %v1117, %v5655
        %v5657 = vrot.slane %v4299, %v5656
        %v5658 = vsel %vm1122, %v5657, %v5653
        %v5659 = vlaneseq
        %v5660 = vshrl.u32 %v5659, 7
        %v5661 = vsub.s32 %v1124, %v5660
        %v5662 = vrot.slane %v4301, %v5661
        %v5663 = vsel %vm1129, %v5662, %v5658
        %v5664 = vlaneseq
        %v5665 = vshrl.u32 %v5664, 7
        %v5666 = vsub.s32 %v1131, %v5665
        %v5667 = vrot.slane %v4303, %v5666
        %v5668 = vsel %vm1136, %v5667, %v5663
        %v5669 = vlaneseq
        %v5670 = vshrl.u32 %v5669, 7
        %v5671 = vsub.s32 %v1138, %v5670
        %v5672 = vrot.slane %v4305, %v5671
        %v5673 = vsel %vm1143, %v5672, %v5668
        %v5674 = vlaneseq
        %v5675 = vshrl.u32 %v5674, 7
        %v5676 = vsub.s32 %v1145, %v5675
        %v5677 = vrot.slane %v4307, %v5676
        %v5678 = vsel %vm1150, %v5677, %v5673
        %v5679 = vlaneseq
        %v5680 = vshrl.u32 %v5679, 7
        %v5681 = vsub.s32 %v1152, %v5680
        %v5682 = vrot.slane %v4309, %v5681
        %v5683 = vsel %vm1157, %v5682, %v5678
        %v5684 = vlaneseq
        %v5685 = vshrl.u32 %v5684, 7
        %v5686 = vsub.s32 %v1159, %v5685
        %v5687 = vrot.slane %v4311, %v5686
        %v5688 = vsel %vm1164, %v5687, %v5683
        %v5689 = vlaneseq
        %v5690 = vshrl.u32 %v5689, 7
        %v5691 = vsub.s32 %v1166, %v5690
        %v5692 = vrot.slane %v4313, %v5691
        %v5693 = vsel %vm1171, %v5692, %v5688
        %v5694 = vlaneseq
        %v5695 = vshrl.u32 %v5694, 7
        %v5696 = vsub.s32 %v1173, %v5695
        %v5697 = vrot.slane %v4315, %v5696
        %v5698 = vsel %vm1178, %v5697, %v5693
        %v5699 = vlaneseq
        %v5700 = vshrl.u32 %v5699, 7
        %v5701 = vsub.s32 %v1180, %v5700
        %v5702 = vrot.slane %v4317, %v5701
        %v5703 = vsel %vm1185, %v5702, %v5698
        %v5704 = vlaneseq
        %v5705 = vshrl.u32 %v5704, 7
        %v5706 = vsub.s32 %v525, %v5705
        %v5707 = vrot.slane %v4319, %v5706
        %v5708 = vlaneseq
        %v5709 = vshrl.u32 %v5708, 7
        %v5710 = vsub.s32 %v1082, %v5709
        %v5711 = vrot.slane %v4321, %v5710
        %v5712 = vsel %vm1087, %v5711, %v5707
        %v5713 = vlaneseq
        %v5714 = vshrl.u32 %v5713, 7
        %v5715 = vsub.s32 %v1089, %v5714
        %v5716 = vrot.slane %v4323, %v5715
        %v5717 = vsel %vm1094, %v5716, %v5712
        %v5718 = vlaneseq
        %v5719 = vshrl.u32 %v5718, 7
        %v5720 = vsub.s32 %v1096, %v5719
        %v5721 = vrot.slane %v4325, %v5720
        %v5722 = vsel %vm1101, %v5721, %v5717
        %v5723 = vlaneseq
        %v5724 = vshrl.u32 %v5723, 7
        %v5725 = vsub.s32 %v1103, %v5724
        %v5726 = vrot.slane %v4327, %v5725
        %v5727 = vsel %vm1108, %v5726, %v5722
        %v5728 = vlaneseq
        %v5729 = vshrl.u32 %v5728, 7
        %v5730 = vsub.s32 %v1110, %v5729
        %v5731 = vrot.slane %v4329, %v5730
        %v5732 = vsel %vm1115, %v5731, %v5727
        %v5733 = vlaneseq
        %v5734 = vshrl.u32 %v5733, 7
        %v5735 = vsub.s32 %v1117, %v5734
        %v5736 = vrot.slane %v4331, %v5735
        %v5737 = vsel %vm1122, %v5736, %v5732
        %v5738 = vlaneseq
        %v5739 = vshrl.u32 %v5738, 7
        %v5740 = vsub.s32 %v1124, %v5739
        %v5741 = vrot.slane %v4333, %v5740
        %v5742 = vsel %vm1129, %v5741, %v5737
        %v5743 = vlaneseq
        %v5744 = vshrl.u32 %v5743, 7
        %v5745 = vsub.s32 %v1131, %v5744
        %v5746 = vrot.slane %v4335, %v5745
        %v5747 = vsel %vm1136, %v5746, %v5742
        %v5748 = vlaneseq
        %v5749 = vshrl.u32 %v5748, 7
        %v5750 = vsub.s32 %v1138, %v5749
        %v5751 = vrot.slane %v4337, %v5750
        %v5752 = vsel %vm1143, %v5751, %v5747
        %v5753 = vlaneseq
        %v5754 = vshrl.u32 %v5753, 7
        %v5755 = vsub.s32 %v1145, %v5754
        %v5756 = vrot.slane %v4339, %v5755
        %v5757 = vsel %vm1150, %v5756, %v5752
        %v5758 = vlaneseq
        %v5759 = vshrl.u32 %v5758, 7
        %v5760 = vsub.s32 %v1152, %v5759
        %v5761 = vrot.slane %v4341, %v5760
        %v5762 = vsel %vm1157, %v5761, %v5757
        %v5763 = vlaneseq
        %v5764 = vshrl.u32 %v5763, 7
        %v5765 = vsub.s32 %v1159, %v5764
        %v5766 = vrot.slane %v4343, %v5765
        %v5767 = vsel %vm1164, %v5766, %v5762
        %v5768 = vlaneseq
        %v5769 = vshrl.u32 %v5768, 7
        %v5770 = vsub.s32 %v1166, %v5769
        %v5771 = vrot.slane %v4345, %v5770
        %v5772 = vsel %vm1171, %v5771, %v5767
        %v5773 = vlaneseq
        %v5774 = vshrl.u32 %v5773, 7
        %v5775 = vsub.s32 %v1173, %v5774
        %v5776 = vrot.slane %v4347, %v5775
        %v5777 = vsel %vm1178, %v5776, %v5772
        %v5778 = vlaneseq
        %v5779 = vshrl.u32 %v5778, 7
        %v5780 = vsub.s32 %v1180, %v5779
        %v5781 = vrot.slane %v4349, %v5780
        %v5782 = vsel %vm1185, %v5781, %v5777
        %v5783 = vlaneseq
        %v5784 = vshrl.u32 %v5783, 7
        %v5785 = vsub.s32 %v525, %v5784
        %v5786 = vrot.slane %v4351, %v5785
        %v5787 = vlaneseq
        %v5788 = vshrl.u32 %v5787, 7
        %v5789 = vsub.s32 %v1082, %v5788
        %v5790 = vrot.slane %v4353, %v5789
        %v5791 = vsel %vm1087, %v5790, %v5786
        %v5792 = vlaneseq
        %v5793 = vshrl.u32 %v5792, 7
        %v5794 = vsub.s32 %v1089, %v5793
        %v5795 = vrot.slane %v4355, %v5794
        %v5796 = vsel %vm1094, %v5795, %v5791
        %v5797 = vlaneseq
        %v5798 = vshrl.u32 %v5797, 7
        %v5799 = vsub.s32 %v1096, %v5798
        %v5800 = vrot.slane %v4357, %v5799
        %v5801 = vsel %vm1101, %v5800, %v5796
        %v5802 = vlaneseq
        %v5803 = vshrl.u32 %v5802, 7
        %v5804 = vsub.s32 %v1103, %v5803
        %v5805 = vrot.slane %v4359, %v5804
        %v5806 = vsel %vm1108, %v5805, %v5801
        %v5807 = vlaneseq
        %v5808 = vshrl.u32 %v5807, 7
        %v5809 = vsub.s32 %v1110, %v5808
        %v5810 = vrot.slane %v4361, %v5809
        %v5811 = vsel %vm1115, %v5810, %v5806
        %v5812 = vlaneseq
        %v5813 = vshrl.u32 %v5812, 7
        %v5814 = vsub.s32 %v1117, %v5813
        %v5815 = vrot.slane %v4363, %v5814
        %v5816 = vsel %vm1122, %v5815, %v5811
        %v5817 = vlaneseq
        %v5818 = vshrl.u32 %v5817, 7
        %v5819 = vsub.s32 %v1124, %v5818
        %v5820 = vrot.slane %v4365, %v5819
        %v5821 = vsel %vm1129, %v5820, %v5816
        %v5822 = vlaneseq
        %v5823 = vshrl.u32 %v5822, 7
        %v5824 = vsub.s32 %v1131, %v5823
        %v5825 = vrot.slane %v4367, %v5824
        %v5826 = vsel %vm1136, %v5825, %v5821
        %v5827 = vlaneseq
        %v5828 = vshrl.u32 %v5827, 7
        %v5829 = vsub.s32 %v1138, %v5828
        %v5830 = vrot.slane %v4369, %v5829
        %v5831 = vsel %vm1143, %v5830, %v5826
        %v5832 = vlaneseq
        %v5833 = vshrl.u32 %v5832, 7
        %v5834 = vsub.s32 %v1145, %v5833
        %v5835 = vrot.slane %v4371, %v5834
        %v5836 = vsel %vm1150, %v5835, %v5831
        %v5837 = vlaneseq
        %v5838 = vshrl.u32 %v5837, 7
        %v5839 = vsub.s32 %v1152, %v5838
        %v5840 = vrot.slane %v4373, %v5839
        %v5841 = vsel %vm1157, %v5840, %v5836
        %v5842 = vlaneseq
        %v5843 = vshrl.u32 %v5842, 7
        %v5844 = vsub.s32 %v1159, %v5843
        %v5845 = vrot.slane %v4375, %v5844
        %v5846 = vsel %vm1164, %v5845, %v5841
        %v5847 = vlaneseq
        %v5848 = vshrl.u32 %v5847, 7
        %v5849 = vsub.s32 %v1166, %v5848
        %v5850 = vrot.slane %v4377, %v5849
        %v5851 = vsel %vm1171, %v5850, %v5846
        %v5852 = vlaneseq
        %v5853 = vshrl.u32 %v5852, 7
        %v5854 = vsub.s32 %v1173, %v5853
        %v5855 = vrot.slane %v4379, %v5854
        %v5856 = vsel %vm1178, %v5855, %v5851
        %v5857 = vlaneseq
        %v5858 = vshrl.u32 %v5857, 7
        %v5859 = vsub.s32 %v1180, %v5858
        %v5860 = vrot.slane %v4381, %v5859
        %v5861 = vsel %vm1185, %v5860, %v5856
        %v5862 = vlaneseq
        %v5863 = vshrl.u32 %v5862, 7
        %v5864 = vsub.s32 %v525, %v5863
        %v5865 = vrot.slane %v4383, %v5864
        %v5866 = vlaneseq
        %v5867 = vshrl.u32 %v5866, 7
        %v5868 = vsub.s32 %v1082, %v5867
        %v5869 = vrot.slane %v4385, %v5868
        %v5870 = vsel %vm1087, %v5869, %v5865
        %v5871 = vlaneseq
        %v5872 = vshrl.u32 %v5871, 7
        %v5873 = vsub.s32 %v1089, %v5872
        %v5874 = vrot.slane %v4387, %v5873
        %v5875 = vsel %vm1094, %v5874, %v5870
        %v5876 = vlaneseq
        %v5877 = vshrl.u32 %v5876, 7
        %v5878 = vsub.s32 %v1096, %v5877
        %v5879 = vrot.slane %v4389, %v5878
        %v5880 = vsel %vm1101, %v5879, %v5875
        %v5881 = vlaneseq
        %v5882 = vshrl.u32 %v5881, 7
        %v5883 = vsub.s32 %v1103, %v5882
        %v5884 = vrot.slane %v4391, %v5883
        %v5885 = vsel %vm1108, %v5884, %v5880
        %v5886 = vlaneseq
        %v5887 = vshrl.u32 %v5886, 7
        %v5888 = vsub.s32 %v1110, %v5887
        %v5889 = vrot.slane %v4393, %v5888
        %v5890 = vsel %vm1115, %v5889, %v5885
        %v5891 = vlaneseq
        %v5892 = vshrl.u32 %v5891, 7
        %v5893 = vsub.s32 %v1117, %v5892
        %v5894 = vrot.slane %v4395, %v5893
        %v5895 = vsel %vm1122, %v5894, %v5890
        %v5896 = vlaneseq
        %v5897 = vshrl.u32 %v5896, 7
        %v5898 = vsub.s32 %v1124, %v5897
        %v5899 = vrot.slane %v4397, %v5898
        %v5900 = vsel %vm1129, %v5899, %v5895
        %v5901 = vlaneseq
        %v5902 = vshrl.u32 %v5901, 7
        %v5903 = vsub.s32 %v1131, %v5902
        %v5904 = vrot.slane %v4399, %v5903
        %v5905 = vsel %vm1136, %v5904, %v5900
        %v5906 = vlaneseq
        %v5907 = vshrl.u32 %v5906, 7
        %v5908 = vsub.s32 %v1138, %v5907
        %v5909 = vrot.slane %v4401, %v5908
        %v5910 = vsel %vm1143, %v5909, %v5905
        %v5911 = vlaneseq
        %v5912 = vshrl.u32 %v5911, 7
        %v5913 = vsub.s32 %v1145, %v5912
        %v5914 = vrot.slane %v4403, %v5913
        %v5915 = vsel %vm1150, %v5914, %v5910
        %v5916 = vlaneseq
        %v5917 = vshrl.u32 %v5916, 7
        %v5918 = vsub.s32 %v1152, %v5917
        %v5919 = vrot.slane %v4405, %v5918
        %v5920 = vsel %vm1157, %v5919, %v5915
        %v5921 = vlaneseq
        %v5922 = vshrl.u32 %v5921, 7
        %v5923 = vsub.s32 %v1159, %v5922
        %v5924 = vrot.slane %v4407, %v5923
        %v5925 = vsel %vm1164, %v5924, %v5920
        %v5926 = vlaneseq
        %v5927 = vshrl.u32 %v5926, 7
        %v5928 = vsub.s32 %v1166, %v5927
        %v5929 = vrot.slane %v4409, %v5928
        %v5930 = vsel %vm1171, %v5929, %v5925
        %v5931 = vlaneseq
        %v5932 = vshrl.u32 %v5931, 7
        %v5933 = vsub.s32 %v1173, %v5932
        %v5934 = vrot.slane %v4411, %v5933
        %v5935 = vsel %vm1178, %v5934, %v5930
        %v5936 = vlaneseq
        %v5937 = vshrl.u32 %v5936, 7
        %v5938 = vsub.s32 %v1180, %v5937
        %v5939 = vrot.slane %v4413, %v5938
        %v5940 = vsel %vm1185, %v5939, %v5935
        %v5941 = vsel %vm1266, %v4834, %v4755
        %vm5942 = vcmask 1042434
        %v5943 = vsel %vm5942, %v4913, %v5941
        %vm5944 = vcmask 1043459
        %v5945 = vsel %vm5944, %v4992, %v5943
        %vm5946 = vcmask 1044484
        %v5947 = vsel %vm5946, %v5071, %v5945
        %vm5948 = vcmask 1045509
        %v5949 = vsel %vm5948, %v5150, %v5947
        %vm5950 = vcmask 1046534
        %v5951 = vsel %vm5950, %v5229, %v5949
        %vm5952 = vcmask 1047559
        %v5953 = vsel %vm5952, %v5308, %v5951
        %v5954 = vsel %vm1266, %v5466, %v5387
        %v5955 = vsel %vm5942, %v5545, %v5954
        %v5956 = vsel %vm5944, %v5624, %v5955
        %v5957 = vsel %vm5946, %v5703, %v5956
        %v5958 = vsel %vm5948, %v5782, %v5957
        %v5959 = vsel %vm5950, %v5861, %v5958
        %v5960 = vsel %vm5952, %v5940, %v5959
        %v5964 = vsel %vm2016, %v4414, 0
        %5966 = vmatprep.subr.mxu0 0.0
        %5967 = vmatpush1.msra.mxu0 %v5953
        %5968 = vmatprep.subr.mxu0 0.0
        %5969 = vmatpush1.msra.mxu0 %v5960
        %5970 = vmatprep.subr.mxu0 0.0
        %5971 = vmatpush1.msra.mxu0 0.0
        %5972 = vmatprep.subr.mxu0 0.0
        %5973 = vmatpush1.msra.mxu0 0.0
        %5974 = vmatprep.subr.mxu0 0.0
        %5975 = vmatpush1.msra.mxu0 0.0
        %5976 = vmatprep.subr.mxu0 0.0
        %5977 = vmatpush1.msra.mxu0 0.0
        %5978 = vmatprep.subr.mxu0 0.0
        %5979 = vmatpush1.msra.mxu0 0.0
        %5980 = vmatprep.subr.mxu0 0.0
        %5981 = vmatpush1.msra.mxu0 0.0
        %5982 = vmatprep.subr.mxu0 0.0
        %5983 = vmatpush1.msra.mxu0 0.0
        %5984 = vmatprep.subr.mxu0 0.0
        %5985 = vmatpush1.msra.mxu0 0.0
        %5986 = vmatprep.subr.mxu0 0.0
        %5987 = vmatpush1.msra.mxu0 0.0
        %5988 = vmatprep.subr.mxu0 0.0
        %5989 = vmatpush1.msra.mxu0 0.0
        %5990 = vmatprep.subr.mxu0 0.0
        %5991 = vmatpush1.msra.mxu0 0.0
        %5992 = vmatprep.subr.mxu0 0.0
        %5993 = vmatpush1.msra.mxu0 0.0
        %5994 = vmatprep.subr.mxu0 0.0
        %5995 = vmatpush1.msra.mxu0 0.0
        %5996 = vmatprep.subr.mxu0 0.0
        %5997 = vmatpush1.msra.mxu0 0.0
        %5998 = vmatprep.subr.mxu0 0.0
        %5999 = vmatpush1.msra.mxu0 0.0
        %6000 = vmatprep.subr.mxu0 0.0
        %6001 = vmatpush1.msra.mxu0 0.0
        %6002 = vmatprep.subr.mxu0 0.0
        %6003 = vmatpush1.msra.mxu0 0.0
        %6004 = vmatprep.subr.mxu0 0.0
        %6005 = vmatpush1.msra.mxu0 0.0
        %6006 = vmatprep.subr.mxu0 0.0
        %6007 = vmatpush1.msra.mxu0 0.0
        %6008 = vmatprep.subr.mxu0 0.0
        %6009 = vmatpush1.msra.mxu0 0.0
        %6010 = vmatprep.subr.mxu0 0.0
        %6011 = vmatpush1.msra.mxu0 0.0
        %6012 = vmatprep.subr.mxu0 0.0
        %6013 = vmatpush1.msra.mxu0 0.0
        %6014 = vmatprep.subr.mxu0 0.0
        %6015 = vmatpush1.msra.mxu0 0.0
        %6016 = vmatprep.subr.mxu0 0.0
        %6017 = vmatpush1.msra.mxu0 0.0
        %6018 = vmatprep.subr.mxu0 0.0
        %6019 = vmatpush1.msra.mxu0 0.0
        %6020 = vmatprep.subr.mxu0 0.0
        %6021 = vmatpush1.msra.mxu0 0.0
        %6022 = vmatprep.subr.mxu0 0.0
        %6023 = vmatpush1.msra.mxu0 0.0
        %6024 = vmatprep.subr.mxu0 0.0
        %6025 = vmatpush1.msra.mxu0 0.0
        %6026 = vmatprep.subr.mxu0 0.0
        %6027 = vmatpush1.msra.mxu0 0.0
        %6028 = vmatprep.subr.mxu0 0.0
        %6029 = vmatpush1.msra.mxu0 0.0
        %6030 = vmatprep.mubr.f32.mxu0 0.0
        %6031 = vmatmul.mubr.f32.gmra.mrb[0].mxu0 %v5964
        %v6032 = vpop.f32.mrb[0].mxu0
        %v6033 = vadd.f32 %v4419, %v6032
        %v6034 = vpop.f32.mrb[0].mxu0
        %6035 = vdwg.mxu0
        %6036 = vst [vmem:[%s511] sm:$0x3] %v6033
        %s6037 = sand.u32 %s367, 1
        %s6038 = scalar_lea.sflag [#allocation3], %s6037
        %s6039 = sand.u32 %s367, 1
        %s6040 = smul.addr %s6039, 2
        %s6041 = scalar_lea.vmem [#allocation2], %s6040
        // Predicated region
        $region81: #{tpu_custom_call.1} parent=79 // pred_check
          %p6042 = pneg %p377
        $region82: #{tpu_custom_call.1} parent=79 // pred_check_branch
          %6044 = sbr.rel (%p6042) target = $region84
        $region83: #{tpu_custom_call.1} parent=79 // pred_region
          %s6046 = ssub.s32 32, 32
          %6047 = vsyncadd %s6038, %s6046
          %s6048 = smul.addr %s29, 32
          %s6049 = scalar_lea.hbm %s15, %s6048
          %s6051 = sshll.u32 %s6041, 4
          %s6052 = int_to_ptr.vmem [resolvable:$true] %s6051
          %6054 = dma.vmem_to_hbm [thread:$0]  %s6052, 32, %s6049, %s6038
        $region84: #{tpu_custom_call.1} parent=79 // pred_fallthru
          _
      $region80: #{tpu_custom_call.1} parent=5 // pred_fallthru
        _
      %p6055 = scmp.le.s32.totalorder 2, %s24
      // Predicated region
      $region85: #{tpu_custom_call.1} parent=5 // pred_check
        %p6056 = pneg %p6055
      $region86: #{tpu_custom_call.1} parent=5 // pred_check_branch
        %6058 = sbr.rel (%p6056) target = $region88
      $region87: #{tpu_custom_call.1} parent=5 // pred_region
        %s6059 = ssub.s32 %s24, 2
        // Predicated region
        $region89: #{tpu_custom_call.1} parent=87 // pred_check
          %p6060 = pneg %p383
        $region90: #{tpu_custom_call.1} parent=87 // pred_check_branch
          %6062 = sbr.rel (%p6060) target = $region92
        $region91: #{tpu_custom_call.1} parent=87 // pred_region
          %s6063 = sand.u32 %s368, 1
          %s6064 = scalar_lea.sflag [#allocation3], %s6063
          %s6065 = sand.u32 %s368, 1
          %s6066 = smul.addr %s6065, 2
          %s6067 = scalar_lea.vmem [#allocation2], %s6066
          %6068 = dma.done %s6064, 32
        $region92: #{tpu_custom_call.1} parent=87 // pred_fallthru
          _
      $region88: #{tpu_custom_call.1} parent=5 // pred_fallthru
        _
    $region6: #{tpu_custom_call.1} parent=1 // loop_footer
      %s28 = sadd.s32 1, %s24
    $region7: #{tpu_custom_call.1} parent=1 // loop_footer_branch
      %23 = sbr.rel target = $region3
    $region8: #{tpu_custom_call.1} parent=1 // loop_exit
      _
    %6069 = vsyncpa [#allocation3], 1
    %s6070 = scalar_lea.sflag [#allocation3], 1
    %6071 = vsyncpa %s6070, 1

</llo_original>
